<compile_context>
chip_gen: v5e
topology: v5e:2x2
jax: 0.10.0
libtpu: 0.0.40
codegen_flags: <defaults>
</compile_context>

<pallas_src>
import jax
import jax.numpy as jnp
from jax.experimental import pallas as pl
from jax.experimental.pallas import tpu as pltpu

LATENT_DIM = 2
IN_DIM = 28 * 28  # 784
H1 = 512
H2 = 256
BN_EPS = 1e-5
LEAKY_SLOPE = 0.01

# Packed per-feature parameter vector: 128-aligned offsets, 784-wide entries
# padded to 896 and placed last.
_P784 = 896
OFF_G1, OFF_BE1 = 0, 512
OFF_G2, OFF_BE2 = 1024, 1280
OFF_G4, OFF_BE4 = 1536, 1792
OFF_G5, OFF_BE5 = 2048, 2560
OFF_S6, OFF_B6 = 3072, 3968
PACK_LEN = 4864


def _batchnorm_train(h, gamma, beta):
    """BatchNorm1d (train mode) with one-pass stats: var = E[h^2] - mean^2."""
    inv_b = 1.0 / h.shape[0]
    mean = jnp.sum(h, axis=0, keepdims=True) * inv_b
    mean_sq = jnp.sum(h * h, axis=0, keepdims=True) * inv_b
    var = jnp.maximum(mean_sq - mean * mean, 0.0)
    scale = gamma * jax.lax.rsqrt(var + BN_EPS)
    return h * scale + (beta - mean * scale)


def _leaky_relu(h):
    return jnp.where(h > 0, h, LEAKY_SLOPE * h)


def aae_kernel(
    x_ref,        # (B, 784) bf16
    p_ref,        # (1, PACK_LEN) f32 packed per-feature params
    w1_ref,       # (784, 512) int8
    w2_ref,       # (512, 256) int8
    w34_ref,      # (256, 256) bf16 (folded latent bottleneck)
    w5_hbm_ref,   # (256, 512) int8 in HBM
    w6_hbm_ref,   # (512, 784) int8 in HBM
    out_ref,      # (B, 784) f32
    w5_buf, w6_buf, dma_sem,
):
    # Kick off decoder-weight DMAs immediately so they overlap encoder compute.
    cp5 = pltpu.make_async_copy(w5_hbm_ref, w5_buf, dma_sem.at[0])
    cp6 = pltpu.make_async_copy(w6_hbm_ref, w6_buf, dma_sem.at[1])
    cp5.start()
    cp6.start()

    bf16 = jnp.bfloat16
    f32 = jnp.float32

    def p(off, n):
        return p_ref[:, off:off + n]

    def deq(v_i8):
        # int8 -> f32 -> bf16 (per-column quant scale is absorbed by BN for
        # w1/w2/w5; w6 applies its scale explicitly below).
        return v_i8.astype(f32).astype(bf16)

    x = x_ref[...]  # already bf16

    # ----- encoder -----
    h = jnp.dot(x, deq(w1_ref[...]), preferred_element_type=f32)
    h = _leaky_relu(_batchnorm_train(h, p(OFF_G1, H1), p(OFF_BE1, H1)))

    h = jnp.dot(h.astype(bf16), deq(w2_ref[...]), preferred_element_type=f32)
    h = _leaky_relu(_batchnorm_train(h, p(OFF_G2, H2), p(OFF_BE2, H2)))

    # ----- folded latent bottleneck -----
    # (h @ w3) @ w4 == h @ (w3 @ w4); biases are dead under the following BN.
    d = jnp.dot(h.astype(bf16), w34_ref[...], preferred_element_type=f32)
    d = _leaky_relu(_batchnorm_train(d, p(OFF_G4, H2), p(OFF_BE4, H2)))

    # ----- decoder back half (weights arrived via overlapped DMA) -----
    cp5.wait()
    cp6.wait()

    d = jnp.dot(d.astype(bf16), deq(w5_buf[...]), preferred_element_type=f32)
    d = _leaky_relu(_batchnorm_train(d, p(OFF_G5, H1), p(OFF_BE5, H1)))

    logits = jnp.dot(d.astype(bf16), deq(w6_buf[...]), preferred_element_type=f32)
    logits = logits * p(OFF_S6, IN_DIM) + p(OFF_B6, IN_DIM)
    out_ref[...] = jax.nn.sigmoid(logits)


def _quantize_per_col(w):
    """Symmetric per-output-column int8 quantization. Returns (q, scale(1,N))."""
    s = jnp.max(jnp.abs(w), axis=0, keepdims=True) / 127.0
    s = jnp.where(s == 0, 1.0, s)
    q = jnp.clip(jnp.round(w / s), -127.0, 127.0).astype(jnp.int8)
    return q, s


@jax.jit
def aae_forward(x_nchw, params):
    """x_nchw: (B, 1, 28, 28) float32.  Returns reconstruction (B, 1, 28, 28)."""
    B = x_nchw.shape[0]
    x = x_nchw.reshape(B, IN_DIM).astype(jnp.bfloat16)

    # int8 weights; scales for w1/w2/w5 are discarded (absorbed exactly by the
    # train-mode BN that follows each of those layers).
    w1_q, _ = _quantize_per_col(params["w1"])
    w2_q, _ = _quantize_per_col(params["w2"])
    w5_q, _ = _quantize_per_col(params["w5"])
    w6_q, s6 = _quantize_per_col(params["w6"])

    # Fold the latent bottleneck in f32, ship as bf16 (biases dead under BN).
    w34 = jnp.dot(params["w3"], params["w4"],
                  preferred_element_type=jnp.float32).astype(jnp.bfloat16)

    def seg(v, width):
        v = v.reshape(-1).astype(jnp.float32)
        return jnp.pad(v, (0, width - v.shape[0]))

    packed = jnp.concatenate([
        seg(params["g1"], H1), seg(params["be1"], H1),
        seg(params["g2"], H2), seg(params["be2"], H2),
        seg(params["g4"], H2), seg(params["be4"], H2),
        seg(params["g5"], H1), seg(params["be5"], H1),
        seg(s6, _P784), seg(params["b6"], _P784),
    ]).reshape(1, PACK_LEN)

    vmem = pl.BlockSpec(memory_space=pltpu.VMEM)
    hbm = pl.BlockSpec(memory_space=pl.ANY)

    flops = 2 * B * (IN_DIM * H1 + H1 * H2 + H2 * H2 + H2 * H1 + H1 * IN_DIM)
    transcendentals = 2 * B * IN_DIM + 2 * (H1 + H2)  # sigmoid + BN rsqrt
    bytes_accessed = (
        B * IN_DIM * 2            # x (bf16)
        + PACK_LEN * 4            # packed params
        + w1_q.size + w2_q.size + w5_q.size + w6_q.size   # int8 weights
        + w34.size * 2            # bf16 folded weight
        + B * IN_DIM * 4          # output
    )

    recon = pl.pallas_call(
        aae_kernel,
        out_shape=jax.ShapeDtypeStruct((B, IN_DIM), jnp.float32),
        in_specs=[vmem, vmem, vmem, vmem, vmem, hbm, hbm],
        out_specs=vmem,
        scratch_shapes=[
            pltpu.VMEM((H2, H1), jnp.int8),      # w5 landing buffer
            pltpu.VMEM((H1, IN_DIM), jnp.int8),  # w6 landing buffer
            pltpu.SemaphoreType.DMA((2,)),
        ],
        compiler_params=pltpu.CompilerParams(vmem_limit_bytes=12 << 20),
        cost_estimate=pl.CostEstimate(
            flops=flops,
            transcendentals=transcendentals,
            bytes_accessed=bytes_accessed,
        ),
    )(x, packed, w1_q, w2_q, w34, w5_q, w6_q)

    return recon.reshape(B, 1, 28, 28)


def aae_forward_ref(x_nchw, params):
    """Pure-JAX f32 reference (unfused, two-pass BN, full-precision weights)."""
    B = x_nchw.shape[0]
    h = x_nchw.reshape(B, IN_DIM)

    def bn(h, g, b):
        mean = jnp.mean(h, axis=0, keepdims=True)
        var = jnp.mean((h - mean) ** 2, axis=0, keepdims=True)
        return g * (h - mean) * jax.lax.rsqrt(var + BN_EPS) + b

    def lrelu(h):
        return jnp.where(h > 0, h, LEAKY_SLOPE * h)

    h = lrelu(bn(h @ params["w1"] + params["b1"], params["g1"], params["be1"]))
    h = lrelu(bn(h @ params["w2"] + params["b2"], params["g2"], params["be2"]))
    z = h @ params["w3"] + params["b3"]
    d = lrelu(bn(z @ params["w4"] + params["b4"], params["g4"], params["be4"]))
    d = lrelu(bn(d @ params["w5"] + params["b5"], params["g5"], params["be5"]))
    return jax.nn.sigmoid(d @ params["w6"] + params["b6"]).reshape(B, 1, 28, 28)


def init_params(key):
    """Deterministic synthetic parameters (PyTorch Linear layout transposed to
    (in, out) so the kernel computes x @ W + b)."""
    ks = jax.random.split(key, 6)

    def linear(k, fan_in, fan_out):
        bound = 1.0 / jnp.sqrt(fan_in)
        kw, kb = jax.random.split(k)
        w = jax.random.uniform(kw, (fan_in, fan_out), jnp.float32, -bound, bound)
        b = jax.random.uniform(kb, (1, fan_out), jnp.float32, -bound, bound)
        return w, b

    w1, b1 = linear(ks[0], IN_DIM, H1)
    w2, b2 = linear(ks[1], H1, H2)
    w3, b3 = linear(ks[2], H2, LATENT_DIM)
    w4, b4 = linear(ks[3], LATENT_DIM, H2)
    w5, b5 = linear(ks[4], H2, H1)
    w6, b6 = linear(ks[5], H1, IN_DIM)

    def bn(n):
        return jnp.ones((1, n), jnp.float32), jnp.zeros((1, n), jnp.float32)

    g1, be1 = bn(H1)
    g2, be2 = bn(H2)
    g4, be4 = bn(H2)
    g5, be5 = bn(H1)

    return dict(
        w1=w1, b1=b1, g1=g1, be1=be1,
        w2=w2, b2=b2, g2=g2, be2=be2,
        w3=w3, b3=b3,
        w4=w4, b4=b4, g4=g4, be4=be4,
        w5=w5, b5=b5, g5=g5, be5=be5,
        w6=w6, b6=b6,
    )


if __name__ == "__main__":
    key = jax.random.PRNGKey(0)
    k_params, k_x = jax.random.split(key)

    params = init_params(k_params)
    # Small MNIST-like batch: (B, C, H, W) = (8, 1, 28, 28), pixels in [0, 1].
    x = jax.random.uniform(k_x, (8, 1, 28, 28), jnp.float32)

    recon = aae_forward(x, params)
    recon = jax.block_until_ready(recon)

    assert recon.shape == (8, 1, 28, 28), recon.shape
    assert recon.dtype == jnp.float32
    assert bool(jnp.all(jnp.isfinite(recon)))
    assert bool(jnp.all((recon >= 0.0) & (recon <= 1.0)))  # sigmoid output range

    # bf16 activations + int8 per-column weights + folded bottleneck change
    # rounding slightly; check against the f32 reference with a loose tolerance.
    ref = aae_forward_ref(x, params)
    max_diff = float(jnp.max(jnp.abs(recon - ref)))
    assert max_diff < 0.1, f"max |kernel - ref| = {max_diff}"

    print("KERNEL_OK")
</pallas_src>

<mosaic_0001>
module attributes {stable_mosaic.version = 11 : i64} {
  func.func @aae_kernel(%arg0: memref<8x784xbf16, #tpu.memory_space<vmem>>, %arg1: memref<1x4864xf32, #tpu.memory_space<vmem>>, %arg2: memref<784x512xi8, #tpu.memory_space<vmem>>, %arg3: memref<512x256xi8, #tpu.memory_space<vmem>>, %arg4: memref<256x256xbf16, #tpu.memory_space<vmem>>, %arg5: memref<256x512xi8, #tpu.memory_space<any>>, %arg6: memref<512x784xi8, #tpu.memory_space<any>>, %arg7: memref<8x784xf32, #tpu.memory_space<vmem>>, %arg8: memref<256x512xi8, #tpu.memory_space<vmem>>, %arg9: memref<512x784xi8, #tpu.memory_space<vmem>>, %arg10: memref<2x!tpu.dma_semaphore, #tpu.memory_space<semaphore_mem>>) attributes {dimension_semantics = [], scalar_prefetch = 0 : i64, scratch_operands = 3 : i64, tpu.core_type = #tpu.core_type<tc>} {
    %c0_i32 = arith.constant 0 : i32
    %0 = tpu.memref_slice %arg10[%c0_i32] : memref<2x!tpu.dma_semaphore, #tpu.memory_space<semaphore_mem>> -> memref<1x!tpu.dma_semaphore, #tpu.memory_space<semaphore_mem>>
    %1 = tpu.memref_squeeze %0 : memref<1x!tpu.dma_semaphore, #tpu.memory_space<semaphore_mem>> -> memref<!tpu.dma_semaphore, #tpu.memory_space<semaphore_mem>>
    tpu.enqueue_dma source(%arg5 : memref<256x512xi8, #tpu.memory_space<any>>) target(%arg8 : memref<256x512xi8, #tpu.memory_space<vmem>>) target_semaphore(%1 : memref<!tpu.dma_semaphore, #tpu.memory_space<semaphore_mem>>)
    %c1_i32 = arith.constant 1 : i32
    %2 = tpu.memref_slice %arg10[%c1_i32] : memref<2x!tpu.dma_semaphore, #tpu.memory_space<semaphore_mem>> -> memref<1x!tpu.dma_semaphore, #tpu.memory_space<semaphore_mem>>
    %3 = tpu.memref_squeeze %2 : memref<1x!tpu.dma_semaphore, #tpu.memory_space<semaphore_mem>> -> memref<!tpu.dma_semaphore, #tpu.memory_space<semaphore_mem>>
    tpu.enqueue_dma source(%arg6 : memref<512x784xi8, #tpu.memory_space<any>>) target(%arg9 : memref<512x784xi8, #tpu.memory_space<vmem>>) target_semaphore(%3 : memref<!tpu.dma_semaphore, #tpu.memory_space<semaphore_mem>>)
    %c0 = arith.constant 0 : index
    %c0_0 = arith.constant 0 : index
    %4 = vector.load %arg0[%c0, %c0_0] : memref<8x784xbf16, #tpu.memory_space<vmem>>, vector<8x784xbf16>
    %c0_1 = arith.constant 0 : index
    %c0_2 = arith.constant 0 : index
    %5 = vector.load %arg2[%c0_1, %c0_2] : memref<784x512xi8, #tpu.memory_space<vmem>>, vector<784x512xi8>
    %6 = arith.sitofp %5 : vector<784x512xi8> to vector<784x512xf32>
    %7 = arith.truncf %6 : vector<784x512xf32> to vector<784x512xbf16>
    %cst = arith.constant dense<0.000000e+00> : vector<8x512xf32>
    %8 = tpu.matmul %4, %7, %cst {dimension_numbers = #tpu.dot_dimension_numbers<[1], [0], [0], [1], [0, 0, 1, 1], [], []>} : vector<8x784xbf16>, vector<784x512xbf16>, vector<8x512xf32> -> vector<8x512xf32>
    %c0_3 = arith.constant 0 : index
    %c0_4 = arith.constant 0 : index
    %9 = vector.load %arg1[%c0_3, %c0_4] : memref<1x4864xf32, #tpu.memory_space<vmem>>, vector<1x512xf32>
    %c0_5 = arith.constant 0 : index
    %c512 = arith.constant 512 : index
    %10 = vector.load %arg1[%c0_5, %c512] : memref<1x4864xf32, #tpu.memory_space<vmem>>, vector<1x512xf32>
    %cst_6 = arith.constant dense<0.000000e+00> : vector<512xf32>
    %11 = vector.multi_reduction <add>, %8, %cst_6 [0] : vector<8x512xf32> to vector<512xf32>
    %12 = vector.shape_cast %11 : vector<512xf32> to vector<1x512xf32>
    %cst_7 = arith.constant 1.250000e-01 : f32
    %13 = vector.broadcast %cst_7 : f32 to vector<1x512xf32>
    %14 = arith.mulf %12, %13 : vector<1x512xf32>
    %15 = arith.mulf %8, %8 : vector<8x512xf32>
    %cst_8 = arith.constant dense<0.000000e+00> : vector<512xf32>
    %16 = vector.multi_reduction <add>, %15, %cst_8 [0] : vector<8x512xf32> to vector<512xf32>
    %17 = vector.shape_cast %16 : vector<512xf32> to vector<1x512xf32>
    %cst_9 = arith.constant 1.250000e-01 : f32
    %18 = vector.broadcast %cst_9 : f32 to vector<1x512xf32>
    %19 = arith.mulf %17, %18 : vector<1x512xf32>
    %20 = arith.mulf %14, %14 : vector<1x512xf32>
    %21 = arith.subf %19, %20 : vector<1x512xf32>
    %cst_10 = arith.constant 0.000000e+00 : f32
    %22 = vector.broadcast %cst_10 : f32 to vector<1x512xf32>
    %23 = arith.maximumf %21, %22 : vector<1x512xf32>
    %cst_11 = arith.constant 9.99999974E-6 : f32
    %24 = vector.broadcast %cst_11 : f32 to vector<1x512xf32>
    %25 = arith.addf %23, %24 : vector<1x512xf32>
    %26 = math.rsqrt %25 : vector<1x512xf32>
    %27 = arith.mulf %9, %26 : vector<1x512xf32>
    %28 = vector.broadcast %27 : vector<1x512xf32> to vector<8x512xf32>
    %29 = arith.mulf %8, %28 : vector<8x512xf32>
    %30 = arith.mulf %14, %27 : vector<1x512xf32>
    %31 = arith.subf %10, %30 : vector<1x512xf32>
    %32 = vector.broadcast %31 : vector<1x512xf32> to vector<8x512xf32>
    %33 = arith.addf %29, %32 : vector<8x512xf32>
    %cst_12 = arith.constant 0.000000e+00 : f32
    %34 = vector.broadcast %cst_12 : f32 to vector<8x512xf32>
    %35 = arith.cmpf ogt, %33, %34 : vector<8x512xf32>
    %cst_13 = arith.constant 0.00999999977 : f32
    %36 = vector.broadcast %cst_13 : f32 to vector<8x512xf32>
    %37 = arith.mulf %36, %33 : vector<8x512xf32>
    %38 = arith.select %35, %33, %37 : vector<8x512xi1>, vector<8x512xf32>
    %39 = arith.truncf %38 : vector<8x512xf32> to vector<8x512xbf16>
    %c0_14 = arith.constant 0 : index
    %c0_15 = arith.constant 0 : index
    %40 = vector.load %arg3[%c0_14, %c0_15] : memref<512x256xi8, #tpu.memory_space<vmem>>, vector<512x256xi8>
    %41 = arith.sitofp %40 : vector<512x256xi8> to vector<512x256xf32>
    %42 = arith.truncf %41 : vector<512x256xf32> to vector<512x256xbf16>
    %cst_16 = arith.constant dense<0.000000e+00> : vector<8x256xf32>
    %43 = tpu.matmul %39, %42, %cst_16 {dimension_numbers = #tpu.dot_dimension_numbers<[1], [0], [0], [1], [0, 0, 1, 1], [], []>} : vector<8x512xbf16>, vector<512x256xbf16>, vector<8x256xf32> -> vector<8x256xf32>
    %c0_17 = arith.constant 0 : index
    %c1024 = arith.constant 1024 : index
    %44 = vector.load %arg1[%c0_17, %c1024] : memref<1x4864xf32, #tpu.memory_space<vmem>>, vector<1x256xf32>
    %c0_18 = arith.constant 0 : index
    %c1280 = arith.constant 1280 : index
    %45 = vector.load %arg1[%c0_18, %c1280] : memref<1x4864xf32, #tpu.memory_space<vmem>>, vector<1x256xf32>
    %cst_19 = arith.constant dense<0.000000e+00> : vector<256xf32>
    %46 = vector.multi_reduction <add>, %43, %cst_19 [0] : vector<8x256xf32> to vector<256xf32>
    %47 = vector.shape_cast %46 : vector<256xf32> to vector<1x256xf32>
    %cst_20 = arith.constant 1.250000e-01 : f32
    %48 = vector.broadcast %cst_20 : f32 to vector<1x256xf32>
    %49 = arith.mulf %47, %48 : vector<1x256xf32>
    %50 = arith.mulf %43, %43 : vector<8x256xf32>
    %cst_21 = arith.constant dense<0.000000e+00> : vector<256xf32>
    %51 = vector.multi_reduction <add>, %50, %cst_21 [0] : vector<8x256xf32> to vector<256xf32>
    %52 = vector.shape_cast %51 : vector<256xf32> to vector<1x256xf32>
    %cst_22 = arith.constant 1.250000e-01 : f32
    %53 = vector.broadcast %cst_22 : f32 to vector<1x256xf32>
    %54 = arith.mulf %52, %53 : vector<1x256xf32>
    %55 = arith.mulf %49, %49 : vector<1x256xf32>
    %56 = arith.subf %54, %55 : vector<1x256xf32>
    %cst_23 = arith.constant 0.000000e+00 : f32
    %57 = vector.broadcast %cst_23 : f32 to vector<1x256xf32>
    %58 = arith.maximumf %56, %57 : vector<1x256xf32>
    %cst_24 = arith.constant 9.99999974E-6 : f32
    %59 = vector.broadcast %cst_24 : f32 to vector<1x256xf32>
    %60 = arith.addf %58, %59 : vector<1x256xf32>
    %61 = math.rsqrt %60 : vector<1x256xf32>
    %62 = arith.mulf %44, %61 : vector<1x256xf32>
    %63 = vector.broadcast %62 : vector<1x256xf32> to vector<8x256xf32>
    %64 = arith.mulf %43, %63 : vector<8x256xf32>
    %65 = arith.mulf %49, %62 : vector<1x256xf32>
    %66 = arith.subf %45, %65 : vector<1x256xf32>
    %67 = vector.broadcast %66 : vector<1x256xf32> to vector<8x256xf32>
    %68 = arith.addf %64, %67 : vector<8x256xf32>
    %cst_25 = arith.constant 0.000000e+00 : f32
    %69 = vector.broadcast %cst_25 : f32 to vector<8x256xf32>
    %70 = arith.cmpf ogt, %68, %69 : vector<8x256xf32>
    %cst_26 = arith.constant 0.00999999977 : f32
    %71 = vector.broadcast %cst_26 : f32 to vector<8x256xf32>
    %72 = arith.mulf %71, %68 : vector<8x256xf32>
    %73 = arith.select %70, %68, %72 : vector<8x256xi1>, vector<8x256xf32>
    %74 = arith.truncf %73 : vector<8x256xf32> to vector<8x256xbf16>
    %c0_27 = arith.constant 0 : index
    %c0_28 = arith.constant 0 : index
    %75 = vector.load %arg4[%c0_27, %c0_28] : memref<256x256xbf16, #tpu.memory_space<vmem>>, vector<256x256xbf16>
    %cst_29 = arith.constant dense<0.000000e+00> : vector<8x256xf32>
    %76 = tpu.matmul %74, %75, %cst_29 {dimension_numbers = #tpu.dot_dimension_numbers<[1], [0], [0], [1], [0, 0, 1, 1], [], []>} : vector<8x256xbf16>, vector<256x256xbf16>, vector<8x256xf32> -> vector<8x256xf32>
    %c0_30 = arith.constant 0 : index
    %c1536 = arith.constant 1536 : index
    %77 = vector.load %arg1[%c0_30, %c1536] : memref<1x4864xf32, #tpu.memory_space<vmem>>, vector<1x256xf32>
    %c0_31 = arith.constant 0 : index
    %c1792 = arith.constant 1792 : index
    %78 = vector.load %arg1[%c0_31, %c1792] : memref<1x4864xf32, #tpu.memory_space<vmem>>, vector<1x256xf32>
    %cst_32 = arith.constant dense<0.000000e+00> : vector<256xf32>
    %79 = vector.multi_reduction <add>, %76, %cst_32 [0] : vector<8x256xf32> to vector<256xf32>
    %80 = vector.shape_cast %79 : vector<256xf32> to vector<1x256xf32>
    %cst_33 = arith.constant 1.250000e-01 : f32
    %81 = vector.broadcast %cst_33 : f32 to vector<1x256xf32>
    %82 = arith.mulf %80, %81 : vector<1x256xf32>
    %83 = arith.mulf %76, %76 : vector<8x256xf32>
    %cst_34 = arith.constant dense<0.000000e+00> : vector<256xf32>
    %84 = vector.multi_reduction <add>, %83, %cst_34 [0] : vector<8x256xf32> to vector<256xf32>
    %85 = vector.shape_cast %84 : vector<256xf32> to vector<1x256xf32>
    %cst_35 = arith.constant 1.250000e-01 : f32
    %86 = vector.broadcast %cst_35 : f32 to vector<1x256xf32>
    %87 = arith.mulf %85, %86 : vector<1x256xf32>
    %88 = arith.mulf %82, %82 : vector<1x256xf32>
    %89 = arith.subf %87, %88 : vector<1x256xf32>
    %cst_36 = arith.constant 0.000000e+00 : f32
    %90 = vector.broadcast %cst_36 : f32 to vector<1x256xf32>
    %91 = arith.maximumf %89, %90 : vector<1x256xf32>
    %cst_37 = arith.constant 9.99999974E-6 : f32
    %92 = vector.broadcast %cst_37 : f32 to vector<1x256xf32>
    %93 = arith.addf %91, %92 : vector<1x256xf32>
    %94 = math.rsqrt %93 : vector<1x256xf32>
    %95 = arith.mulf %77, %94 : vector<1x256xf32>
    %96 = vector.broadcast %95 : vector<1x256xf32> to vector<8x256xf32>
    %97 = arith.mulf %76, %96 : vector<8x256xf32>
    %98 = arith.mulf %82, %95 : vector<1x256xf32>
    %99 = arith.subf %78, %98 : vector<1x256xf32>
    %100 = vector.broadcast %99 : vector<1x256xf32> to vector<8x256xf32>
    %101 = arith.addf %97, %100 : vector<8x256xf32>
    %cst_38 = arith.constant 0.000000e+00 : f32
    %102 = vector.broadcast %cst_38 : f32 to vector<8x256xf32>
    %103 = arith.cmpf ogt, %101, %102 : vector<8x256xf32>
    %cst_39 = arith.constant 0.00999999977 : f32
    %104 = vector.broadcast %cst_39 : f32 to vector<8x256xf32>
    %105 = arith.mulf %104, %101 : vector<8x256xf32>
    %106 = arith.select %103, %101, %105 : vector<8x256xi1>, vector<8x256xf32>
    %c0_i32_40 = arith.constant 0 : i32
    %107 = tpu.memref_slice %arg10[%c0_i32_40] : memref<2x!tpu.dma_semaphore, #tpu.memory_space<semaphore_mem>> -> memref<1x!tpu.dma_semaphore, #tpu.memory_space<semaphore_mem>>
    %108 = tpu.memref_squeeze %107 : memref<1x!tpu.dma_semaphore, #tpu.memory_space<semaphore_mem>> -> memref<!tpu.dma_semaphore, #tpu.memory_space<semaphore_mem>>
    tpu.wait_dma2 semaphore(%108 : memref<!tpu.dma_semaphore, #tpu.memory_space<semaphore_mem>>) src(%arg5 : memref<256x512xi8, #tpu.memory_space<any>>) dst(%arg8 : memref<256x512xi8, #tpu.memory_space<vmem>>)
    %c1_i32_41 = arith.constant 1 : i32
    %109 = tpu.memref_slice %arg10[%c1_i32_41] : memref<2x!tpu.dma_semaphore, #tpu.memory_space<semaphore_mem>> -> memref<1x!tpu.dma_semaphore, #tpu.memory_space<semaphore_mem>>
    %110 = tpu.memref_squeeze %109 : memref<1x!tpu.dma_semaphore, #tpu.memory_space<semaphore_mem>> -> memref<!tpu.dma_semaphore, #tpu.memory_space<semaphore_mem>>
    tpu.wait_dma2 semaphore(%110 : memref<!tpu.dma_semaphore, #tpu.memory_space<semaphore_mem>>) src(%arg6 : memref<512x784xi8, #tpu.memory_space<any>>) dst(%arg9 : memref<512x784xi8, #tpu.memory_space<vmem>>)
    %111 = arith.truncf %106 : vector<8x256xf32> to vector<8x256xbf16>
    %c0_42 = arith.constant 0 : index
    %c0_43 = arith.constant 0 : index
    %112 = vector.load %arg8[%c0_42, %c0_43] : memref<256x512xi8, #tpu.memory_space<vmem>>, vector<256x512xi8>
    %113 = arith.sitofp %112 : vector<256x512xi8> to vector<256x512xf32>
    %114 = arith.truncf %113 : vector<256x512xf32> to vector<256x512xbf16>
    %cst_44 = arith.constant dense<0.000000e+00> : vector<8x512xf32>
    %115 = tpu.matmul %111, %114, %cst_44 {dimension_numbers = #tpu.dot_dimension_numbers<[1], [0], [0], [1], [0, 0, 1, 1], [], []>} : vector<8x256xbf16>, vector<256x512xbf16>, vector<8x512xf32> -> vector<8x512xf32>
    %c0_45 = arith.constant 0 : index
    %c2048 = arith.constant 2048 : index
    %116 = vector.load %arg1[%c0_45, %c2048] : memref<1x4864xf32, #tpu.memory_space<vmem>>, vector<1x512xf32>
    %c0_46 = arith.constant 0 : index
    %c2560 = arith.constant 2560 : index
    %117 = vector.load %arg1[%c0_46, %c2560] : memref<1x4864xf32, #tpu.memory_space<vmem>>, vector<1x512xf32>
    %cst_47 = arith.constant dense<0.000000e+00> : vector<512xf32>
    %118 = vector.multi_reduction <add>, %115, %cst_47 [0] : vector<8x512xf32> to vector<512xf32>
    %119 = vector.shape_cast %118 : vector<512xf32> to vector<1x512xf32>
    %cst_48 = arith.constant 1.250000e-01 : f32
    %120 = vector.broadcast %cst_48 : f32 to vector<1x512xf32>
    %121 = arith.mulf %119, %120 : vector<1x512xf32>
    %122 = arith.mulf %115, %115 : vector<8x512xf32>
    %cst_49 = arith.constant dense<0.000000e+00> : vector<512xf32>
    %123 = vector.multi_reduction <add>, %122, %cst_49 [0] : vector<8x512xf32> to vector<512xf32>
    %124 = vector.shape_cast %123 : vector<512xf32> to vector<1x512xf32>
    %cst_50 = arith.constant 1.250000e-01 : f32
    %125 = vector.broadcast %cst_50 : f32 to vector<1x512xf32>
    %126 = arith.mulf %124, %125 : vector<1x512xf32>
    %127 = arith.mulf %121, %121 : vector<1x512xf32>
    %128 = arith.subf %126, %127 : vector<1x512xf32>
    %cst_51 = arith.constant 0.000000e+00 : f32
    %129 = vector.broadcast %cst_51 : f32 to vector<1x512xf32>
    %130 = arith.maximumf %128, %129 : vector<1x512xf32>
    %cst_52 = arith.constant 9.99999974E-6 : f32
    %131 = vector.broadcast %cst_52 : f32 to vector<1x512xf32>
    %132 = arith.addf %130, %131 : vector<1x512xf32>
    %133 = math.rsqrt %132 : vector<1x512xf32>
    %134 = arith.mulf %116, %133 : vector<1x512xf32>
    %135 = vector.broadcast %134 : vector<1x512xf32> to vector<8x512xf32>
    %136 = arith.mulf %115, %135 : vector<8x512xf32>
    %137 = arith.mulf %121, %134 : vector<1x512xf32>
    %138 = arith.subf %117, %137 : vector<1x512xf32>
    %139 = vector.broadcast %138 : vector<1x512xf32> to vector<8x512xf32>
    %140 = arith.addf %136, %139 : vector<8x512xf32>
    %cst_53 = arith.constant 0.000000e+00 : f32
    %141 = vector.broadcast %cst_53 : f32 to vector<8x512xf32>
    %142 = arith.cmpf ogt, %140, %141 : vector<8x512xf32>
    %cst_54 = arith.constant 0.00999999977 : f32
    %143 = vector.broadcast %cst_54 : f32 to vector<8x512xf32>
    %144 = arith.mulf %143, %140 : vector<8x512xf32>
    %145 = arith.select %142, %140, %144 : vector<8x512xi1>, vector<8x512xf32>
    %146 = arith.truncf %145 : vector<8x512xf32> to vector<8x512xbf16>
    %c0_55 = arith.constant 0 : index
    %c0_56 = arith.constant 0 : index
    %147 = vector.load %arg9[%c0_55, %c0_56] : memref<512x784xi8, #tpu.memory_space<vmem>>, vector<512x784xi8>
    %148 = arith.sitofp %147 : vector<512x784xi8> to vector<512x784xf32>
    %149 = arith.truncf %148 : vector<512x784xf32> to vector<512x784xbf16>
    %cst_57 = arith.constant dense<0.000000e+00> : vector<8x784xf32>
    %150 = tpu.matmul %146, %149, %cst_57 {dimension_numbers = #tpu.dot_dimension_numbers<[1], [0], [0], [1], [0, 0, 1, 1], [], []>} : vector<8x512xbf16>, vector<512x784xbf16>, vector<8x784xf32> -> vector<8x784xf32>
    %c0_58 = arith.constant 0 : index
    %c3072 = arith.constant 3072 : index
    %151 = vector.load %arg1[%c0_58, %c3072] : memref<1x4864xf32, #tpu.memory_space<vmem>>, vector<1x784xf32>
    %152 = vector.broadcast %151 : vector<1x784xf32> to vector<8x784xf32>
    %153 = arith.mulf %150, %152 : vector<8x784xf32>
    %c0_59 = arith.constant 0 : index
    %c3968 = arith.constant 3968 : index
    %154 = vector.load %arg1[%c0_59, %c3968] : memref<1x4864xf32, #tpu.memory_space<vmem>>, vector<1x784xf32>
    %155 = vector.broadcast %154 : vector<1x784xf32> to vector<8x784xf32>
    %156 = arith.addf %153, %155 : vector<8x784xf32>
    %157 = arith.negf %156 : vector<8x784xf32>
    %158 = math.exp %157 : vector<8x784xf32>
    %cst_60 = arith.constant 1.000000e+00 : f32
    %159 = vector.broadcast %cst_60 : f32 to vector<8x784xf32>
    %160 = arith.addf %159, %158 : vector<8x784xf32>
    %161 = arith.divf %159, %160 : vector<8x784xf32>
    %c0_61 = arith.constant 0 : index
    %c0_62 = arith.constant 0 : index
    %162 = vector.load %arg7[%c0_61, %c0_62] : memref<8x784xf32, #tpu.memory_space<vmem>>, vector<8x784xf32>
    tpu.vector_store %arg7[%c0_61, %c0_62], %161 {strides = array<i32>} : memref<8x784xf32, #tpu.memory_space<vmem>>, vector<8x784xf32>,
    return
  }
}

</mosaic_0001>

<llo_original>
// kernel: custom-call
$region0: #{custom-call}
  %s0 = inlined_call_operand.vmem [shape: f32[4864], index: 0, kind: output, shape index: {}]

// kernel: aae_forward.1
$region0: #{aae_forward.1}
  #allocation0 [shape = 'u32[]', space=smem, size = 0x4, offset = 0x4, fixed_abs, tag = 'smem constant byte address 0x4 - core index']
  #allocation1 [shape = 'u32[72,128]{1,0:T(1,128)}', space=vmem, size = 0x9000, scoped, tag = 'internal scratch']
  #allocation2 [shape = 's8[256,512]{1,0:T(32,128)(4,1)}', space=vmem, size = 0x20000, scoped, tag = 'scratch operand']
  #allocation3 [shape = 's8[512,784]{1,0:T(32,128)(4,1)}', space=vmem, size = 0x70000, scoped, tag = 'scratch operand']
  #allocation4 [shape = 's32[2]{0}', space=sflag, size = 0x8, scoped, tag = 'scratch operand']
  #allocation5 [shape = 's32[]', space=sflag, size = 0x4, offset = 0, fixed_abs, tag = 'sflag constant byte address 0x0 - dummy sync flag']
  #allocation6 [shape = 's32[]', space=sflag, size = 0x4, offset = 0, fixed_abs, tag = 'sflag constant byte address 0x0 - dummy sync flag']
  %s0 = inlined_call_operand.vmem [shape: bf16[8,784], index: 0, kind: input, shape index: {}]
  %s1 = inlined_call_operand.vmem [shape: f32[1,4864], index: 1, kind: input, shape index: {}]
  %s2 = inlined_call_operand.vmem [shape: s8[784,512], index: 2, kind: input, shape index: {}]
  %s3 = inlined_call_operand.vmem [shape: s8[512,256], index: 3, kind: input, shape index: {}]
  %s4 = inlined_call_operand.vmem [shape: bf16[256,256], index: 4, kind: input, shape index: {}]
  %s5 = inlined_call_operand.vmem [shape: s8[256,512], index: 5, kind: input, shape index: {}]
  %s6 = inlined_call_operand.vmem [shape: s8[512,784], index: 6, kind: input, shape index: {}]
  %s7 = inlined_call_operand.vmem [shape: f32[8,784], index: 7, kind: output, shape index: {}]
  %s8 = sld [smem:[#allocation0]]
  $region68: #{aae_forward.1} parent=0
    _
  %s10 = ssub.s32 1, %s8
  %s11 = scalar_select 0, %s10, %s8
  // Predicated region
  $region2: #{aae_forward.1} parent=0 // pred_check
    _
  $region3: #{aae_forward.1} parent=0 // pred_check_branch
    %13 = sbr.rel (0) target = $region5
  $region4: #{aae_forward.1} parent=0 // pred_region
    _
  $region5: #{aae_forward.1} parent=0 // pred_fallthru
    _
  // Predicated region
  $region6: #{aae_forward.1} parent=0 // pred_check
    _
  $region7: #{aae_forward.1} parent=0 // pred_check_branch
    %15 = sbr.rel (0) target = $region9
  $region8: #{aae_forward.1} parent=0 // pred_region
    _
  $region9: #{aae_forward.1} parent=0 // pred_fallthru
    _
  // Predicated region
  $region10: #{aae_forward.1} parent=0 // pred_check
    _
  $region11: #{aae_forward.1} parent=0 // pred_check_branch
    %17 = sbr.rel (0) target = $region13
  $region12: #{aae_forward.1} parent=0 // pred_region
    _
  $region13: #{aae_forward.1} parent=0 // pred_fallthru
    _
  // Predicated region
  $region14: #{aae_forward.1} parent=0 // pred_check
    _
  $region15: #{aae_forward.1} parent=0 // pred_check_branch
    %19 = sbr.rel (0) target = $region17
  $region16: #{aae_forward.1} parent=0 // pred_region
    _
  $region17: #{aae_forward.1} parent=0 // pred_fallthru
    _
  // Predicated region
  $region18: #{aae_forward.1} parent=0 // pred_check
    _
  $region19: #{aae_forward.1} parent=0 // pred_check_branch
    %21 = sbr.rel (0) target = $region21
  $region20: #{aae_forward.1} parent=0 // pred_region
    _
  $region21: #{aae_forward.1} parent=0 // pred_fallthru
    _
  // Predicated region
  $region22: #{aae_forward.1} parent=0 // pred_check
    _
  $region23: #{aae_forward.1} parent=0 // pred_check_branch
    %24 = sbr.rel (0) target = $region25
  $region24: #{aae_forward.1} parent=0 // pred_region
    loop: start=0, step=1, limit=1
    $region26: #{aae_forward.1} parent=24 // loop_pre_header
      _
    $region27: #{aae_forward.1} parent=24 // loop_header
      %s26 = sphi 0, %s30
      %p27 = scmp.ge.s32.totalorder %s26, 1
      %s31 = sphi %s5, %s5
      %s32 = sphi [#allocation2], [#allocation2]
    $region28: #{aae_forward.1} parent=24 // loop_header_branch
      %29 = sbr.rel (%p27) target = $region32
    $region29: #{aae_forward.1} parent=24 // loop_body
      %v33 = vld [vmem:[%s31] sm:$0xff]
      %34 = vst [vmem:[%s32] sm:$0xff] %v33
      %v35 = vld [vmem:[%s31 + $0x8] sm:$0xff]
      %36 = vst [vmem:[%s32 + $0x8] sm:$0xff] %v35
      %v37 = vld [vmem:[%s31 + $0x10] sm:$0xff]
      %38 = vst [vmem:[%s32 + $0x10] sm:$0xff] %v37
      %v39 = vld [vmem:[%s31 + $0x18] sm:$0xff]
      %40 = vst [vmem:[%s32 + $0x18] sm:$0xff] %v39
      %v41 = vld [vmem:[%s31 + $0x20] sm:$0xff]
      %42 = vst [vmem:[%s32 + $0x20] sm:$0xff] %v41
      %v43 = vld [vmem:[%s31 + $0x28] sm:$0xff]
      %44 = vst [vmem:[%s32 + $0x28] sm:$0xff] %v43
      %v45 = vld [vmem:[%s31 + $0x30] sm:$0xff]
      %46 = vst [vmem:[%s32 + $0x30] sm:$0xff] %v45
      %v47 = vld [vmem:[%s31 + $0x38] sm:$0xff]
      %48 = vst [vmem:[%s32 + $0x38] sm:$0xff] %v47
      %v49 = vld [vmem:[%s31 + $0x40] sm:$0xff]
      %50 = vst [vmem:[%s32 + $0x40] sm:$0xff] %v49
      %v51 = vld [vmem:[%s31 + $0x48] sm:$0xff]
      %52 = vst [vmem:[%s32 + $0x48] sm:$0xff] %v51
      %v53 = vld [vmem:[%s31 + $0x50] sm:$0xff]
      %54 = vst [vmem:[%s32 + $0x50] sm:$0xff] %v53
      %v55 = vld [vmem:[%s31 + $0x58] sm:$0xff]
      %56 = vst [vmem:[%s32 + $0x58] sm:$0xff] %v55
      %v57 = vld [vmem:[%s31 + $0x60] sm:$0xff]
      %58 = vst [vmem:[%s32 + $0x60] sm:$0xff] %v57
      %v59 = vld [vmem:[%s31 + $0x68] sm:$0xff]
      %60 = vst [vmem:[%s32 + $0x68] sm:$0xff] %v59
      %v61 = vld [vmem:[%s31 + $0x70] sm:$0xff]
      %62 = vst [vmem:[%s32 + $0x70] sm:$0xff] %v61
      %v63 = vld [vmem:[%s31 + $0x78] sm:$0xff]
      %64 = vst [vmem:[%s32 + $0x78] sm:$0xff] %v63
      %v65 = vld [vmem:[%s31 + $0x80] sm:$0xff]
      %66 = vst [vmem:[%s32 + $0x80] sm:$0xff] %v65
      %v67 = vld [vmem:[%s31 + $0x88] sm:$0xff]
      %68 = vst [vmem:[%s32 + $0x88] sm:$0xff] %v67
      %v69 = vld [vmem:[%s31 + $0x90] sm:$0xff]
      %70 = vst [vmem:[%s32 + $0x90] sm:$0xff] %v69
      %v71 = vld [vmem:[%s31 + $0x98] sm:$0xff]
      %72 = vst [vmem:[%s32 + $0x98] sm:$0xff] %v71
      %v73 = vld [vmem:[%s31 + $0xa0] sm:$0xff]
      %74 = vst [vmem:[%s32 + $0xa0] sm:$0xff] %v73
      %v75 = vld [vmem:[%s31 + $0xa8] sm:$0xff]
      %76 = vst [vmem:[%s32 + $0xa8] sm:$0xff] %v75
      %v77 = vld [vmem:[%s31 + $0xb0] sm:$0xff]
      %78 = vst [vmem:[%s32 + $0xb0] sm:$0xff] %v77
      %v79 = vld [vmem:[%s31 + $0xb8] sm:$0xff]
      %80 = vst [vmem:[%s32 + $0xb8] sm:$0xff] %v79
      %v81 = vld [vmem:[%s31 + $0xc0] sm:$0xff]
      %82 = vst [vmem:[%s32 + $0xc0] sm:$0xff] %v81
      %v83 = vld [vmem:[%s31 + $0xc8] sm:$0xff]
      %84 = vst [vmem:[%s32 + $0xc8] sm:$0xff] %v83
      %v85 = vld [vmem:[%s31 + $0xd0] sm:$0xff]
      %86 = vst [vmem:[%s32 + $0xd0] sm:$0xff] %v85
      %v87 = vld [vmem:[%s31 + $0xd8] sm:$0xff]
      %88 = vst [vmem:[%s32 + $0xd8] sm:$0xff] %v87
      %v89 = vld [vmem:[%s31 + $0xe0] sm:$0xff]
      %90 = vst [vmem:[%s32 + $0xe0] sm:$0xff] %v89
      %v91 = vld [vmem:[%s31 + $0xe8] sm:$0xff]
      %92 = vst [vmem:[%s32 + $0xe8] sm:$0xff] %v91
      %v93 = vld [vmem:[%s31 + $0xf0] sm:$0xff]
      %94 = vst [vmem:[%s32 + $0xf0] sm:$0xff] %v93
      %v95 = vld [vmem:[%s31 + $0xf8] sm:$0xff]
      %96 = vst [vmem:[%s32 + $0xf8] sm:$0xff] %v95
    $region30: #{aae_forward.1} parent=24 // loop_footer
      %s30 = sadd.s32 1, %s26
    $region31: #{aae_forward.1} parent=24 // loop_footer_branch
      %25 = sbr.rel target = $region27
    $region32: #{aae_forward.1} parent=24 // loop_exit
      _
  $region25: #{aae_forward.1} parent=0 // pred_fallthru
    _
  // Predicated region
  $region33: #{aae_forward.1} parent=0 // pred_check
    _
  $region34: #{aae_forward.1} parent=0 // pred_check_branch
    %98 = sbr.rel target = $region36
  $region35: #{aae_forward.1} parent=0 // pred_region
    _
  $region36: #{aae_forward.1} parent=0 // pred_fallthru
    _
  // Predicated region
  $region37: #{aae_forward.1} parent=0 // pred_check
    _
  $region38: #{aae_forward.1} parent=0 // pred_check_branch
    %101 = sbr.rel (0) target = $region40
  $region39: #{aae_forward.1} parent=0 // pred_region
    %102 = vsyncadd [#allocation4], 4096
  $region40: #{aae_forward.1} parent=0 // pred_fallthru
    _
  %s103 = scalar_lea.sflag [#allocation4], 1
  // Predicated region
  $region41: #{aae_forward.1} parent=0 // pred_check
    _
  $region42: #{aae_forward.1} parent=0 // pred_check_branch
    %105 = sbr.rel (0) target = $region44
  $region43: #{aae_forward.1} parent=0 // pred_region
    loop: start=0, step=1, limit=1
    $region45: #{aae_forward.1} parent=43 // loop_pre_header
      _
    $region46: #{aae_forward.1} parent=43 // loop_header
      %s107 = sphi 0, %s111
      %p108 = scmp.ge.s32.totalorder %s107, 1
      %s112 = sphi %s6, %s6
      %s113 = sphi [#allocation3], [#allocation3]
    $region47: #{aae_forward.1} parent=43 // loop_header_branch
      %110 = sbr.rel (%p108) target = $region51
    $region48: #{aae_forward.1} parent=43 // loop_body
      %v114 = vld [vmem:[%s112] sm:$0xff]
      %115 = vst [vmem:[%s113] sm:$0xff] %v114
      %v116 = vld [vmem:[%s112 + $0x8] sm:$0xff]
      %117 = vst [vmem:[%s113 + $0x8] sm:$0xff] %v116
      %v118 = vld [vmem:[%s112 + $0x10] sm:$0xff]
      %119 = vst [vmem:[%s113 + $0x10] sm:$0xff] %v118
      %v120 = vld [vmem:[%s112 + $0x18] sm:$0xff]
      %121 = vst [vmem:[%s113 + $0x18] sm:$0xff] %v120
      %v122 = vld [vmem:[%s112 + $0x20] sm:$0xff]
      %123 = vst [vmem:[%s113 + $0x20] sm:$0xff] %v122
      %v124 = vld [vmem:[%s112 + $0x28] sm:$0xff]
      %125 = vst [vmem:[%s113 + $0x28] sm:$0xff] %v124
      %v126 = vld [vmem:[%s112 + $0x30] sm:$0xff]
      %127 = vst [vmem:[%s113 + $0x30] sm:$0xff] %v126
      %v128 = vld [vmem:[%s112 + $0x38] sm:$0xff]
      %129 = vst [vmem:[%s113 + $0x38] sm:$0xff] %v128
      %v130 = vld [vmem:[%s112 + $0x40] sm:$0xff]
      %131 = vst [vmem:[%s113 + $0x40] sm:$0xff] %v130
      %v132 = vld [vmem:[%s112 + $0x48] sm:$0xff]
      %133 = vst [vmem:[%s113 + $0x48] sm:$0xff] %v132
      %v134 = vld [vmem:[%s112 + $0x50] sm:$0xff]
      %135 = vst [vmem:[%s113 + $0x50] sm:$0xff] %v134
      %v136 = vld [vmem:[%s112 + $0x58] sm:$0xff]
      %137 = vst [vmem:[%s113 + $0x58] sm:$0xff] %v136
      %v138 = vld [vmem:[%s112 + $0x60] sm:$0xff]
      %139 = vst [vmem:[%s113 + $0x60] sm:$0xff] %v138
      %v140 = vld [vmem:[%s112 + $0x68] sm:$0xff]
      %141 = vst [vmem:[%s113 + $0x68] sm:$0xff] %v140
      %v142 = vld [vmem:[%s112 + $0x70] sm:$0xff]
      %143 = vst [vmem:[%s113 + $0x70] sm:$0xff] %v142
      %v144 = vld [vmem:[%s112 + $0x78] sm:$0xff]
      %145 = vst [vmem:[%s113 + $0x78] sm:$0xff] %v144
      %v146 = vld [vmem:[%s112 + $0x80] sm:$0xff]
      %147 = vst [vmem:[%s113 + $0x80] sm:$0xff] %v146
      %v148 = vld [vmem:[%s112 + $0x88] sm:$0xff]
      %149 = vst [vmem:[%s113 + $0x88] sm:$0xff] %v148
      %v150 = vld [vmem:[%s112 + $0x90] sm:$0xff]
      %151 = vst [vmem:[%s113 + $0x90] sm:$0xff] %v150
      %v152 = vld [vmem:[%s112 + $0x98] sm:$0xff]
      %153 = vst [vmem:[%s113 + $0x98] sm:$0xff] %v152
      %v154 = vld [vmem:[%s112 + $0xa0] sm:$0xff]
      %155 = vst [vmem:[%s113 + $0xa0] sm:$0xff] %v154
      %v156 = vld [vmem:[%s112 + $0xa8] sm:$0xff]
      %157 = vst [vmem:[%s113 + $0xa8] sm:$0xff] %v156
      %v158 = vld [vmem:[%s112 + $0xb0] sm:$0xff]
      %159 = vst [vmem:[%s113 + $0xb0] sm:$0xff] %v158
      %v160 = vld [vmem:[%s112 + $0xb8] sm:$0xff]
      %161 = vst [vmem:[%s113 + $0xb8] sm:$0xff] %v160
      %v162 = vld [vmem:[%s112 + $0xc0] sm:$0xff]
      %163 = vst [vmem:[%s113 + $0xc0] sm:$0xff] %v162
      %v164 = vld [vmem:[%s112 + $0xc8] sm:$0xff]
      %165 = vst [vmem:[%s113 + $0xc8] sm:$0xff] %v164
      %v166 = vld [vmem:[%s112 + $0xd0] sm:$0xff]
      %167 = vst [vmem:[%s113 + $0xd0] sm:$0xff] %v166
      %v168 = vld [vmem:[%s112 + $0xd8] sm:$0xff]
      %169 = vst [vmem:[%s113 + $0xd8] sm:$0xff] %v168
      %v170 = vld [vmem:[%s112 + $0xe0] sm:$0xff]
      %171 = vst [vmem:[%s113 + $0xe0] sm:$0xff] %v170
      %v172 = vld [vmem:[%s112 + $0xe8] sm:$0xff]
      %173 = vst [vmem:[%s113 + $0xe8] sm:$0xff] %v172
      %v174 = vld [vmem:[%s112 + $0xf0] sm:$0xff]
      %175 = vst [vmem:[%s113 + $0xf0] sm:$0xff] %v174
      %v176 = vld [vmem:[%s112 + $0xf8] sm:$0xff]
      %177 = vst [vmem:[%s113 + $0xf8] sm:$0xff] %v176
      %v178 = vld [vmem:[%s112 + $0x100] sm:$0xff]
      %179 = vst [vmem:[%s113 + $0x100] sm:$0xff] %v178
      %v180 = vld [vmem:[%s112 + $0x108] sm:$0xff]
      %181 = vst [vmem:[%s113 + $0x108] sm:$0xff] %v180
      %v182 = vld [vmem:[%s112 + $0x110] sm:$0xff]
      %183 = vst [vmem:[%s113 + $0x110] sm:$0xff] %v182
      %v184 = vld [vmem:[%s112 + $0x118] sm:$0xff]
      %185 = vst [vmem:[%s113 + $0x118] sm:$0xff] %v184
      %v186 = vld [vmem:[%s112 + $0x120] sm:$0xff]
      %187 = vst [vmem:[%s113 + $0x120] sm:$0xff] %v186
      %v188 = vld [vmem:[%s112 + $0x128] sm:$0xff]
      %189 = vst [vmem:[%s113 + $0x128] sm:$0xff] %v188
      %v190 = vld [vmem:[%s112 + $0x130] sm:$0xff]
      %191 = vst [vmem:[%s113 + $0x130] sm:$0xff] %v190
      %v192 = vld [vmem:[%s112 + $0x138] sm:$0xff]
      %193 = vst [vmem:[%s113 + $0x138] sm:$0xff] %v192
      %v194 = vld [vmem:[%s112 + $0x140] sm:$0xff]
      %195 = vst [vmem:[%s113 + $0x140] sm:$0xff] %v194
      %v196 = vld [vmem:[%s112 + $0x148] sm:$0xff]
      %197 = vst [vmem:[%s113 + $0x148] sm:$0xff] %v196
      %v198 = vld [vmem:[%s112 + $0x150] sm:$0xff]
      %199 = vst [vmem:[%s113 + $0x150] sm:$0xff] %v198
      %v200 = vld [vmem:[%s112 + $0x158] sm:$0xff]
      %201 = vst [vmem:[%s113 + $0x158] sm:$0xff] %v200
      %v202 = vld [vmem:[%s112 + $0x160] sm:$0xff]
      %203 = vst [vmem:[%s113 + $0x160] sm:$0xff] %v202
      %v204 = vld [vmem:[%s112 + $0x168] sm:$0xff]
      %205 = vst [vmem:[%s113 + $0x168] sm:$0xff] %v204
      %v206 = vld [vmem:[%s112 + $0x170] sm:$0xff]
      %207 = vst [vmem:[%s113 + $0x170] sm:$0xff] %v206
      %v208 = vld [vmem:[%s112 + $0x178] sm:$0xff]
      %209 = vst [vmem:[%s113 + $0x178] sm:$0xff] %v208
      %v210 = vld [vmem:[%s112 + $0x180] sm:$0xff]
      %211 = vst [vmem:[%s113 + $0x180] sm:$0xff] %v210
      %v212 = vld [vmem:[%s112 + $0x188] sm:$0xff]
      %213 = vst [vmem:[%s113 + $0x188] sm:$0xff] %v212
      %v214 = vld [vmem:[%s112 + $0x190] sm:$0xff]
      %215 = vst [vmem:[%s113 + $0x190] sm:$0xff] %v214
      %v216 = vld [vmem:[%s112 + $0x198] sm:$0xff]
      %217 = vst [vmem:[%s113 + $0x198] sm:$0xff] %v216
      %v218 = vld [vmem:[%s112 + $0x1a0] sm:$0xff]
      %219 = vst [vmem:[%s113 + $0x1a0] sm:$0xff] %v218
      %v220 = vld [vmem:[%s112 + $0x1a8] sm:$0xff]
      %221 = vst [vmem:[%s113 + $0x1a8] sm:$0xff] %v220
      %v222 = vld [vmem:[%s112 + $0x1b0] sm:$0xff]
      %223 = vst [vmem:[%s113 + $0x1b0] sm:$0xff] %v222
      %v224 = vld [vmem:[%s112 + $0x1b8] sm:$0xff]
      %225 = vst [vmem:[%s113 + $0x1b8] sm:$0xff] %v224
      %v226 = vld [vmem:[%s112 + $0x1c0] sm:$0xff]
      %227 = vst [vmem:[%s113 + $0x1c0] sm:$0xff] %v226
      %v228 = vld [vmem:[%s112 + $0x1c8] sm:$0xff]
      %229 = vst [vmem:[%s113 + $0x1c8] sm:$0xff] %v228
      %v230 = vld [vmem:[%s112 + $0x1d0] sm:$0xff]
      %231 = vst [vmem:[%s113 + $0x1d0] sm:$0xff] %v230
      %v232 = vld [vmem:[%s112 + $0x1d8] sm:$0xff]
      %233 = vst [vmem:[%s113 + $0x1d8] sm:$0xff] %v232
      %v234 = vld [vmem:[%s112 + $0x1e0] sm:$0xff]
      %235 = vst [vmem:[%s113 + $0x1e0] sm:$0xff] %v234
      %v236 = vld [vmem:[%s112 + $0x1e8] sm:$0xff]
      %237 = vst [vmem:[%s113 + $0x1e8] sm:$0xff] %v236
      %v238 = vld [vmem:[%s112 + $0x1f0] sm:$0xff]
      %239 = vst [vmem:[%s113 + $0x1f0] sm:$0xff] %v238
      %v240 = vld [vmem:[%s112 + $0x1f8] sm:$0xff]
      %241 = vst [vmem:[%s113 + $0x1f8] sm:$0xff] %v240
      %v242 = vld [vmem:[%s112 + $0x200] sm:$0xff]
      %243 = vst [vmem:[%s113 + $0x200] sm:$0xff] %v242
      %v244 = vld [vmem:[%s112 + $0x208] sm:$0xff]
      %245 = vst [vmem:[%s113 + $0x208] sm:$0xff] %v244
      %v246 = vld [vmem:[%s112 + $0x210] sm:$0xff]
      %247 = vst [vmem:[%s113 + $0x210] sm:$0xff] %v246
      %v248 = vld [vmem:[%s112 + $0x218] sm:$0xff]
      %249 = vst [vmem:[%s113 + $0x218] sm:$0xff] %v248
      %v250 = vld [vmem:[%s112 + $0x220] sm:$0xff]
      %251 = vst [vmem:[%s113 + $0x220] sm:$0xff] %v250
      %v252 = vld [vmem:[%s112 + $0x228] sm:$0xff]
      %253 = vst [vmem:[%s113 + $0x228] sm:$0xff] %v252
      %v254 = vld [vmem:[%s112 + $0x230] sm:$0xff]
      %255 = vst [vmem:[%s113 + $0x230] sm:$0xff] %v254
      %v256 = vld [vmem:[%s112 + $0x238] sm:$0xff]
      %257 = vst [vmem:[%s113 + $0x238] sm:$0xff] %v256
      %v258 = vld [vmem:[%s112 + $0x240] sm:$0xff]
      %259 = vst [vmem:[%s113 + $0x240] sm:$0xff] %v258
      %v260 = vld [vmem:[%s112 + $0x248] sm:$0xff]
      %261 = vst [vmem:[%s113 + $0x248] sm:$0xff] %v260
      %v262 = vld [vmem:[%s112 + $0x250] sm:$0xff]
      %263 = vst [vmem:[%s113 + $0x250] sm:$0xff] %v262
      %v264 = vld [vmem:[%s112 + $0x258] sm:$0xff]
      %265 = vst [vmem:[%s113 + $0x258] sm:$0xff] %v264
      %v266 = vld [vmem:[%s112 + $0x260] sm:$0xff]
      %267 = vst [vmem:[%s113 + $0x260] sm:$0xff] %v266
      %v268 = vld [vmem:[%s112 + $0x268] sm:$0xff]
      %269 = vst [vmem:[%s113 + $0x268] sm:$0xff] %v268
      %v270 = vld [vmem:[%s112 + $0x270] sm:$0xff]
      %271 = vst [vmem:[%s113 + $0x270] sm:$0xff] %v270
      %v272 = vld [vmem:[%s112 + $0x278] sm:$0xff]
      %273 = vst [vmem:[%s113 + $0x278] sm:$0xff] %v272
      %v274 = vld [vmem:[%s112 + $0x280] sm:$0xff]
      %275 = vst [vmem:[%s113 + $0x280] sm:$0xff] %v274
      %v276 = vld [vmem:[%s112 + $0x288] sm:$0xff]
      %277 = vst [vmem:[%s113 + $0x288] sm:$0xff] %v276
      %v278 = vld [vmem:[%s112 + $0x290] sm:$0xff]
      %279 = vst [vmem:[%s113 + $0x290] sm:$0xff] %v278
      %v280 = vld [vmem:[%s112 + $0x298] sm:$0xff]
      %281 = vst [vmem:[%s113 + $0x298] sm:$0xff] %v280
      %v282 = vld [vmem:[%s112 + $0x2a0] sm:$0xff]
      %283 = vst [vmem:[%s113 + $0x2a0] sm:$0xff] %v282
      %v284 = vld [vmem:[%s112 + $0x2a8] sm:$0xff]
      %285 = vst [vmem:[%s113 + $0x2a8] sm:$0xff] %v284
      %v286 = vld [vmem:[%s112 + $0x2b0] sm:$0xff]
      %287 = vst [vmem:[%s113 + $0x2b0] sm:$0xff] %v286
      %v288 = vld [vmem:[%s112 + $0x2b8] sm:$0xff]
      %289 = vst [vmem:[%s113 + $0x2b8] sm:$0xff] %v288
      %v290 = vld [vmem:[%s112 + $0x2c0] sm:$0xff]
      %291 = vst [vmem:[%s113 + $0x2c0] sm:$0xff] %v290
      %v292 = vld [vmem:[%s112 + $0x2c8] sm:$0xff]
      %293 = vst [vmem:[%s113 + $0x2c8] sm:$0xff] %v292
      %v294 = vld [vmem:[%s112 + $0x2d0] sm:$0xff]
      %295 = vst [vmem:[%s113 + $0x2d0] sm:$0xff] %v294
      %v296 = vld [vmem:[%s112 + $0x2d8] sm:$0xff]
      %297 = vst [vmem:[%s113 + $0x2d8] sm:$0xff] %v296
      %v298 = vld [vmem:[%s112 + $0x2e0] sm:$0xff]
      %299 = vst [vmem:[%s113 + $0x2e0] sm:$0xff] %v298
      %v300 = vld [vmem:[%s112 + $0x2e8] sm:$0xff]
      %301 = vst [vmem:[%s113 + $0x2e8] sm:$0xff] %v300
      %v302 = vld [vmem:[%s112 + $0x2f0] sm:$0xff]
      %303 = vst [vmem:[%s113 + $0x2f0] sm:$0xff] %v302
      %v304 = vld [vmem:[%s112 + $0x2f8] sm:$0xff]
      %305 = vst [vmem:[%s113 + $0x2f8] sm:$0xff] %v304
      %v306 = vld [vmem:[%s112 + $0x300] sm:$0xff]
      %307 = vst [vmem:[%s113 + $0x300] sm:$0xff] %v306
      %v308 = vld [vmem:[%s112 + $0x308] sm:$0xff]
      %309 = vst [vmem:[%s113 + $0x308] sm:$0xff] %v308
      %v310 = vld [vmem:[%s112 + $0x310] sm:$0xff]
      %311 = vst [vmem:[%s113 + $0x310] sm:$0xff] %v310
      %v312 = vld [vmem:[%s112 + $0x318] sm:$0xff]
      %313 = vst [vmem:[%s113 + $0x318] sm:$0xff] %v312
      %v314 = vld [vmem:[%s112 + $0x320] sm:$0xff]
      %315 = vst [vmem:[%s113 + $0x320] sm:$0xff] %v314
      %v316 = vld [vmem:[%s112 + $0x328] sm:$0xff]
      %317 = vst [vmem:[%s113 + $0x328] sm:$0xff] %v316
      %v318 = vld [vmem:[%s112 + $0x330] sm:$0xff]
      %319 = vst [vmem:[%s113 + $0x330] sm:$0xff] %v318
      %v320 = vld [vmem:[%s112 + $0x338] sm:$0xff]
      %321 = vst [vmem:[%s113 + $0x338] sm:$0xff] %v320
      %v322 = vld [vmem:[%s112 + $0x340] sm:$0xff]
      %323 = vst [vmem:[%s113 + $0x340] sm:$0xff] %v322
      %v324 = vld [vmem:[%s112 + $0x348] sm:$0xff]
      %325 = vst [vmem:[%s113 + $0x348] sm:$0xff] %v324
      %v326 = vld [vmem:[%s112 + $0x350] sm:$0xff]
      %327 = vst [vmem:[%s113 + $0x350] sm:$0xff] %v326
      %v328 = vld [vmem:[%s112 + $0x358] sm:$0xff]
      %329 = vst [vmem:[%s113 + $0x358] sm:$0xff] %v328
      %v330 = vld [vmem:[%s112 + $0x360] sm:$0xff]
      %331 = vst [vmem:[%s113 + $0x360] sm:$0xff] %v330
      %v332 = vld [vmem:[%s112 + $0x368] sm:$0xff]
      %333 = vst [vmem:[%s113 + $0x368] sm:$0xff] %v332
      %v334 = vld [vmem:[%s112 + $0x370] sm:$0xff]
      %335 = vst [vmem:[%s113 + $0x370] sm:$0xff] %v334
      %v336 = vld [vmem:[%s112 + $0x378] sm:$0xff]
      %337 = vst [vmem:[%s113 + $0x378] sm:$0xff] %v336
    $region49: #{aae_forward.1} parent=43 // loop_footer
      %s111 = sadd.s32 1, %s107
    $region50: #{aae_forward.1} parent=43 // loop_footer_branch
      %106 = sbr.rel target = $region46
    $region51: #{aae_forward.1} parent=43 // loop_exit
      _
  $region44: #{aae_forward.1} parent=0 // pred_fallthru
    _
  // Predicated region
  $region52: #{aae_forward.1} parent=0 // pred_check
    _
  $region53: #{aae_forward.1} parent=0 // pred_check_branch
    %339 = sbr.rel target = $region55
  $region54: #{aae_forward.1} parent=0 // pred_region
    _
  $region55: #{aae_forward.1} parent=0 // pred_fallthru
    _
  // Predicated region
  $region56: #{aae_forward.1} parent=0 // pred_check
    _
  $region57: #{aae_forward.1} parent=0 // pred_check_branch
    %342 = sbr.rel (0) target = $region59
  $region58: #{aae_forward.1} parent=0 // pred_region
    %343 = vsyncadd %s103, 14336
  $region59: #{aae_forward.1} parent=0 // pred_fallthru
    _
  %v344 = vld [vmem:[%s0] sm:$0xff]
  %v345 = vld [vmem:[%s0 + $0x8] sm:$0xff]
  %v346 = vld [vmem:[%s0 + $0x10] sm:$0xff]
  %v347 = vld [vmem:[%s0 + $0x18] sm:$0xf]
  %v348 = vld [vmem:[%s2] sm:$0xff]
  %v349 = vld [vmem:[%s2 + $0x8] sm:$0xff]
  %v350 = vld [vmem:[%s2 + $0x10] sm:$0xff]
  %v351 = vld [vmem:[%s2 + $0x18] sm:$0xff]
  %v352 = vld [vmem:[%s2 + $0x20] sm:$0xff]
  %v353 = vld [vmem:[%s2 + $0x28] sm:$0xff]
  %v354 = vld [vmem:[%s2 + $0x30] sm:$0xff]
  %v355 = vld [vmem:[%s2 + $0x38] sm:$0xff]
  %v356 = vld [vmem:[%s2 + $0x40] sm:$0xff]
  %v357 = vld [vmem:[%s2 + $0x48] sm:$0xff]
  %v358 = vld [vmem:[%s2 + $0x50] sm:$0xff]
  %v359 = vld [vmem:[%s2 + $0x58] sm:$0xff]
  %v360 = vld [vmem:[%s2 + $0x60] sm:$0xff]
  %v361 = vld [vmem:[%s2 + $0x68] sm:$0xff]
  %v362 = vld [vmem:[%s2 + $0x70] sm:$0xff]
  %v363 = vld [vmem:[%s2 + $0x78] sm:$0xff]
  %v364 = vld [vmem:[%s2 + $0x80] sm:$0xff]
  %v365 = vld [vmem:[%s2 + $0x88] sm:$0xff]
  %v366 = vld [vmem:[%s2 + $0x90] sm:$0xff]
  %v367 = vld [vmem:[%s2 + $0x98] sm:$0xff]
  %v368 = vld [vmem:[%s2 + $0xa0] sm:$0xff]
  %v369 = vld [vmem:[%s2 + $0xa8] sm:$0xff]
  %v370 = vld [vmem:[%s2 + $0xb0] sm:$0xff]
  %v371 = vld [vmem:[%s2 + $0xb8] sm:$0xff]
  %v372 = vld [vmem:[%s2 + $0xc0] sm:$0xff]
  %v373 = vld [vmem:[%s2 + $0xc8] sm:$0xff]
  %v374 = vld [vmem:[%s2 + $0xd0] sm:$0xff]
  %v375 = vld [vmem:[%s2 + $0xd8] sm:$0xff]
  %v376 = vld [vmem:[%s2 + $0xe0] sm:$0xff]
  %v377 = vld [vmem:[%s2 + $0xe8] sm:$0xff]
  %v378 = vld [vmem:[%s2 + $0xf0] sm:$0xff]
  %v379 = vld [vmem:[%s2 + $0xf8] sm:$0xff]
  %v380 = vld [vmem:[%s2 + $0x100] sm:$0xff]
  %v381 = vld [vmem:[%s2 + $0x108] sm:$0xff]
  %v382 = vld [vmem:[%s2 + $0x110] sm:$0xff]
  %v383 = vld [vmem:[%s2 + $0x118] sm:$0xff]
  %v384 = vld [vmem:[%s2 + $0x120] sm:$0xff]
  %v385 = vld [vmem:[%s2 + $0x128] sm:$0xff]
  %v386 = vld [vmem:[%s2 + $0x130] sm:$0xff]
  %v387 = vld [vmem:[%s2 + $0x138] sm:$0xff]
  %v388 = vld [vmem:[%s2 + $0x140] sm:$0xff]
  %v389 = vld [vmem:[%s2 + $0x148] sm:$0xff]
  %v390 = vld [vmem:[%s2 + $0x150] sm:$0xff]
  %v391 = vld [vmem:[%s2 + $0x158] sm:$0xff]
  %v392 = vld [vmem:[%s2 + $0x160] sm:$0xff]
  %v393 = vld [vmem:[%s2 + $0x168] sm:$0xff]
  %v394 = vld [vmem:[%s2 + $0x170] sm:$0xff]
  %v395 = vld [vmem:[%s2 + $0x178] sm:$0xff]
  %v396 = vld [vmem:[%s2 + $0x180] sm:$0xff]
  %v397 = vld [vmem:[%s2 + $0x188] sm:$0xff]
  %v398 = vld [vmem:[%s2 + $0x190] sm:$0xff]
  %v399 = vld [vmem:[%s2 + $0x198] sm:$0xff]
  %v400 = vld [vmem:[%s2 + $0x1a0] sm:$0xff]
  %v401 = vld [vmem:[%s2 + $0x1a8] sm:$0xff]
  %v402 = vld [vmem:[%s2 + $0x1b0] sm:$0xff]
  %v403 = vld [vmem:[%s2 + $0x1b8] sm:$0xff]
  %v404 = vld [vmem:[%s2 + $0x1c0] sm:$0xff]
  %v405 = vld [vmem:[%s2 + $0x1c8] sm:$0xff]
  %v406 = vld [vmem:[%s2 + $0x1d0] sm:$0xff]
  %v407 = vld [vmem:[%s2 + $0x1d8] sm:$0xff]
  %v408 = vld [vmem:[%s2 + $0x1e0] sm:$0xff]
  %v409 = vld [vmem:[%s2 + $0x1e8] sm:$0xff]
  %v410 = vld [vmem:[%s2 + $0x1f0] sm:$0xff]
  %v411 = vld [vmem:[%s2 + $0x1f8] sm:$0xff]
  %v412 = vld [vmem:[%s2 + $0x200] sm:$0xff]
  %v413 = vld [vmem:[%s2 + $0x208] sm:$0xff]
  %v414 = vld [vmem:[%s2 + $0x210] sm:$0xff]
  %v415 = vld [vmem:[%s2 + $0x218] sm:$0xff]
  %v416 = vld [vmem:[%s2 + $0x220] sm:$0xff]
  %v417 = vld [vmem:[%s2 + $0x228] sm:$0xff]
  %v418 = vld [vmem:[%s2 + $0x230] sm:$0xff]
  %v419 = vld [vmem:[%s2 + $0x238] sm:$0xff]
  %v420 = vld [vmem:[%s2 + $0x240] sm:$0xff]
  %v421 = vld [vmem:[%s2 + $0x248] sm:$0xff]
  %v422 = vld [vmem:[%s2 + $0x250] sm:$0xff]
  %v423 = vld [vmem:[%s2 + $0x258] sm:$0xff]
  %v424 = vld [vmem:[%s2 + $0x260] sm:$0xff]
  %v425 = vld [vmem:[%s2 + $0x268] sm:$0xff]
  %v426 = vld [vmem:[%s2 + $0x270] sm:$0xff]
  %v427 = vld [vmem:[%s2 + $0x278] sm:$0xff]
  %v428 = vld [vmem:[%s2 + $0x280] sm:$0xff]
  %v429 = vld [vmem:[%s2 + $0x288] sm:$0xff]
  %v430 = vld [vmem:[%s2 + $0x290] sm:$0xff]
  %v431 = vld [vmem:[%s2 + $0x298] sm:$0xff]
  %v432 = vld [vmem:[%s2 + $0x2a0] sm:$0xff]
  %v433 = vld [vmem:[%s2 + $0x2a8] sm:$0xff]
  %v434 = vld [vmem:[%s2 + $0x2b0] sm:$0xff]
  %v435 = vld [vmem:[%s2 + $0x2b8] sm:$0xff]
  %v436 = vld [vmem:[%s2 + $0x2c0] sm:$0xff]
  %v437 = vld [vmem:[%s2 + $0x2c8] sm:$0xff]
  %v438 = vld [vmem:[%s2 + $0x2d0] sm:$0xff]
  %v439 = vld [vmem:[%s2 + $0x2d8] sm:$0xff]
  %v440 = vld [vmem:[%s2 + $0x2e0] sm:$0xff]
  %v441 = vld [vmem:[%s2 + $0x2e8] sm:$0xff]
  %v442 = vld [vmem:[%s2 + $0x2f0] sm:$0xff]
  %v443 = vld [vmem:[%s2 + $0x2f8] sm:$0xff]
  %v444 = vld [vmem:[%s2 + $0x300] sm:$0xff]
  %v445 = vld [vmem:[%s2 + $0x308] sm:$0xff]
  %v446 = vunpack.c.0.s8 %v348
  %v447 = vunpack.c.1.s8 %v348
  %v448 = vunpack.c.2.s8 %v348
  %v449 = vunpack.c.3.s8 %v348
  %v450 = vunpack.c.0.s8 %v349
  %v451 = vunpack.c.1.s8 %v349
  %v452 = vunpack.c.2.s8 %v349
  %v453 = vunpack.c.3.s8 %v349
  %v454 = vunpack.c.0.s8 %v350
  %v455 = vunpack.c.1.s8 %v350
  %v456 = vunpack.c.2.s8 %v350
  %v457 = vunpack.c.3.s8 %v350
  %v458 = vunpack.c.0.s8 %v351
  %v459 = vunpack.c.1.s8 %v351
  %v460 = vunpack.c.2.s8 %v351
  %v461 = vunpack.c.3.s8 %v351
  %v462 = vunpack.c.0.s8 %v352
  %v463 = vunpack.c.1.s8 %v352
  %v464 = vunpack.c.2.s8 %v352
  %v465 = vunpack.c.3.s8 %v352
  %v466 = vunpack.c.0.s8 %v353
  %v467 = vunpack.c.1.s8 %v353
  %v468 = vunpack.c.2.s8 %v353
  %v469 = vunpack.c.3.s8 %v353
  %v470 = vunpack.c.0.s8 %v354
  %v471 = vunpack.c.1.s8 %v354
  %v472 = vunpack.c.2.s8 %v354
  %v473 = vunpack.c.3.s8 %v354
  %v474 = vunpack.c.0.s8 %v355
  %v475 = vunpack.c.1.s8 %v355
  %v476 = vunpack.c.2.s8 %v355
  %v477 = vunpack.c.3.s8 %v355
  %v478 = vunpack.c.0.s8 %v356
  %v479 = vunpack.c.1.s8 %v356
  %v480 = vunpack.c.2.s8 %v356
  %v481 = vunpack.c.3.s8 %v356
  %v482 = vunpack.c.0.s8 %v357
  %v483 = vunpack.c.1.s8 %v357
  %v484 = vunpack.c.2.s8 %v357
  %v485 = vunpack.c.3.s8 %v357
  %v486 = vunpack.c.0.s8 %v358
  %v487 = vunpack.c.1.s8 %v358
  %v488 = vunpack.c.2.s8 %v358
  %v489 = vunpack.c.3.s8 %v358
  %v490 = vunpack.c.0.s8 %v359
  %v491 = vunpack.c.1.s8 %v359
  %v492 = vunpack.c.2.s8 %v359
  %v493 = vunpack.c.3.s8 %v359
  %v494 = vunpack.c.0.s8 %v360
  %v495 = vunpack.c.1.s8 %v360
  %v496 = vunpack.c.2.s8 %v360
  %v497 = vunpack.c.3.s8 %v360
  %v498 = vunpack.c.0.s8 %v361
  %v499 = vunpack.c.1.s8 %v361
  %v500 = vunpack.c.2.s8 %v361
  %v501 = vunpack.c.3.s8 %v361
  %v502 = vunpack.c.0.s8 %v362
  %v503 = vunpack.c.1.s8 %v362
  %v504 = vunpack.c.2.s8 %v362
  %v505 = vunpack.c.3.s8 %v362
  %v506 = vunpack.c.0.s8 %v363
  %v507 = vunpack.c.1.s8 %v363
  %v508 = vunpack.c.2.s8 %v363
  %v509 = vunpack.c.3.s8 %v363
  %v510 = vunpack.c.0.s8 %v364
  %v511 = vunpack.c.1.s8 %v364
  %v512 = vunpack.c.2.s8 %v364
  %v513 = vunpack.c.3.s8 %v364
  %v514 = vunpack.c.0.s8 %v365
  %v515 = vunpack.c.1.s8 %v365
  %v516 = vunpack.c.2.s8 %v365
  %v517 = vunpack.c.3.s8 %v365
  %v518 = vunpack.c.0.s8 %v366
  %v519 = vunpack.c.1.s8 %v366
  %v520 = vunpack.c.2.s8 %v366
  %v521 = vunpack.c.3.s8 %v366
  %v522 = vunpack.c.0.s8 %v367
  %v523 = vunpack.c.1.s8 %v367
  %v524 = vunpack.c.2.s8 %v367
  %v525 = vunpack.c.3.s8 %v367
  %v526 = vunpack.c.0.s8 %v368
  %v527 = vunpack.c.1.s8 %v368
  %v528 = vunpack.c.2.s8 %v368
  %v529 = vunpack.c.3.s8 %v368
  %v530 = vunpack.c.0.s8 %v369
  %v531 = vunpack.c.1.s8 %v369
  %v532 = vunpack.c.2.s8 %v369
  %v533 = vunpack.c.3.s8 %v369
  %v534 = vunpack.c.0.s8 %v370
  %v535 = vunpack.c.1.s8 %v370
  %v536 = vunpack.c.2.s8 %v370
  %v537 = vunpack.c.3.s8 %v370
  %v538 = vunpack.c.0.s8 %v371
  %v539 = vunpack.c.1.s8 %v371
  %v540 = vunpack.c.2.s8 %v371
  %v541 = vunpack.c.3.s8 %v371
  %v542 = vunpack.c.0.s8 %v372
  %v543 = vunpack.c.1.s8 %v372
  %v544 = vunpack.c.2.s8 %v372
  %v545 = vunpack.c.3.s8 %v372
  %v546 = vunpack.c.0.s8 %v373
  %v547 = vunpack.c.1.s8 %v373
  %v548 = vunpack.c.2.s8 %v373
  %v549 = vunpack.c.3.s8 %v373
  %v550 = vunpack.c.0.s8 %v374
  %v551 = vunpack.c.1.s8 %v374
  %v552 = vunpack.c.2.s8 %v374
  %v553 = vunpack.c.3.s8 %v374
  %v554 = vunpack.c.0.s8 %v375
  %v555 = vunpack.c.1.s8 %v375
  %v556 = vunpack.c.2.s8 %v375
  %v557 = vunpack.c.3.s8 %v375
  %v558 = vunpack.c.0.s8 %v376
  %v559 = vunpack.c.1.s8 %v376
  %v560 = vunpack.c.2.s8 %v376
  %v561 = vunpack.c.3.s8 %v376
  %v562 = vunpack.c.0.s8 %v377
  %v563 = vunpack.c.1.s8 %v377
  %v564 = vunpack.c.2.s8 %v377
  %v565 = vunpack.c.3.s8 %v377
  %v566 = vunpack.c.0.s8 %v378
  %v567 = vunpack.c.1.s8 %v378
  %v568 = vunpack.c.2.s8 %v378
  %v569 = vunpack.c.3.s8 %v378
  %v570 = vunpack.c.0.s8 %v379
  %v571 = vunpack.c.1.s8 %v379
  %v572 = vunpack.c.2.s8 %v379
  %v573 = vunpack.c.3.s8 %v379
  %v574 = vunpack.c.0.s8 %v380
  %v575 = vunpack.c.1.s8 %v380
  %v576 = vunpack.c.2.s8 %v380
  %v577 = vunpack.c.3.s8 %v380
  %v578 = vunpack.c.0.s8 %v381
  %v579 = vunpack.c.1.s8 %v381
  %v580 = vunpack.c.2.s8 %v381
  %v581 = vunpack.c.3.s8 %v381
  %v582 = vunpack.c.0.s8 %v382
  %v583 = vunpack.c.1.s8 %v382
  %v584 = vunpack.c.2.s8 %v382
  %v585 = vunpack.c.3.s8 %v382
  %v586 = vunpack.c.0.s8 %v383
  %v587 = vunpack.c.1.s8 %v383
  %v588 = vunpack.c.2.s8 %v383
  %v589 = vunpack.c.3.s8 %v383
  %v590 = vunpack.c.0.s8 %v384
  %v591 = vunpack.c.1.s8 %v384
  %v592 = vunpack.c.2.s8 %v384
  %v593 = vunpack.c.3.s8 %v384
  %v594 = vunpack.c.0.s8 %v385
  %v595 = vunpack.c.1.s8 %v385
  %v596 = vunpack.c.2.s8 %v385
  %v597 = vunpack.c.3.s8 %v385
  %v598 = vunpack.c.0.s8 %v386
  %v599 = vunpack.c.1.s8 %v386
  %v600 = vunpack.c.2.s8 %v386
  %v601 = vunpack.c.3.s8 %v386
  %v602 = vunpack.c.0.s8 %v387
  %v603 = vunpack.c.1.s8 %v387
  %v604 = vunpack.c.2.s8 %v387
  %v605 = vunpack.c.3.s8 %v387
  %v606 = vunpack.c.0.s8 %v388
  %v607 = vunpack.c.1.s8 %v388
  %v608 = vunpack.c.2.s8 %v388
  %v609 = vunpack.c.3.s8 %v388
  %v610 = vunpack.c.0.s8 %v389
  %v611 = vunpack.c.1.s8 %v389
  %v612 = vunpack.c.2.s8 %v389
  %v613 = vunpack.c.3.s8 %v389
  %v614 = vunpack.c.0.s8 %v390
  %v615 = vunpack.c.1.s8 %v390
  %v616 = vunpack.c.2.s8 %v390
  %v617 = vunpack.c.3.s8 %v390
  %v618 = vunpack.c.0.s8 %v391
  %v619 = vunpack.c.1.s8 %v391
  %v620 = vunpack.c.2.s8 %v391
  %v621 = vunpack.c.3.s8 %v391
  %v622 = vunpack.c.0.s8 %v392
  %v623 = vunpack.c.1.s8 %v392
  %v624 = vunpack.c.2.s8 %v392
  %v625 = vunpack.c.3.s8 %v392
  %v626 = vunpack.c.0.s8 %v393
  %v627 = vunpack.c.1.s8 %v393
  %v628 = vunpack.c.2.s8 %v393
  %v629 = vunpack.c.3.s8 %v393
  %v630 = vunpack.c.0.s8 %v394
  %v631 = vunpack.c.1.s8 %v394
  %v632 = vunpack.c.2.s8 %v394
  %v633 = vunpack.c.3.s8 %v394
  %v634 = vunpack.c.0.s8 %v395
  %v635 = vunpack.c.1.s8 %v395
  %v636 = vunpack.c.2.s8 %v395
  %v637 = vunpack.c.3.s8 %v395
  %v638 = vunpack.c.0.s8 %v396
  %v639 = vunpack.c.1.s8 %v396
  %v640 = vunpack.c.2.s8 %v396
  %v641 = vunpack.c.3.s8 %v396
  %v642 = vunpack.c.0.s8 %v397
  %v643 = vunpack.c.1.s8 %v397
  %v644 = vunpack.c.2.s8 %v397
  %v645 = vunpack.c.3.s8 %v397
  %v646 = vunpack.c.0.s8 %v398
  %v647 = vunpack.c.1.s8 %v398
  %v648 = vunpack.c.2.s8 %v398
  %v649 = vunpack.c.3.s8 %v398
  %v650 = vunpack.c.0.s8 %v399
  %v651 = vunpack.c.1.s8 %v399
  %v652 = vunpack.c.2.s8 %v399
  %v653 = vunpack.c.3.s8 %v399
  %v654 = vunpack.c.0.s8 %v400
  %v655 = vunpack.c.1.s8 %v400
  %v656 = vunpack.c.2.s8 %v400
  %v657 = vunpack.c.3.s8 %v400
  %v658 = vunpack.c.0.s8 %v401
  %v659 = vunpack.c.1.s8 %v401
  %v660 = vunpack.c.2.s8 %v401
  %v661 = vunpack.c.3.s8 %v401
  %v662 = vunpack.c.0.s8 %v402
  %v663 = vunpack.c.1.s8 %v402
  %v664 = vunpack.c.2.s8 %v402
  %v665 = vunpack.c.3.s8 %v402
  %v666 = vunpack.c.0.s8 %v403
  %v667 = vunpack.c.1.s8 %v403
  %v668 = vunpack.c.2.s8 %v403
  %v669 = vunpack.c.3.s8 %v403
  %v670 = vunpack.c.0.s8 %v404
  %v671 = vunpack.c.1.s8 %v404
  %v672 = vunpack.c.2.s8 %v404
  %v673 = vunpack.c.3.s8 %v404
  %v674 = vunpack.c.0.s8 %v405
  %v675 = vunpack.c.1.s8 %v405
  %v676 = vunpack.c.2.s8 %v405
  %v677 = vunpack.c.3.s8 %v405
  %v678 = vunpack.c.0.s8 %v406
  %v679 = vunpack.c.1.s8 %v406
  %v680 = vunpack.c.2.s8 %v406
  %v681 = vunpack.c.3.s8 %v406
  %v682 = vunpack.c.0.s8 %v407
  %v683 = vunpack.c.1.s8 %v407
  %v684 = vunpack.c.2.s8 %v407
  %v685 = vunpack.c.3.s8 %v407
  %v686 = vunpack.c.0.s8 %v408
  %v687 = vunpack.c.1.s8 %v408
  %v688 = vunpack.c.2.s8 %v408
  %v689 = vunpack.c.3.s8 %v408
  %v690 = vunpack.c.0.s8 %v409
  %v691 = vunpack.c.1.s8 %v409
  %v692 = vunpack.c.2.s8 %v409
  %v693 = vunpack.c.3.s8 %v409
  %v694 = vunpack.c.0.s8 %v410
  %v695 = vunpack.c.1.s8 %v410
  %v696 = vunpack.c.2.s8 %v410
  %v697 = vunpack.c.3.s8 %v410
  %v698 = vunpack.c.0.s8 %v411
  %v699 = vunpack.c.1.s8 %v411
  %v700 = vunpack.c.2.s8 %v411
  %v701 = vunpack.c.3.s8 %v411
  %v702 = vunpack.c.0.s8 %v412
  %v703 = vunpack.c.1.s8 %v412
  %v704 = vunpack.c.2.s8 %v412
  %v705 = vunpack.c.3.s8 %v412
  %v706 = vunpack.c.0.s8 %v413
  %v707 = vunpack.c.1.s8 %v413
  %v708 = vunpack.c.2.s8 %v413
  %v709 = vunpack.c.3.s8 %v413
  %v710 = vunpack.c.0.s8 %v414
  %v711 = vunpack.c.1.s8 %v414
  %v712 = vunpack.c.2.s8 %v414
  %v713 = vunpack.c.3.s8 %v414
  %v714 = vunpack.c.0.s8 %v415
  %v715 = vunpack.c.1.s8 %v415
  %v716 = vunpack.c.2.s8 %v415
  %v717 = vunpack.c.3.s8 %v415
  %v718 = vunpack.c.0.s8 %v416
  %v719 = vunpack.c.1.s8 %v416
  %v720 = vunpack.c.2.s8 %v416
  %v721 = vunpack.c.3.s8 %v416
  %v722 = vunpack.c.0.s8 %v417
  %v723 = vunpack.c.1.s8 %v417
  %v724 = vunpack.c.2.s8 %v417
  %v725 = vunpack.c.3.s8 %v417
  %v726 = vunpack.c.0.s8 %v418
  %v727 = vunpack.c.1.s8 %v418
  %v728 = vunpack.c.2.s8 %v418
  %v729 = vunpack.c.3.s8 %v418
  %v730 = vunpack.c.0.s8 %v419
  %v731 = vunpack.c.1.s8 %v419
  %v732 = vunpack.c.2.s8 %v419
  %v733 = vunpack.c.3.s8 %v419
  %v734 = vunpack.c.0.s8 %v420
  %v735 = vunpack.c.1.s8 %v420
  %v736 = vunpack.c.2.s8 %v420
  %v737 = vunpack.c.3.s8 %v420
  %v738 = vunpack.c.0.s8 %v421
  %v739 = vunpack.c.1.s8 %v421
  %v740 = vunpack.c.2.s8 %v421
  %v741 = vunpack.c.3.s8 %v421
  %v742 = vunpack.c.0.s8 %v422
  %v743 = vunpack.c.1.s8 %v422
  %v744 = vunpack.c.2.s8 %v422
  %v745 = vunpack.c.3.s8 %v422
  %v746 = vunpack.c.0.s8 %v423
  %v747 = vunpack.c.1.s8 %v423
  %v748 = vunpack.c.2.s8 %v423
  %v749 = vunpack.c.3.s8 %v423
  %v750 = vunpack.c.0.s8 %v424
  %v751 = vunpack.c.1.s8 %v424
  %v752 = vunpack.c.2.s8 %v424
  %v753 = vunpack.c.3.s8 %v424
  %v754 = vunpack.c.0.s8 %v425
  %v755 = vunpack.c.1.s8 %v425
  %v756 = vunpack.c.2.s8 %v425
  %v757 = vunpack.c.3.s8 %v425
  %v758 = vunpack.c.0.s8 %v426
  %v759 = vunpack.c.1.s8 %v426
  %v760 = vunpack.c.2.s8 %v426
  %v761 = vunpack.c.3.s8 %v426
  %v762 = vunpack.c.0.s8 %v427
  %v763 = vunpack.c.1.s8 %v427
  %v764 = vunpack.c.2.s8 %v427
  %v765 = vunpack.c.3.s8 %v427
  %v766 = vunpack.c.0.s8 %v428
  %v767 = vunpack.c.1.s8 %v428
  %v768 = vunpack.c.2.s8 %v428
  %v769 = vunpack.c.3.s8 %v428
  %v770 = vunpack.c.0.s8 %v429
  %v771 = vunpack.c.1.s8 %v429
  %v772 = vunpack.c.2.s8 %v429
  %v773 = vunpack.c.3.s8 %v429
  %v774 = vunpack.c.0.s8 %v430
  %v775 = vunpack.c.1.s8 %v430
  %v776 = vunpack.c.2.s8 %v430
  %v777 = vunpack.c.3.s8 %v430
  %v778 = vunpack.c.0.s8 %v431
  %v779 = vunpack.c.1.s8 %v431
  %v780 = vunpack.c.2.s8 %v431
  %v781 = vunpack.c.3.s8 %v431
  %v782 = vunpack.c.0.s8 %v432
  %v783 = vunpack.c.1.s8 %v432
  %v784 = vunpack.c.2.s8 %v432
  %v785 = vunpack.c.3.s8 %v432
  %v786 = vunpack.c.0.s8 %v433
  %v787 = vunpack.c.1.s8 %v433
  %v788 = vunpack.c.2.s8 %v433
  %v789 = vunpack.c.3.s8 %v433
  %v790 = vunpack.c.0.s8 %v434
  %v791 = vunpack.c.1.s8 %v434
  %v792 = vunpack.c.2.s8 %v434
  %v793 = vunpack.c.3.s8 %v434
  %v794 = vunpack.c.0.s8 %v435
  %v795 = vunpack.c.1.s8 %v435
  %v796 = vunpack.c.2.s8 %v435
  %v797 = vunpack.c.3.s8 %v435
  %v798 = vunpack.c.0.s8 %v436
  %v799 = vunpack.c.1.s8 %v436
  %v800 = vunpack.c.2.s8 %v436
  %v801 = vunpack.c.3.s8 %v436
  %v802 = vunpack.c.0.s8 %v437
  %v803 = vunpack.c.1.s8 %v437
  %v804 = vunpack.c.2.s8 %v437
  %v805 = vunpack.c.3.s8 %v437
  %v806 = vunpack.c.0.s8 %v438
  %v807 = vunpack.c.1.s8 %v438
  %v808 = vunpack.c.2.s8 %v438
  %v809 = vunpack.c.3.s8 %v438
  %v810 = vunpack.c.0.s8 %v439
  %v811 = vunpack.c.1.s8 %v439
  %v812 = vunpack.c.2.s8 %v439
  %v813 = vunpack.c.3.s8 %v439
  %v814 = vunpack.c.0.s8 %v440
  %v815 = vunpack.c.1.s8 %v440
  %v816 = vunpack.c.2.s8 %v440
  %v817 = vunpack.c.3.s8 %v440
  %v818 = vunpack.c.0.s8 %v441
  %v819 = vunpack.c.1.s8 %v441
  %v820 = vunpack.c.2.s8 %v441
  %v821 = vunpack.c.3.s8 %v441
  %v822 = vunpack.c.0.s8 %v442
  %v823 = vunpack.c.1.s8 %v442
  %v824 = vunpack.c.2.s8 %v442
  %v825 = vunpack.c.3.s8 %v442
  %v826 = vunpack.c.0.s8 %v443
  %v827 = vunpack.c.1.s8 %v443
  %v828 = vunpack.c.2.s8 %v443
  %v829 = vunpack.c.3.s8 %v443
  %v830 = vunpack.c.0.s8 %v444
  %v831 = vunpack.c.1.s8 %v444
  %v832 = vunpack.c.2.s8 %v444
  %v833 = vunpack.c.3.s8 %v444
  %v834 = vunpack.c.0.s8 %v445
  %v835 = vunpack.c.1.s8 %v445
  %v836 = vunpack.c.2.s8 %v445
  %v837 = vunpack.c.3.s8 %v445
  %v838 = vcvt.s32.f32 %v446
  %v839 = vcvt.s32.f32 %v447
  %v840 = vcvt.s32.f32 %v448
  %v841 = vcvt.s32.f32 %v449
  %v842 = vcvt.s32.f32 %v450
  %v843 = vcvt.s32.f32 %v451
  %v844 = vcvt.s32.f32 %v452
  %v845 = vcvt.s32.f32 %v453
  %v846 = vcvt.s32.f32 %v454
  %v847 = vcvt.s32.f32 %v455
  %v848 = vcvt.s32.f32 %v456
  %v849 = vcvt.s32.f32 %v457
  %v850 = vcvt.s32.f32 %v458
  %v851 = vcvt.s32.f32 %v459
  %v852 = vcvt.s32.f32 %v460
  %v853 = vcvt.s32.f32 %v461
  %v854 = vcvt.s32.f32 %v462
  %v855 = vcvt.s32.f32 %v463
  %v856 = vcvt.s32.f32 %v464
  %v857 = vcvt.s32.f32 %v465
  %v858 = vcvt.s32.f32 %v466
  %v859 = vcvt.s32.f32 %v467
  %v860 = vcvt.s32.f32 %v468
  %v861 = vcvt.s32.f32 %v469
  %v862 = vcvt.s32.f32 %v470
  %v863 = vcvt.s32.f32 %v471
  %v864 = vcvt.s32.f32 %v472
  %v865 = vcvt.s32.f32 %v473
  %v866 = vcvt.s32.f32 %v474
  %v867 = vcvt.s32.f32 %v475
  %v868 = vcvt.s32.f32 %v476
  %v869 = vcvt.s32.f32 %v477
  %v870 = vcvt.s32.f32 %v478
  %v871 = vcvt.s32.f32 %v479
  %v872 = vcvt.s32.f32 %v480
  %v873 = vcvt.s32.f32 %v481
  %v874 = vcvt.s32.f32 %v482
  %v875 = vcvt.s32.f32 %v483
  %v876 = vcvt.s32.f32 %v484
  %v877 = vcvt.s32.f32 %v485
  %v878 = vcvt.s32.f32 %v486
  %v879 = vcvt.s32.f32 %v487
  %v880 = vcvt.s32.f32 %v488
  %v881 = vcvt.s32.f32 %v489
  %v882 = vcvt.s32.f32 %v490
  %v883 = vcvt.s32.f32 %v491
  %v884 = vcvt.s32.f32 %v492
  %v885 = vcvt.s32.f32 %v493
  %v886 = vcvt.s32.f32 %v494
  %v887 = vcvt.s32.f32 %v495
  %v888 = vcvt.s32.f32 %v496
  %v889 = vcvt.s32.f32 %v497
  %v890 = vcvt.s32.f32 %v498
  %v891 = vcvt.s32.f32 %v499
  %v892 = vcvt.s32.f32 %v500
  %v893 = vcvt.s32.f32 %v501
  %v894 = vcvt.s32.f32 %v502
  %v895 = vcvt.s32.f32 %v503
  %v896 = vcvt.s32.f32 %v504
  %v897 = vcvt.s32.f32 %v505
  %v898 = vcvt.s32.f32 %v506
  %v899 = vcvt.s32.f32 %v507
  %v900 = vcvt.s32.f32 %v508
  %v901 = vcvt.s32.f32 %v509
  %v902 = vcvt.s32.f32 %v510
  %v903 = vcvt.s32.f32 %v511
  %v904 = vcvt.s32.f32 %v512
  %v905 = vcvt.s32.f32 %v513
  %v906 = vcvt.s32.f32 %v514
  %v907 = vcvt.s32.f32 %v515
  %v908 = vcvt.s32.f32 %v516
  %v909 = vcvt.s32.f32 %v517
  %v910 = vcvt.s32.f32 %v518
  %v911 = vcvt.s32.f32 %v519
  %v912 = vcvt.s32.f32 %v520
  %v913 = vcvt.s32.f32 %v521
  %v914 = vcvt.s32.f32 %v522
  %v915 = vcvt.s32.f32 %v523
  %v916 = vcvt.s32.f32 %v524
  %v917 = vcvt.s32.f32 %v525
  %v918 = vcvt.s32.f32 %v526
  %v919 = vcvt.s32.f32 %v527
  %v920 = vcvt.s32.f32 %v528
  %v921 = vcvt.s32.f32 %v529
  %v922 = vcvt.s32.f32 %v530
  %v923 = vcvt.s32.f32 %v531
  %v924 = vcvt.s32.f32 %v532
  %v925 = vcvt.s32.f32 %v533
  %v926 = vcvt.s32.f32 %v534
  %v927 = vcvt.s32.f32 %v535
  %v928 = vcvt.s32.f32 %v536
  %v929 = vcvt.s32.f32 %v537
  %v930 = vcvt.s32.f32 %v538
  %v931 = vcvt.s32.f32 %v539
  %v932 = vcvt.s32.f32 %v540
  %v933 = vcvt.s32.f32 %v541
  %v934 = vcvt.s32.f32 %v542
  %v935 = vcvt.s32.f32 %v543
  %v936 = vcvt.s32.f32 %v544
  %v937 = vcvt.s32.f32 %v545
  %v938 = vcvt.s32.f32 %v546
  %v939 = vcvt.s32.f32 %v547
  %v940 = vcvt.s32.f32 %v548
  %v941 = vcvt.s32.f32 %v549
  %v942 = vcvt.s32.f32 %v550
  %v943 = vcvt.s32.f32 %v551
  %v944 = vcvt.s32.f32 %v552
  %v945 = vcvt.s32.f32 %v553
  %v946 = vcvt.s32.f32 %v554
  %v947 = vcvt.s32.f32 %v555
  %v948 = vcvt.s32.f32 %v556
  %v949 = vcvt.s32.f32 %v557
  %v950 = vcvt.s32.f32 %v558
  %v951 = vcvt.s32.f32 %v559
  %v952 = vcvt.s32.f32 %v560
  %v953 = vcvt.s32.f32 %v561
  %v954 = vcvt.s32.f32 %v562
  %v955 = vcvt.s32.f32 %v563
  %v956 = vcvt.s32.f32 %v564
  %v957 = vcvt.s32.f32 %v565
  %v958 = vcvt.s32.f32 %v566
  %v959 = vcvt.s32.f32 %v567
  %v960 = vcvt.s32.f32 %v568
  %v961 = vcvt.s32.f32 %v569
  %v962 = vcvt.s32.f32 %v570
  %v963 = vcvt.s32.f32 %v571
  %v964 = vcvt.s32.f32 %v572
  %v965 = vcvt.s32.f32 %v573
  %v966 = vcvt.s32.f32 %v574
  %v967 = vcvt.s32.f32 %v575
  %v968 = vcvt.s32.f32 %v576
  %v969 = vcvt.s32.f32 %v577
  %v970 = vcvt.s32.f32 %v578
  %v971 = vcvt.s32.f32 %v579
  %v972 = vcvt.s32.f32 %v580
  %v973 = vcvt.s32.f32 %v581
  %v974 = vcvt.s32.f32 %v582
  %v975 = vcvt.s32.f32 %v583
  %v976 = vcvt.s32.f32 %v584
  %v977 = vcvt.s32.f32 %v585
  %v978 = vcvt.s32.f32 %v586
  %v979 = vcvt.s32.f32 %v587
  %v980 = vcvt.s32.f32 %v588
  %v981 = vcvt.s32.f32 %v589
  %v982 = vcvt.s32.f32 %v590
  %v983 = vcvt.s32.f32 %v591
  %v984 = vcvt.s32.f32 %v592
  %v985 = vcvt.s32.f32 %v593
  %v986 = vcvt.s32.f32 %v594
  %v987 = vcvt.s32.f32 %v595
  %v988 = vcvt.s32.f32 %v596
  %v989 = vcvt.s32.f32 %v597
  %v990 = vcvt.s32.f32 %v598
  %v991 = vcvt.s32.f32 %v599
  %v992 = vcvt.s32.f32 %v600
  %v993 = vcvt.s32.f32 %v601
  %v994 = vcvt.s32.f32 %v602
  %v995 = vcvt.s32.f32 %v603
  %v996 = vcvt.s32.f32 %v604
  %v997 = vcvt.s32.f32 %v605
  %v998 = vcvt.s32.f32 %v606
  %v999 = vcvt.s32.f32 %v607
  %v1000 = vcvt.s32.f32 %v608
  %v1001 = vcvt.s32.f32 %v609
  %v1002 = vcvt.s32.f32 %v610
  %v1003 = vcvt.s32.f32 %v611
  %v1004 = vcvt.s32.f32 %v612
  %v1005 = vcvt.s32.f32 %v613
  %v1006 = vcvt.s32.f32 %v614
  %v1007 = vcvt.s32.f32 %v615
  %v1008 = vcvt.s32.f32 %v616
  %v1009 = vcvt.s32.f32 %v617
  %v1010 = vcvt.s32.f32 %v618
  %v1011 = vcvt.s32.f32 %v619
  %v1012 = vcvt.s32.f32 %v620
  %v1013 = vcvt.s32.f32 %v621
  %v1014 = vcvt.s32.f32 %v622
  %v1015 = vcvt.s32.f32 %v623
  %v1016 = vcvt.s32.f32 %v624
  %v1017 = vcvt.s32.f32 %v625
  %v1018 = vcvt.s32.f32 %v626
  %v1019 = vcvt.s32.f32 %v627
  %v1020 = vcvt.s32.f32 %v628
  %v1021 = vcvt.s32.f32 %v629
  %v1022 = vcvt.s32.f32 %v630
  %v1023 = vcvt.s32.f32 %v631
  %v1024 = vcvt.s32.f32 %v632
  %v1025 = vcvt.s32.f32 %v633
  %v1026 = vcvt.s32.f32 %v634
  %v1027 = vcvt.s32.f32 %v635
  %v1028 = vcvt.s32.f32 %v636
  %v1029 = vcvt.s32.f32 %v637
  %v1030 = vcvt.s32.f32 %v638
  %v1031 = vcvt.s32.f32 %v639
  %v1032 = vcvt.s32.f32 %v640
  %v1033 = vcvt.s32.f32 %v641
  %v1034 = vcvt.s32.f32 %v642
  %v1035 = vcvt.s32.f32 %v643
  %v1036 = vcvt.s32.f32 %v644
  %v1037 = vcvt.s32.f32 %v645
  %v1038 = vcvt.s32.f32 %v646
  %v1039 = vcvt.s32.f32 %v647
  %v1040 = vcvt.s32.f32 %v648
  %v1041 = vcvt.s32.f32 %v649
  %v1042 = vcvt.s32.f32 %v650
  %v1043 = vcvt.s32.f32 %v651
  %v1044 = vcvt.s32.f32 %v652
  %v1045 = vcvt.s32.f32 %v653
  %v1046 = vcvt.s32.f32 %v654
  %v1047 = vcvt.s32.f32 %v655
  %v1048 = vcvt.s32.f32 %v656
  %v1049 = vcvt.s32.f32 %v657
  %v1050 = vcvt.s32.f32 %v658
  %v1051 = vcvt.s32.f32 %v659
  %v1052 = vcvt.s32.f32 %v660
  %v1053 = vcvt.s32.f32 %v661
  %v1054 = vcvt.s32.f32 %v662
  %v1055 = vcvt.s32.f32 %v663
  %v1056 = vcvt.s32.f32 %v664
  %v1057 = vcvt.s32.f32 %v665
  %v1058 = vcvt.s32.f32 %v666
  %v1059 = vcvt.s32.f32 %v667
  %v1060 = vcvt.s32.f32 %v668
  %v1061 = vcvt.s32.f32 %v669
  %v1062 = vcvt.s32.f32 %v670
  %v1063 = vcvt.s32.f32 %v671
  %v1064 = vcvt.s32.f32 %v672
  %v1065 = vcvt.s32.f32 %v673
  %v1066 = vcvt.s32.f32 %v674
  %v1067 = vcvt.s32.f32 %v675
  %v1068 = vcvt.s32.f32 %v676
  %v1069 = vcvt.s32.f32 %v677
  %v1070 = vcvt.s32.f32 %v678
  %v1071 = vcvt.s32.f32 %v679
  %v1072 = vcvt.s32.f32 %v680
  %v1073 = vcvt.s32.f32 %v681
  %v1074 = vcvt.s32.f32 %v682
  %v1075 = vcvt.s32.f32 %v683
  %v1076 = vcvt.s32.f32 %v684
  %v1077 = vcvt.s32.f32 %v685
  %v1078 = vcvt.s32.f32 %v686
  %v1079 = vcvt.s32.f32 %v687
  %v1080 = vcvt.s32.f32 %v688
  %v1081 = vcvt.s32.f32 %v689
  %v1082 = vcvt.s32.f32 %v690
  %v1083 = vcvt.s32.f32 %v691
  %v1084 = vcvt.s32.f32 %v692
  %v1085 = vcvt.s32.f32 %v693
  %v1086 = vcvt.s32.f32 %v694
  %v1087 = vcvt.s32.f32 %v695
  %v1088 = vcvt.s32.f32 %v696
  %v1089 = vcvt.s32.f32 %v697
  %v1090 = vcvt.s32.f32 %v698
  %v1091 = vcvt.s32.f32 %v699
  %v1092 = vcvt.s32.f32 %v700
  %v1093 = vcvt.s32.f32 %v701
  %v1094 = vcvt.s32.f32 %v702
  %v1095 = vcvt.s32.f32 %v703
  %v1096 = vcvt.s32.f32 %v704
  %v1097 = vcvt.s32.f32 %v705
  %v1098 = vcvt.s32.f32 %v706
  %v1099 = vcvt.s32.f32 %v707
  %v1100 = vcvt.s32.f32 %v708
  %v1101 = vcvt.s32.f32 %v709
  %v1102 = vcvt.s32.f32 %v710
  %v1103 = vcvt.s32.f32 %v711
  %v1104 = vcvt.s32.f32 %v712
  %v1105 = vcvt.s32.f32 %v713
  %v1106 = vcvt.s32.f32 %v714
  %v1107 = vcvt.s32.f32 %v715
  %v1108 = vcvt.s32.f32 %v716
  %v1109 = vcvt.s32.f32 %v717
  %v1110 = vcvt.s32.f32 %v718
  %v1111 = vcvt.s32.f32 %v719
  %v1112 = vcvt.s32.f32 %v720
  %v1113 = vcvt.s32.f32 %v721
  %v1114 = vcvt.s32.f32 %v722
  %v1115 = vcvt.s32.f32 %v723
  %v1116 = vcvt.s32.f32 %v724
  %v1117 = vcvt.s32.f32 %v725
  %v1118 = vcvt.s32.f32 %v726
  %v1119 = vcvt.s32.f32 %v727
  %v1120 = vcvt.s32.f32 %v728
  %v1121 = vcvt.s32.f32 %v729
  %v1122 = vcvt.s32.f32 %v730
  %v1123 = vcvt.s32.f32 %v731
  %v1124 = vcvt.s32.f32 %v732
  %v1125 = vcvt.s32.f32 %v733
  %v1126 = vcvt.s32.f32 %v734
  %v1127 = vcvt.s32.f32 %v735
  %v1128 = vcvt.s32.f32 %v736
  %v1129 = vcvt.s32.f32 %v737
  %v1130 = vcvt.s32.f32 %v738
  %v1131 = vcvt.s32.f32 %v739
  %v1132 = vcvt.s32.f32 %v740
  %v1133 = vcvt.s32.f32 %v741
  %v1134 = vcvt.s32.f32 %v742
  %v1135 = vcvt.s32.f32 %v743
  %v1136 = vcvt.s32.f32 %v744
  %v1137 = vcvt.s32.f32 %v745
  %v1138 = vcvt.s32.f32 %v746
  %v1139 = vcvt.s32.f32 %v747
  %v1140 = vcvt.s32.f32 %v748
  %v1141 = vcvt.s32.f32 %v749
  %v1142 = vcvt.s32.f32 %v750
  %v1143 = vcvt.s32.f32 %v751
  %v1144 = vcvt.s32.f32 %v752
  %v1145 = vcvt.s32.f32 %v753
  %v1146 = vcvt.s32.f32 %v754
  %v1147 = vcvt.s32.f32 %v755
  %v1148 = vcvt.s32.f32 %v756
  %v1149 = vcvt.s32.f32 %v757
  %v1150 = vcvt.s32.f32 %v758
  %v1151 = vcvt.s32.f32 %v759
  %v1152 = vcvt.s32.f32 %v760
  %v1153 = vcvt.s32.f32 %v761
  %v1154 = vcvt.s32.f32 %v762
  %v1155 = vcvt.s32.f32 %v763
  %v1156 = vcvt.s32.f32 %v764
  %v1157 = vcvt.s32.f32 %v765
  %v1158 = vcvt.s32.f32 %v766
  %v1159 = vcvt.s32.f32 %v767
  %v1160 = vcvt.s32.f32 %v768
  %v1161 = vcvt.s32.f32 %v769
  %v1162 = vcvt.s32.f32 %v770
  %v1163 = vcvt.s32.f32 %v771
  %v1164 = vcvt.s32.f32 %v772
  %v1165 = vcvt.s32.f32 %v773
  %v1166 = vcvt.s32.f32 %v774
  %v1167 = vcvt.s32.f32 %v775
  %v1168 = vcvt.s32.f32 %v776
  %v1169 = vcvt.s32.f32 %v777
  %v1170 = vcvt.s32.f32 %v778
  %v1171 = vcvt.s32.f32 %v779
  %v1172 = vcvt.s32.f32 %v780
  %v1173 = vcvt.s32.f32 %v781
  %v1174 = vcvt.s32.f32 %v782
  %v1175 = vcvt.s32.f32 %v783
  %v1176 = vcvt.s32.f32 %v784
  %v1177 = vcvt.s32.f32 %v785
  %v1178 = vcvt.s32.f32 %v786
  %v1179 = vcvt.s32.f32 %v787
  %v1180 = vcvt.s32.f32 %v788
  %v1181 = vcvt.s32.f32 %v789
  %v1182 = vcvt.s32.f32 %v790
  %v1183 = vcvt.s32.f32 %v791
  %v1184 = vcvt.s32.f32 %v792
  %v1185 = vcvt.s32.f32 %v793
  %v1186 = vcvt.s32.f32 %v794
  %v1187 = vcvt.s32.f32 %v795
  %v1188 = vcvt.s32.f32 %v796
  %v1189 = vcvt.s32.f32 %v797
  %v1190 = vcvt.s32.f32 %v798
  %v1191 = vcvt.s32.f32 %v799
  %v1192 = vcvt.s32.f32 %v800
  %v1193 = vcvt.s32.f32 %v801
  %v1194 = vcvt.s32.f32 %v802
  %v1195 = vcvt.s32.f32 %v803
  %v1196 = vcvt.s32.f32 %v804
  %v1197 = vcvt.s32.f32 %v805
  %v1198 = vcvt.s32.f32 %v806
  %v1199 = vcvt.s32.f32 %v807
  %v1200 = vcvt.s32.f32 %v808
  %v1201 = vcvt.s32.f32 %v809
  %v1202 = vcvt.s32.f32 %v810
  %v1203 = vcvt.s32.f32 %v811
  %v1204 = vcvt.s32.f32 %v812
  %v1205 = vcvt.s32.f32 %v813
  %v1206 = vcvt.s32.f32 %v814
  %v1207 = vcvt.s32.f32 %v815
  %v1208 = vcvt.s32.f32 %v816
  %v1209 = vcvt.s32.f32 %v817
  %v1210 = vcvt.s32.f32 %v818
  %v1211 = vcvt.s32.f32 %v819
  %v1212 = vcvt.s32.f32 %v820
  %v1213 = vcvt.s32.f32 %v821
  %v1214 = vcvt.s32.f32 %v822
  %v1215 = vcvt.s32.f32 %v823
  %v1216 = vcvt.s32.f32 %v824
  %v1217 = vcvt.s32.f32 %v825
  %v1218 = vcvt.s32.f32 %v826
  %v1219 = vcvt.s32.f32 %v827
  %v1220 = vcvt.s32.f32 %v828
  %v1221 = vcvt.s32.f32 %v829
  %v1222 = vcvt.s32.f32 %v830
  %v1223 = vcvt.s32.f32 %v831
  %v1224 = vcvt.s32.f32 %v832
  %v1225 = vcvt.s32.f32 %v833
  %v1226 = vcvt.s32.f32 %v834
  %v1227 = vcvt.s32.f32 %v835
  %v1228 = vcvt.s32.f32 %v836
  %v1229 = vcvt.s32.f32 %v837
  %v1230 = vpack.c.bf16 %v842, %v838
  %v1231 = vpack.c.bf16 %v843, %v839
  %v1232 = vpack.c.bf16 %v844, %v840
  %v1233 = vpack.c.bf16 %v845, %v841
  %v1234 = vpack.c.bf16 %v850, %v846
  %v1235 = vpack.c.bf16 %v851, %v847
  %v1236 = vpack.c.bf16 %v852, %v848
  %v1237 = vpack.c.bf16 %v853, %v849
  %v1238 = vpack.c.bf16 %v858, %v854
  %v1239 = vpack.c.bf16 %v859, %v855
  %v1240 = vpack.c.bf16 %v860, %v856
  %v1241 = vpack.c.bf16 %v861, %v857
  %v1242 = vpack.c.bf16 %v866, %v862
  %v1243 = vpack.c.bf16 %v867, %v863
  %v1244 = vpack.c.bf16 %v868, %v864
  %v1245 = vpack.c.bf16 %v869, %v865
  %v1246 = vpack.c.bf16 %v874, %v870
  %v1247 = vpack.c.bf16 %v875, %v871
  %v1248 = vpack.c.bf16 %v876, %v872
  %v1249 = vpack.c.bf16 %v877, %v873
  %v1250 = vpack.c.bf16 %v882, %v878
  %v1251 = vpack.c.bf16 %v883, %v879
  %v1252 = vpack.c.bf16 %v884, %v880
  %v1253 = vpack.c.bf16 %v885, %v881
  %v1254 = vpack.c.bf16 %v890, %v886
  %v1255 = vpack.c.bf16 %v891, %v887
  %v1256 = vpack.c.bf16 %v892, %v888
  %v1257 = vpack.c.bf16 %v893, %v889
  %v1258 = vpack.c.bf16 %v898, %v894
  %v1259 = vpack.c.bf16 %v899, %v895
  %v1260 = vpack.c.bf16 %v900, %v896
  %v1261 = vpack.c.bf16 %v901, %v897
  %v1262 = vpack.c.bf16 %v906, %v902
  %v1263 = vpack.c.bf16 %v907, %v903
  %v1264 = vpack.c.bf16 %v908, %v904
  %v1265 = vpack.c.bf16 %v909, %v905
  %v1266 = vpack.c.bf16 %v914, %v910
  %v1267 = vpack.c.bf16 %v915, %v911
  %v1268 = vpack.c.bf16 %v916, %v912
  %v1269 = vpack.c.bf16 %v917, %v913
  %v1270 = vpack.c.bf16 %v922, %v918
  %v1271 = vpack.c.bf16 %v923, %v919
  %v1272 = vpack.c.bf16 %v924, %v920
  %v1273 = vpack.c.bf16 %v925, %v921
  %v1274 = vpack.c.bf16 %v930, %v926
  %v1275 = vpack.c.bf16 %v931, %v927
  %v1276 = vpack.c.bf16 %v932, %v928
  %v1277 = vpack.c.bf16 %v933, %v929
  %v1278 = vpack.c.bf16 %v938, %v934
  %v1279 = vpack.c.bf16 %v939, %v935
  %v1280 = vpack.c.bf16 %v940, %v936
  %v1281 = vpack.c.bf16 %v941, %v937
  %v1282 = vpack.c.bf16 %v946, %v942
  %v1283 = vpack.c.bf16 %v947, %v943
  %v1284 = vpack.c.bf16 %v948, %v944
  %v1285 = vpack.c.bf16 %v949, %v945
  %v1286 = vpack.c.bf16 %v954, %v950
  %v1287 = vpack.c.bf16 %v955, %v951
  %v1288 = vpack.c.bf16 %v956, %v952
  %v1289 = vpack.c.bf16 %v957, %v953
  %v1290 = vpack.c.bf16 %v962, %v958
  %v1291 = vpack.c.bf16 %v963, %v959
  %v1292 = vpack.c.bf16 %v964, %v960
  %v1293 = vpack.c.bf16 %v965, %v961
  %v1294 = vpack.c.bf16 %v970, %v966
  %v1295 = vpack.c.bf16 %v971, %v967
  %v1296 = vpack.c.bf16 %v972, %v968
  %v1297 = vpack.c.bf16 %v973, %v969
  %v1298 = vpack.c.bf16 %v978, %v974
  %v1299 = vpack.c.bf16 %v979, %v975
  %v1300 = vpack.c.bf16 %v980, %v976
  %v1301 = vpack.c.bf16 %v981, %v977
  %v1302 = vpack.c.bf16 %v986, %v982
  %v1303 = vpack.c.bf16 %v987, %v983
  %v1304 = vpack.c.bf16 %v988, %v984
  %v1305 = vpack.c.bf16 %v989, %v985
  %v1306 = vpack.c.bf16 %v994, %v990
  %v1307 = vpack.c.bf16 %v995, %v991
  %v1308 = vpack.c.bf16 %v996, %v992
  %v1309 = vpack.c.bf16 %v997, %v993
  %v1310 = vpack.c.bf16 %v1002, %v998
  %v1311 = vpack.c.bf16 %v1003, %v999
  %v1312 = vpack.c.bf16 %v1004, %v1000
  %v1313 = vpack.c.bf16 %v1005, %v1001
  %v1314 = vpack.c.bf16 %v1010, %v1006
  %v1315 = vpack.c.bf16 %v1011, %v1007
  %v1316 = vpack.c.bf16 %v1012, %v1008
  %v1317 = vpack.c.bf16 %v1013, %v1009
  %v1318 = vpack.c.bf16 %v1018, %v1014
  %v1319 = vpack.c.bf16 %v1019, %v1015
  %v1320 = vpack.c.bf16 %v1020, %v1016
  %v1321 = vpack.c.bf16 %v1021, %v1017
  %v1322 = vpack.c.bf16 %v1026, %v1022
  %v1323 = vpack.c.bf16 %v1027, %v1023
  %v1324 = vpack.c.bf16 %v1028, %v1024
  %v1325 = vpack.c.bf16 %v1029, %v1025
  %v1326 = vpack.c.bf16 %v1034, %v1030
  %v1327 = vpack.c.bf16 %v1035, %v1031
  %v1328 = vpack.c.bf16 %v1036, %v1032
  %v1329 = vpack.c.bf16 %v1037, %v1033
  %v1330 = vpack.c.bf16 %v1042, %v1038
  %v1331 = vpack.c.bf16 %v1043, %v1039
  %v1332 = vpack.c.bf16 %v1044, %v1040
  %v1333 = vpack.c.bf16 %v1045, %v1041
  %v1334 = vpack.c.bf16 %v1050, %v1046
  %v1335 = vpack.c.bf16 %v1051, %v1047
  %v1336 = vpack.c.bf16 %v1052, %v1048
  %v1337 = vpack.c.bf16 %v1053, %v1049
  %v1338 = vpack.c.bf16 %v1058, %v1054
  %v1339 = vpack.c.bf16 %v1059, %v1055
  %v1340 = vpack.c.bf16 %v1060, %v1056
  %v1341 = vpack.c.bf16 %v1061, %v1057
  %v1342 = vpack.c.bf16 %v1066, %v1062
  %v1343 = vpack.c.bf16 %v1067, %v1063
  %v1344 = vpack.c.bf16 %v1068, %v1064
  %v1345 = vpack.c.bf16 %v1069, %v1065
  %v1346 = vpack.c.bf16 %v1074, %v1070
  %v1347 = vpack.c.bf16 %v1075, %v1071
  %v1348 = vpack.c.bf16 %v1076, %v1072
  %v1349 = vpack.c.bf16 %v1077, %v1073
  %v1350 = vpack.c.bf16 %v1082, %v1078
  %v1351 = vpack.c.bf16 %v1083, %v1079
  %v1352 = vpack.c.bf16 %v1084, %v1080
  %v1353 = vpack.c.bf16 %v1085, %v1081
  %v1354 = vpack.c.bf16 %v1090, %v1086
  %v1355 = vpack.c.bf16 %v1091, %v1087
  %v1356 = vpack.c.bf16 %v1092, %v1088
  %v1357 = vpack.c.bf16 %v1093, %v1089
  %v1358 = vpack.c.bf16 %v1098, %v1094
  %v1359 = vpack.c.bf16 %v1099, %v1095
  %v1360 = vpack.c.bf16 %v1100, %v1096
  %v1361 = vpack.c.bf16 %v1101, %v1097
  %v1362 = vpack.c.bf16 %v1106, %v1102
  %v1363 = vpack.c.bf16 %v1107, %v1103
  %v1364 = vpack.c.bf16 %v1108, %v1104
  %v1365 = vpack.c.bf16 %v1109, %v1105
  %v1366 = vpack.c.bf16 %v1114, %v1110
  %v1367 = vpack.c.bf16 %v1115, %v1111
  %v1368 = vpack.c.bf16 %v1116, %v1112
  %v1369 = vpack.c.bf16 %v1117, %v1113
  %v1370 = vpack.c.bf16 %v1122, %v1118
  %v1371 = vpack.c.bf16 %v1123, %v1119
  %v1372 = vpack.c.bf16 %v1124, %v1120
  %v1373 = vpack.c.bf16 %v1125, %v1121
  %v1374 = vpack.c.bf16 %v1130, %v1126
  %v1375 = vpack.c.bf16 %v1131, %v1127
  %v1376 = vpack.c.bf16 %v1132, %v1128
  %v1377 = vpack.c.bf16 %v1133, %v1129
  %v1378 = vpack.c.bf16 %v1138, %v1134
  %v1379 = vpack.c.bf16 %v1139, %v1135
  %v1380 = vpack.c.bf16 %v1140, %v1136
  %v1381 = vpack.c.bf16 %v1141, %v1137
  %v1382 = vpack.c.bf16 %v1146, %v1142
  %v1383 = vpack.c.bf16 %v1147, %v1143
  %v1384 = vpack.c.bf16 %v1148, %v1144
  %v1385 = vpack.c.bf16 %v1149, %v1145
  %v1386 = vpack.c.bf16 %v1154, %v1150
  %v1387 = vpack.c.bf16 %v1155, %v1151
  %v1388 = vpack.c.bf16 %v1156, %v1152
  %v1389 = vpack.c.bf16 %v1157, %v1153
  %v1390 = vpack.c.bf16 %v1162, %v1158
  %v1391 = vpack.c.bf16 %v1163, %v1159
  %v1392 = vpack.c.bf16 %v1164, %v1160
  %v1393 = vpack.c.bf16 %v1165, %v1161
  %v1394 = vpack.c.bf16 %v1170, %v1166
  %v1395 = vpack.c.bf16 %v1171, %v1167
  %v1396 = vpack.c.bf16 %v1172, %v1168
  %v1397 = vpack.c.bf16 %v1173, %v1169
  %v1398 = vpack.c.bf16 %v1178, %v1174
  %v1399 = vpack.c.bf16 %v1179, %v1175
  %v1400 = vpack.c.bf16 %v1180, %v1176
  %v1401 = vpack.c.bf16 %v1181, %v1177
  %v1402 = vpack.c.bf16 %v1186, %v1182
  %v1403 = vpack.c.bf16 %v1187, %v1183
  %v1404 = vpack.c.bf16 %v1188, %v1184
  %v1405 = vpack.c.bf16 %v1189, %v1185
  %v1406 = vpack.c.bf16 %v1194, %v1190
  %v1407 = vpack.c.bf16 %v1195, %v1191
  %v1408 = vpack.c.bf16 %v1196, %v1192
  %v1409 = vpack.c.bf16 %v1197, %v1193
  %v1410 = vpack.c.bf16 %v1202, %v1198
  %v1411 = vpack.c.bf16 %v1203, %v1199
  %v1412 = vpack.c.bf16 %v1204, %v1200
  %v1413 = vpack.c.bf16 %v1205, %v1201
  %v1414 = vpack.c.bf16 %v1210, %v1206
  %v1415 = vpack.c.bf16 %v1211, %v1207
  %v1416 = vpack.c.bf16 %v1212, %v1208
  %v1417 = vpack.c.bf16 %v1213, %v1209
  %v1418 = vpack.c.bf16 %v1218, %v1214
  %v1419 = vpack.c.bf16 %v1219, %v1215
  %v1420 = vpack.c.bf16 %v1220, %v1216
  %v1421 = vpack.c.bf16 %v1221, %v1217
  %v1422 = vpack.c.bf16 %v1226, %v1222
  %v1423 = vpack.c.bf16 %v1227, %v1223
  %v1424 = vpack.c.bf16 %v1228, %v1224
  %v1425 = vpack.c.bf16 %v1229, %v1225
  %v1430 = vunpack.c.l.b16 %v344
  %v1431 = vunpack.c.h.b16 %v344
  %v1432 = vunpack.c.l.b16 %v345
  %v1433 = vunpack.c.h.b16 %v345
  %v1434 = vunpack.c.l.b16 %v346
  %v1435 = vunpack.c.h.b16 %v346
  %v1436 = vunpack.c.l.b16 %v347
  %v1437 = vpack.c.b16 %v1430, %v1430
  %v1438 = vpack.c.b16 %v1431, %v1431
  %v1439 = vpack.c.b16 %v1432, %v1432
  %v1440 = vpack.c.b16 %v1433, %v1433
  %v1441 = vpack.c.b16 %v1434, %v1434
  %v1442 = vpack.c.b16 %v1435, %v1435
  %v1443 = vpack.c.b16 %v1436, %v1436
  %vm1450 = vcmask 130048
  %v1452 = vsel %vm1450, %v1443, 0
  %1454 = vmatpush.bf16.msra.mxu0 %v1258
  %1455 = vmatpush.bf16.msra.mxu0 %v1254
  %1456 = vmatpush.bf16.msra.mxu0 %v1250
  %1457 = vmatpush.bf16.msra.mxu0 %v1246
  %1458 = vmatpush.bf16.msra.mxu0 %v1242
  %1459 = vmatpush.bf16.msra.mxu0 %v1238
  %1460 = vmatpush.bf16.msra.mxu0 %v1234
  %1461 = vmatpush.bf16.msra.mxu0 %v1230
  %1462 = vmatmul.bf16.gmra.mxu0 %v1437
  %v1463 = vpop.f32.mrf.mxu0
  %v1464 = vadd.f32 0.0, %v1463
  %v1465 = vpop.f32.mrf.mxu0
  %1466 = vdwg.mxu0
  %1467 = vmatpush.bf16.msra.mxu0 %v1290
  %1468 = vmatpush.bf16.msra.mxu0 %v1286
  %1469 = vmatpush.bf16.msra.mxu0 %v1282
  %1470 = vmatpush.bf16.msra.mxu0 %v1278
  %1471 = vmatpush.bf16.msra.mxu0 %v1274
  %1472 = vmatpush.bf16.msra.mxu0 %v1270
  %1473 = vmatpush.bf16.msra.mxu0 %v1266
  %1474 = vmatpush.bf16.msra.mxu0 %v1262
  %1475 = vmatmul.bf16.gmra.mxu0 %v1438
  %v1476 = vpop.f32.mrf.mxu0
  %v1477 = vadd.f32 %v1464, %v1476
  %v1478 = vpop.f32.mrf.mxu0
  %1479 = vdwg.mxu0
  %1480 = vmatpush.bf16.msra.mxu0 %v1322
  %1481 = vmatpush.bf16.msra.mxu0 %v1318
  %1482 = vmatpush.bf16.msra.mxu0 %v1314
  %1483 = vmatpush.bf16.msra.mxu0 %v1310
  %1484 = vmatpush.bf16.msra.mxu0 %v1306
  %1485 = vmatpush.bf16.msra.mxu0 %v1302
  %1486 = vmatpush.bf16.msra.mxu0 %v1298
  %1487 = vmatpush.bf16.msra.mxu0 %v1294
  %1488 = vmatmul.bf16.gmra.mxu0 %v1439
  %v1489 = vpop.f32.mrf.mxu0
  %v1490 = vadd.f32 %v1477, %v1489
  %v1491 = vpop.f32.mrf.mxu0
  %1492 = vdwg.mxu0
  %1493 = vmatpush.bf16.msra.mxu0 %v1354
  %1494 = vmatpush.bf16.msra.mxu0 %v1350
  %1495 = vmatpush.bf16.msra.mxu0 %v1346
  %1496 = vmatpush.bf16.msra.mxu0 %v1342
  %1497 = vmatpush.bf16.msra.mxu0 %v1338
  %1498 = vmatpush.bf16.msra.mxu0 %v1334
  %1499 = vmatpush.bf16.msra.mxu0 %v1330
  %1500 = vmatpush.bf16.msra.mxu0 %v1326
  %1501 = vmatmul.bf16.gmra.mxu0 %v1440
  %v1502 = vpop.f32.mrf.mxu0
  %v1503 = vadd.f32 %v1490, %v1502
  %v1504 = vpop.f32.mrf.mxu0
  %1505 = vdwg.mxu0
  %1506 = vmatpush.bf16.msra.mxu0 %v1386
  %1507 = vmatpush.bf16.msra.mxu0 %v1382
  %1508 = vmatpush.bf16.msra.mxu0 %v1378
  %1509 = vmatpush.bf16.msra.mxu0 %v1374
  %1510 = vmatpush.bf16.msra.mxu0 %v1370
  %1511 = vmatpush.bf16.msra.mxu0 %v1366
  %1512 = vmatpush.bf16.msra.mxu0 %v1362
  %1513 = vmatpush.bf16.msra.mxu0 %v1358
  %1514 = vmatmul.bf16.gmra.mxu0 %v1441
  %v1515 = vpop.f32.mrf.mxu0
  %v1516 = vadd.f32 %v1503, %v1515
  %v1517 = vpop.f32.mrf.mxu0
  %1518 = vdwg.mxu0
  %1519 = vmatpush.bf16.msra.mxu0 %v1418
  %1520 = vmatpush.bf16.msra.mxu0 %v1414
  %1521 = vmatpush.bf16.msra.mxu0 %v1410
  %1522 = vmatpush.bf16.msra.mxu0 %v1406
  %1523 = vmatpush.bf16.msra.mxu0 %v1402
  %1524 = vmatpush.bf16.msra.mxu0 %v1398
  %1525 = vmatpush.bf16.msra.mxu0 %v1394
  %1526 = vmatpush.bf16.msra.mxu0 %v1390
  %1527 = vmatmul.bf16.gmra.mxu0 %v1442
  %v1528 = vpop.f32.mrf.mxu0
  %v1529 = vadd.f32 %v1516, %v1528
  %v1530 = vpop.f32.mrf.mxu0
  %1531 = vdwg.mxu0
  %1532 = vmatpush.bf16.msra.mxu0 0
  %1533 = vmatpush.bf16.msra.mxu0 0
  %1534 = vmatpush.bf16.msra.mxu0 0
  %1535 = vmatpush.bf16.msra.mxu0 0
  %1536 = vmatpush.bf16.msra.mxu0 0
  %1537 = vmatpush.bf16.msra.mxu0 0
  %1538 = vmatpush.bf16.msra.mxu0 0
  %1539 = vmatpush.bf16.msra.mxu0 %v1422
  %1540 = vmatmul.bf16.gmra.mxu0 %v1452
  %v1541 = vpop.f32.mrf.mxu0
  %v1542 = vadd.f32 %v1529, %v1541
  %v1543 = vpop.f32.mrf.mxu0
  %1544 = vdwg.mxu0
  %1545 = vmatpush.bf16.msra.mxu0 %v1259
  %1546 = vmatpush.bf16.msra.mxu0 %v1255
  %1547 = vmatpush.bf16.msra.mxu0 %v1251
  %1548 = vmatpush.bf16.msra.mxu0 %v1247
  %1549 = vmatpush.bf16.msra.mxu0 %v1243
  %1550 = vmatpush.bf16.msra.mxu0 %v1239
  %1551 = vmatpush.bf16.msra.mxu0 %v1235
  %1552 = vmatpush.bf16.msra.mxu0 %v1231
  %1553 = vmatmul.bf16.gmra.mxu0 %v1437
  %v1554 = vpop.f32.mrf.mxu0
  %v1555 = vadd.f32 0.0, %v1554
  %v1556 = vpop.f32.mrf.mxu0
  %1557 = vdwg.mxu0
  %1558 = vmatpush.bf16.msra.mxu0 %v1291
  %1559 = vmatpush.bf16.msra.mxu0 %v1287
  %1560 = vmatpush.bf16.msra.mxu0 %v1283
  %1561 = vmatpush.bf16.msra.mxu0 %v1279
  %1562 = vmatpush.bf16.msra.mxu0 %v1275
  %1563 = vmatpush.bf16.msra.mxu0 %v1271
  %1564 = vmatpush.bf16.msra.mxu0 %v1267
  %1565 = vmatpush.bf16.msra.mxu0 %v1263
  %1566 = vmatmul.bf16.gmra.mxu0 %v1438
  %v1567 = vpop.f32.mrf.mxu0
  %v1568 = vadd.f32 %v1555, %v1567
  %v1569 = vpop.f32.mrf.mxu0
  %1570 = vdwg.mxu0
  %1571 = vmatpush.bf16.msra.mxu0 %v1323
  %1572 = vmatpush.bf16.msra.mxu0 %v1319
  %1573 = vmatpush.bf16.msra.mxu0 %v1315
  %1574 = vmatpush.bf16.msra.mxu0 %v1311
  %1575 = vmatpush.bf16.msra.mxu0 %v1307
  %1576 = vmatpush.bf16.msra.mxu0 %v1303
  %1577 = vmatpush.bf16.msra.mxu0 %v1299
  %1578 = vmatpush.bf16.msra.mxu0 %v1295
  %1579 = vmatmul.bf16.gmra.mxu0 %v1439
  %v1580 = vpop.f32.mrf.mxu0
  %v1581 = vadd.f32 %v1568, %v1580
  %v1582 = vpop.f32.mrf.mxu0
  %1583 = vdwg.mxu0
  %1584 = vmatpush.bf16.msra.mxu0 %v1355
  %1585 = vmatpush.bf16.msra.mxu0 %v1351
  %1586 = vmatpush.bf16.msra.mxu0 %v1347
  %1587 = vmatpush.bf16.msra.mxu0 %v1343
  %1588 = vmatpush.bf16.msra.mxu0 %v1339
  %1589 = vmatpush.bf16.msra.mxu0 %v1335
  %1590 = vmatpush.bf16.msra.mxu0 %v1331
  %1591 = vmatpush.bf16.msra.mxu0 %v1327
  %1592 = vmatmul.bf16.gmra.mxu0 %v1440
  %v1593 = vpop.f32.mrf.mxu0
  %v1594 = vadd.f32 %v1581, %v1593
  %v1595 = vpop.f32.mrf.mxu0
  %1596 = vdwg.mxu0
  %1597 = vmatpush.bf16.msra.mxu0 %v1387
  %1598 = vmatpush.bf16.msra.mxu0 %v1383
  %1599 = vmatpush.bf16.msra.mxu0 %v1379
  %1600 = vmatpush.bf16.msra.mxu0 %v1375
  %1601 = vmatpush.bf16.msra.mxu0 %v1371
  %1602 = vmatpush.bf16.msra.mxu0 %v1367
  %1603 = vmatpush.bf16.msra.mxu0 %v1363
  %1604 = vmatpush.bf16.msra.mxu0 %v1359
  %1605 = vmatmul.bf16.gmra.mxu0 %v1441
  %v1606 = vpop.f32.mrf.mxu0
  %v1607 = vadd.f32 %v1594, %v1606
  %v1608 = vpop.f32.mrf.mxu0
  %1609 = vdwg.mxu0
  %1610 = vmatpush.bf16.msra.mxu0 %v1419
  %1611 = vmatpush.bf16.msra.mxu0 %v1415
  %1612 = vmatpush.bf16.msra.mxu0 %v1411
  %1613 = vmatpush.bf16.msra.mxu0 %v1407
  %1614 = vmatpush.bf16.msra.mxu0 %v1403
  %1615 = vmatpush.bf16.msra.mxu0 %v1399
  %1616 = vmatpush.bf16.msra.mxu0 %v1395
  %1617 = vmatpush.bf16.msra.mxu0 %v1391
  %1618 = vmatmul.bf16.gmra.mxu0 %v1442
  %v1619 = vpop.f32.mrf.mxu0
  %v1620 = vadd.f32 %v1607, %v1619
  %v1621 = vpop.f32.mrf.mxu0
  %1622 = vdwg.mxu0
  %1623 = vmatpush.bf16.msra.mxu0 0
  %1624 = vmatpush.bf16.msra.mxu0 0
  %1625 = vmatpush.bf16.msra.mxu0 0
  %1626 = vmatpush.bf16.msra.mxu0 0
  %1627 = vmatpush.bf16.msra.mxu0 0
  %1628 = vmatpush.bf16.msra.mxu0 0
  %1629 = vmatpush.bf16.msra.mxu0 0
  %1630 = vmatpush.bf16.msra.mxu0 %v1423
  %1631 = vmatmul.bf16.gmra.mxu0 %v1452
  %v1632 = vpop.f32.mrf.mxu0
  %v1633 = vadd.f32 %v1620, %v1632
  %v1634 = vpop.f32.mrf.mxu0
  %1635 = vdwg.mxu0
  %1636 = vmatpush.bf16.msra.mxu0 %v1260
  %1637 = vmatpush.bf16.msra.mxu0 %v1256
  %1638 = vmatpush.bf16.msra.mxu0 %v1252
  %1639 = vmatpush.bf16.msra.mxu0 %v1248
  %1640 = vmatpush.bf16.msra.mxu0 %v1244
  %1641 = vmatpush.bf16.msra.mxu0 %v1240
  %1642 = vmatpush.bf16.msra.mxu0 %v1236
  %1643 = vmatpush.bf16.msra.mxu0 %v1232
  %1644 = vmatmul.bf16.gmra.mxu0 %v1437
  %v1645 = vpop.f32.mrf.mxu0
  %v1646 = vadd.f32 0.0, %v1645
  %v1647 = vpop.f32.mrf.mxu0
  %1648 = vdwg.mxu0
  %1649 = vmatpush.bf16.msra.mxu0 %v1292
  %1650 = vmatpush.bf16.msra.mxu0 %v1288
  %1651 = vmatpush.bf16.msra.mxu0 %v1284
  %1652 = vmatpush.bf16.msra.mxu0 %v1280
  %1653 = vmatpush.bf16.msra.mxu0 %v1276
  %1654 = vmatpush.bf16.msra.mxu0 %v1272
  %1655 = vmatpush.bf16.msra.mxu0 %v1268
  %1656 = vmatpush.bf16.msra.mxu0 %v1264
  %1657 = vmatmul.bf16.gmra.mxu0 %v1438
  %v1658 = vpop.f32.mrf.mxu0
  %v1659 = vadd.f32 %v1646, %v1658
  %v1660 = vpop.f32.mrf.mxu0
  %1661 = vdwg.mxu0
  %1662 = vmatpush.bf16.msra.mxu0 %v1324
  %1663 = vmatpush.bf16.msra.mxu0 %v1320
  %1664 = vmatpush.bf16.msra.mxu0 %v1316
  %1665 = vmatpush.bf16.msra.mxu0 %v1312
  %1666 = vmatpush.bf16.msra.mxu0 %v1308
  %1667 = vmatpush.bf16.msra.mxu0 %v1304
  %1668 = vmatpush.bf16.msra.mxu0 %v1300
  %1669 = vmatpush.bf16.msra.mxu0 %v1296
  %1670 = vmatmul.bf16.gmra.mxu0 %v1439
  %v1671 = vpop.f32.mrf.mxu0
  %v1672 = vadd.f32 %v1659, %v1671
  %v1673 = vpop.f32.mrf.mxu0
  %1674 = vdwg.mxu0
  %1675 = vmatpush.bf16.msra.mxu0 %v1356
  %1676 = vmatpush.bf16.msra.mxu0 %v1352
  %1677 = vmatpush.bf16.msra.mxu0 %v1348
  %1678 = vmatpush.bf16.msra.mxu0 %v1344
  %1679 = vmatpush.bf16.msra.mxu0 %v1340
  %1680 = vmatpush.bf16.msra.mxu0 %v1336
  %1681 = vmatpush.bf16.msra.mxu0 %v1332
  %1682 = vmatpush.bf16.msra.mxu0 %v1328
  %1683 = vmatmul.bf16.gmra.mxu0 %v1440
  %v1684 = vpop.f32.mrf.mxu0
  %v1685 = vadd.f32 %v1672, %v1684
  %v1686 = vpop.f32.mrf.mxu0
  %1687 = vdwg.mxu0
  %1688 = vmatpush.bf16.msra.mxu0 %v1388
  %1689 = vmatpush.bf16.msra.mxu0 %v1384
  %1690 = vmatpush.bf16.msra.mxu0 %v1380
  %1691 = vmatpush.bf16.msra.mxu0 %v1376
  %1692 = vmatpush.bf16.msra.mxu0 %v1372
  %1693 = vmatpush.bf16.msra.mxu0 %v1368
  %1694 = vmatpush.bf16.msra.mxu0 %v1364
  %1695 = vmatpush.bf16.msra.mxu0 %v1360
  %1696 = vmatmul.bf16.gmra.mxu0 %v1441
  %v1697 = vpop.f32.mrf.mxu0
  %v1698 = vadd.f32 %v1685, %v1697
  %v1699 = vpop.f32.mrf.mxu0
  %1700 = vdwg.mxu0
  %1701 = vmatpush.bf16.msra.mxu0 %v1420
  %1702 = vmatpush.bf16.msra.mxu0 %v1416
  %1703 = vmatpush.bf16.msra.mxu0 %v1412
  %1704 = vmatpush.bf16.msra.mxu0 %v1408
  %1705 = vmatpush.bf16.msra.mxu0 %v1404
  %1706 = vmatpush.bf16.msra.mxu0 %v1400
  %1707 = vmatpush.bf16.msra.mxu0 %v1396
  %1708 = vmatpush.bf16.msra.mxu0 %v1392
  %1709 = vmatmul.bf16.gmra.mxu0 %v1442
  %v1710 = vpop.f32.mrf.mxu0
  %v1711 = vadd.f32 %v1698, %v1710
  %v1712 = vpop.f32.mrf.mxu0
  %1713 = vdwg.mxu0
  %1714 = vmatpush.bf16.msra.mxu0 0
  %1715 = vmatpush.bf16.msra.mxu0 0
  %1716 = vmatpush.bf16.msra.mxu0 0
  %1717 = vmatpush.bf16.msra.mxu0 0
  %1718 = vmatpush.bf16.msra.mxu0 0
  %1719 = vmatpush.bf16.msra.mxu0 0
  %1720 = vmatpush.bf16.msra.mxu0 0
  %1721 = vmatpush.bf16.msra.mxu0 %v1424
  %1722 = vmatmul.bf16.gmra.mxu0 %v1452
  %v1723 = vpop.f32.mrf.mxu0
  %v1724 = vadd.f32 %v1711, %v1723
  %v1725 = vpop.f32.mrf.mxu0
  %1726 = vdwg.mxu0
  %1727 = vmatpush.bf16.msra.mxu0 %v1261
  %1728 = vmatpush.bf16.msra.mxu0 %v1257
  %1729 = vmatpush.bf16.msra.mxu0 %v1253
  %1730 = vmatpush.bf16.msra.mxu0 %v1249
  %1731 = vmatpush.bf16.msra.mxu0 %v1245
  %1732 = vmatpush.bf16.msra.mxu0 %v1241
  %1733 = vmatpush.bf16.msra.mxu0 %v1237
  %1734 = vmatpush.bf16.msra.mxu0 %v1233
  %1735 = vmatmul.bf16.gmra.mxu0 %v1437
  %v1736 = vpop.f32.mrf.mxu0
  %v1737 = vadd.f32 0.0, %v1736
  %v1738 = vpop.f32.mrf.mxu0
  %1739 = vdwg.mxu0
  %1740 = vmatpush.bf16.msra.mxu0 %v1293
  %1741 = vmatpush.bf16.msra.mxu0 %v1289
  %1742 = vmatpush.bf16.msra.mxu0 %v1285
  %1743 = vmatpush.bf16.msra.mxu0 %v1281
  %1744 = vmatpush.bf16.msra.mxu0 %v1277
  %1745 = vmatpush.bf16.msra.mxu0 %v1273
  %1746 = vmatpush.bf16.msra.mxu0 %v1269
  %1747 = vmatpush.bf16.msra.mxu0 %v1265
  %1748 = vmatmul.bf16.gmra.mxu0 %v1438
  %v1749 = vpop.f32.mrf.mxu0
  %v1750 = vadd.f32 %v1737, %v1749
  %v1751 = vpop.f32.mrf.mxu0
  %1752 = vdwg.mxu0
  %1753 = vmatpush.bf16.msra.mxu0 %v1325
  %1754 = vmatpush.bf16.msra.mxu0 %v1321
  %1755 = vmatpush.bf16.msra.mxu0 %v1317
  %1756 = vmatpush.bf16.msra.mxu0 %v1313
  %1757 = vmatpush.bf16.msra.mxu0 %v1309
  %1758 = vmatpush.bf16.msra.mxu0 %v1305
  %1759 = vmatpush.bf16.msra.mxu0 %v1301
  %1760 = vmatpush.bf16.msra.mxu0 %v1297
  %1761 = vmatmul.bf16.gmra.mxu0 %v1439
  %v1762 = vpop.f32.mrf.mxu0
  %v1763 = vadd.f32 %v1750, %v1762
  %v1764 = vpop.f32.mrf.mxu0
  %1765 = vdwg.mxu0
  %1766 = vmatpush.bf16.msra.mxu0 %v1357
  %1767 = vmatpush.bf16.msra.mxu0 %v1353
  %1768 = vmatpush.bf16.msra.mxu0 %v1349
  %1769 = vmatpush.bf16.msra.mxu0 %v1345
  %1770 = vmatpush.bf16.msra.mxu0 %v1341
  %1771 = vmatpush.bf16.msra.mxu0 %v1337
  %1772 = vmatpush.bf16.msra.mxu0 %v1333
  %1773 = vmatpush.bf16.msra.mxu0 %v1329
  %1774 = vmatmul.bf16.gmra.mxu0 %v1440
  %v1775 = vpop.f32.mrf.mxu0
  %v1776 = vadd.f32 %v1763, %v1775
  %v1777 = vpop.f32.mrf.mxu0
  %1778 = vdwg.mxu0
  %1779 = vmatpush.bf16.msra.mxu0 %v1389
  %1780 = vmatpush.bf16.msra.mxu0 %v1385
  %1781 = vmatpush.bf16.msra.mxu0 %v1381
  %1782 = vmatpush.bf16.msra.mxu0 %v1377
  %1783 = vmatpush.bf16.msra.mxu0 %v1373
  %1784 = vmatpush.bf16.msra.mxu0 %v1369
  %1785 = vmatpush.bf16.msra.mxu0 %v1365
  %1786 = vmatpush.bf16.msra.mxu0 %v1361
  %1787 = vmatmul.bf16.gmra.mxu0 %v1441
  %v1788 = vpop.f32.mrf.mxu0
  %v1789 = vadd.f32 %v1776, %v1788
  %v1790 = vpop.f32.mrf.mxu0
  %1791 = vdwg.mxu0
  %1792 = vmatpush.bf16.msra.mxu0 %v1421
  %1793 = vmatpush.bf16.msra.mxu0 %v1417
  %1794 = vmatpush.bf16.msra.mxu0 %v1413
  %1795 = vmatpush.bf16.msra.mxu0 %v1409
  %1796 = vmatpush.bf16.msra.mxu0 %v1405
  %1797 = vmatpush.bf16.msra.mxu0 %v1401
  %1798 = vmatpush.bf16.msra.mxu0 %v1397
  %1799 = vmatpush.bf16.msra.mxu0 %v1393
  %1800 = vmatmul.bf16.gmra.mxu0 %v1442
  %v1801 = vpop.f32.mrf.mxu0
  %v1802 = vadd.f32 %v1789, %v1801
  %v1803 = vpop.f32.mrf.mxu0
  %1804 = vdwg.mxu0
  %1805 = vmatpush.bf16.msra.mxu0 0
  %1806 = vmatpush.bf16.msra.mxu0 0
  %1807 = vmatpush.bf16.msra.mxu0 0
  %1808 = vmatpush.bf16.msra.mxu0 0
  %1809 = vmatpush.bf16.msra.mxu0 0
  %1810 = vmatpush.bf16.msra.mxu0 0
  %1811 = vmatpush.bf16.msra.mxu0 0
  %1812 = vmatpush.bf16.msra.mxu0 %v1425
  %1813 = vmatmul.bf16.gmra.mxu0 %v1452
  %v1814 = vpop.f32.mrf.mxu0
  %v1815 = vadd.f32 %v1802, %v1814
  %v1816 = vpop.f32.mrf.mxu0
  %1817 = vdwg.mxu0
  %v1818 = vld [vmem:[%s1] sm:$0xf]
  %v1819 = vld [vmem:[%s1 + $0x4] sm:$0xf]
  %v1820 = vrot.slane %v1542, 4
  %v1821 = vadd.f32 %v1542, %v1820
  %v1822 = vrot.slane %v1821, 2
  %v1823 = vadd.f32 %v1821, %v1822
  %v1824 = vrot.slane %v1823, 1
  %v1825 = vadd.f32 %v1823, %v1824
  %v1826 = vrot.slane %v1633, 4
  %v1827 = vadd.f32 %v1633, %v1826
  %v1828 = vrot.slane %v1827, 2
  %v1829 = vadd.f32 %v1827, %v1828
  %v1830 = vrot.slane %v1829, 1
  %v1831 = vadd.f32 %v1829, %v1830
  %v1832 = vrot.slane %v1724, 4
  %v1833 = vadd.f32 %v1724, %v1832
  %v1834 = vrot.slane %v1833, 2
  %v1835 = vadd.f32 %v1833, %v1834
  %v1836 = vrot.slane %v1835, 1
  %v1837 = vadd.f32 %v1835, %v1836
  %v1838 = vrot.slane %v1815, 4
  %v1839 = vadd.f32 %v1815, %v1838
  %v1840 = vrot.slane %v1839, 2
  %v1841 = vadd.f32 %v1839, %v1840
  %v1842 = vrot.slane %v1841, 1
  %v1843 = vadd.f32 %v1841, %v1842
  %v1844 = vmul.f32 %v1825, 0.125
  %v1845 = vmul.f32 %v1831, 0.125
  %v1846 = vmul.f32 %v1837, 0.125
  %v1847 = vmul.f32 %v1843, 0.125
  %v1848 = vmul.f32 %v1542, %v1542
  %v1849 = vmul.f32 %v1633, %v1633
  %v1850 = vmul.f32 %v1724, %v1724
  %v1851 = vmul.f32 %v1815, %v1815
  %v1852 = vrot.slane %v1848, 4
  %v1853 = vadd.f32 %v1848, %v1852
  %v1854 = vrot.slane %v1853, 2
  %v1855 = vadd.f32 %v1853, %v1854
  %v1856 = vrot.slane %v1855, 1
  %v1857 = vadd.f32 %v1855, %v1856
  %v1858 = vrot.slane %v1849, 4
  %v1859 = vadd.f32 %v1849, %v1858
  %v1860 = vrot.slane %v1859, 2
  %v1861 = vadd.f32 %v1859, %v1860
  %v1862 = vrot.slane %v1861, 1
  %v1863 = vadd.f32 %v1861, %v1862
  %v1864 = vrot.slane %v1850, 4
  %v1865 = vadd.f32 %v1850, %v1864
  %v1866 = vrot.slane %v1865, 2
  %v1867 = vadd.f32 %v1865, %v1866
  %v1868 = vrot.slane %v1867, 1
  %v1869 = vadd.f32 %v1867, %v1868
  %v1870 = vrot.slane %v1851, 4
  %v1871 = vadd.f32 %v1851, %v1870
  %v1872 = vrot.slane %v1871, 2
  %v1873 = vadd.f32 %v1871, %v1872
  %v1874 = vrot.slane %v1873, 1
  %v1875 = vadd.f32 %v1873, %v1874
  %v1876 = vmul.f32 %v1857, 0.125
  %v1877 = vmul.f32 %v1863, 0.125
  %v1878 = vmul.f32 %v1869, 0.125
  %v1879 = vmul.f32 %v1875, 0.125
  %v1880 = vmul.f32 %v1844, %v1844
  %v1881 = vmul.f32 %v1845, %v1845
  %v1882 = vmul.f32 %v1846, %v1846
  %v1883 = vmul.f32 %v1847, %v1847
  %v1884 = vsub.f32 %v1876, %v1880
  %v1885 = vsub.f32 %v1877, %v1881
  %v1886 = vsub.f32 %v1878, %v1882
  %v1887 = vsub.f32 %v1879, %v1883
  %v1888 = vmax.f32 %v1884, 0.0
  %v1889 = vmax.f32 %v1885, 0.0
  %v1890 = vmax.f32 %v1886, 0.0
  %v1891 = vmax.f32 %v1887, 0.0
  %v1892 = vadd.f32 %v1888, 1e-05
  %v1893 = vadd.f32 %v1889, 1e-05
  %v1894 = vadd.f32 %v1890, 1e-05
  %v1895 = vadd.f32 %v1891, 1e-05
  %v1896 = vrsqrt.pop %v1892
  %v1897 = vmul.f32 %v1896, %v1892
  %v1898 = vmul.f32 %v1897, %v1896
  %v1899 = vmul.f32 0.5, %v1898
  %v1900 = vsub.f32 1.5, %v1899
  %v1901 = vmul.f32 %v1896, %v1900
  %vm1902 = vweird.f32 %v1892
  %vm1903 = vweird.f32 %v1896
  %vm1904 = vmor %vm1902, %vm1903
  %v1905 = vsel %vm1904, %v1896, %v1901
  %v1906 = vrsqrt.pop %v1893
  %v1907 = vmul.f32 %v1906, %v1893
  %v1908 = vmul.f32 %v1907, %v1906
  %v1909 = vmul.f32 0.5, %v1908
  %v1910 = vsub.f32 1.5, %v1909
  %v1911 = vmul.f32 %v1906, %v1910
  %vm1912 = vweird.f32 %v1893
  %vm1913 = vweird.f32 %v1906
  %vm1914 = vmor %vm1912, %vm1913
  %v1915 = vsel %vm1914, %v1906, %v1911
  %v1916 = vrsqrt.pop %v1894
  %v1917 = vmul.f32 %v1916, %v1894
  %v1918 = vmul.f32 %v1917, %v1916
  %v1919 = vmul.f32 0.5, %v1918
  %v1920 = vsub.f32 1.5, %v1919
  %v1921 = vmul.f32 %v1916, %v1920
  %vm1922 = vweird.f32 %v1894
  %vm1923 = vweird.f32 %v1916
  %vm1924 = vmor %vm1922, %vm1923
  %v1925 = vsel %vm1924, %v1916, %v1921
  %v1926 = vrsqrt.pop %v1895
  %v1927 = vmul.f32 %v1926, %v1895
  %v1928 = vmul.f32 %v1927, %v1926
  %v1929 = vmul.f32 0.5, %v1928
  %v1930 = vsub.f32 1.5, %v1929
  %v1931 = vmul.f32 %v1926, %v1930
  %vm1932 = vweird.f32 %v1895
  %vm1933 = vweird.f32 %v1926
  %vm1934 = vmor %vm1932, %vm1933
  %v1935 = vsel %vm1934, %v1926, %v1931
  %v1940 = vrot.slane %v1915, 7
  %v1941 = vrot.slane %v1925, 6
  %v1942 = vrot.slane %v1935, 5
  %vm1943 = vcmask 1040384
  %v1944 = vsel %vm1943, %v1905, %v1940
  %vm1945 = vcmask 1042434
  %v1946 = vsel %vm1945, %v1941, %v1942
  %vm1947 = vcmask 1041408
  %v1948 = vsel %vm1947, %v1944, %v1946
  %v1950 = vmul.f32 %v1818, %v1948
  %v1952 = vperm.slane %v1950, 0
  %v1953 = vperm.slane %v1950, 1
  %v1954 = vperm.slane %v1950, 2
  %v1955 = vperm.slane %v1950, 3
  %v1960 = vmul.f32 %v1542, %v1952
  %v1961 = vmul.f32 %v1633, %v1953
  %v1962 = vmul.f32 %v1724, %v1954
  %v1963 = vmul.f32 %v1815, %v1955
  %v1964 = vmul.f32 %v1844, %v1952
  %v1965 = vmul.f32 %v1845, %v1953
  %v1966 = vmul.f32 %v1846, %v1954
  %v1967 = vmul.f32 %v1847, %v1955
  %v1972 = vrot.slane %v1965, 7
  %v1973 = vrot.slane %v1966, 6
  %v1974 = vrot.slane %v1967, 5
  %v1975 = vsel %vm1943, %v1964, %v1972
  %v1976 = vsel %vm1945, %v1973, %v1974
  %v1977 = vsel %vm1947, %v1975, %v1976
  %v1979 = vsub.f32 %v1819, %v1977
  %v1981 = vperm.slane %v1979, 0
  %v1982 = vperm.slane %v1979, 1
  %v1983 = vperm.slane %v1979, 2
  %v1984 = vperm.slane %v1979, 3
  %v1989 = vadd.f32 %v1960, %v1981
  %v1990 = vadd.f32 %v1961, %v1982
  %v1991 = vadd.f32 %v1962, %v1983
  %v1992 = vadd.f32 %v1963, %v1984
  %vm1993 = vcmp.gt.f32.partialorder %v1989, 0.0
  %vm1994 = vcmp.gt.f32.partialorder %v1990, 0.0
  %vm1995 = vcmp.gt.f32.partialorder %v1991, 0.0
  %vm1996 = vcmp.gt.f32.partialorder %v1992, 0.0
  %v1997 = vmul.f32 %v1989, 0.01
  %v1998 = vmul.f32 %v1990, 0.01
  %v1999 = vmul.f32 %v1991, 0.01
  %v2000 = vmul.f32 %v1992, 0.01
  %v2001 = vsel %vm1993, %v1989, %v1997
  %v2002 = vsel %vm1994, %v1990, %v1998
  %v2003 = vsel %vm1995, %v1991, %v1999
  %v2004 = vsel %vm1996, %v1992, %v2000
  %v2005 = vpack.c.bf16 %v2001, %v2001
  %v2006 = vpack.c.bf16 %v2002, %v2002
  %v2007 = vpack.c.bf16 %v2003, %v2003
  %v2008 = vpack.c.bf16 %v2004, %v2004
  %v2009 = vld [vmem:[%s3] sm:$0xff]
  %v2010 = vld [vmem:[%s3 + $0x8] sm:$0xff]
  %v2011 = vld [vmem:[%s3 + $0x10] sm:$0xff]
  %v2012 = vld [vmem:[%s3 + $0x18] sm:$0xff]
  %v2013 = vld [vmem:[%s3 + $0x20] sm:$0xff]
  %v2014 = vld [vmem:[%s3 + $0x28] sm:$0xff]
  %v2015 = vld [vmem:[%s3 + $0x30] sm:$0xff]
  %v2016 = vld [vmem:[%s3 + $0x38] sm:$0xff]
  %v2017 = vld [vmem:[%s3 + $0x40] sm:$0xff]
  %v2018 = vld [vmem:[%s3 + $0x48] sm:$0xff]
  %v2019 = vld [vmem:[%s3 + $0x50] sm:$0xff]
  %v2020 = vld [vmem:[%s3 + $0x58] sm:$0xff]
  %v2021 = vld [vmem:[%s3 + $0x60] sm:$0xff]
  %v2022 = vld [vmem:[%s3 + $0x68] sm:$0xff]
  %v2023 = vld [vmem:[%s3 + $0x70] sm:$0xff]
  %v2024 = vld [vmem:[%s3 + $0x78] sm:$0xff]
  %v2025 = vld [vmem:[%s3 + $0x80] sm:$0xff]
  %v2026 = vld [vmem:[%s3 + $0x88] sm:$0xff]
  %v2027 = vld [vmem:[%s3 + $0x90] sm:$0xff]
  %v2028 = vld [vmem:[%s3 + $0x98] sm:$0xff]
  %v2029 = vld [vmem:[%s3 + $0xa0] sm:$0xff]
  %v2030 = vld [vmem:[%s3 + $0xa8] sm:$0xff]
  %v2031 = vld [vmem:[%s3 + $0xb0] sm:$0xff]
  %v2032 = vld [vmem:[%s3 + $0xb8] sm:$0xff]
  %v2033 = vld [vmem:[%s3 + $0xc0] sm:$0xff]
  %v2034 = vld [vmem:[%s3 + $0xc8] sm:$0xff]
  %v2035 = vld [vmem:[%s3 + $0xd0] sm:$0xff]
  %v2036 = vld [vmem:[%s3 + $0xd8] sm:$0xff]
  %v2037 = vld [vmem:[%s3 + $0xe0] sm:$0xff]
  %v2038 = vld [vmem:[%s3 + $0xe8] sm:$0xff]
  %v2039 = vld [vmem:[%s3 + $0xf0] sm:$0xff]
  %v2040 = vld [vmem:[%s3 + $0xf8] sm:$0xff]
  %v2041 = vunpack.c.0.s8 %v2009
  %v2042 = vunpack.c.0.s8 %v2010
  %v2043 = vunpack.c.1.s8 %v2009
  %v2044 = vunpack.c.1.s8 %v2010
  %v2045 = vunpack.c.2.s8 %v2009
  %v2046 = vunpack.c.2.s8 %v2010
  %v2047 = vunpack.c.3.s8 %v2009
  %v2048 = vunpack.c.3.s8 %v2010
  %v2049 = vunpack.c.0.s8 %v2011
  %v2050 = vunpack.c.0.s8 %v2012
  %v2051 = vunpack.c.1.s8 %v2011
  %v2052 = vunpack.c.1.s8 %v2012
  %v2053 = vunpack.c.2.s8 %v2011
  %v2054 = vunpack.c.2.s8 %v2012
  %v2055 = vunpack.c.3.s8 %v2011
  %v2056 = vunpack.c.3.s8 %v2012
  %v2057 = vunpack.c.0.s8 %v2013
  %v2058 = vunpack.c.0.s8 %v2014
  %v2059 = vunpack.c.1.s8 %v2013
  %v2060 = vunpack.c.1.s8 %v2014
  %v2061 = vunpack.c.2.s8 %v2013
  %v2062 = vunpack.c.2.s8 %v2014
  %v2063 = vunpack.c.3.s8 %v2013
  %v2064 = vunpack.c.3.s8 %v2014
  %v2065 = vunpack.c.0.s8 %v2015
  %v2066 = vunpack.c.0.s8 %v2016
  %v2067 = vunpack.c.1.s8 %v2015
  %v2068 = vunpack.c.1.s8 %v2016
  %v2069 = vunpack.c.2.s8 %v2015
  %v2070 = vunpack.c.2.s8 %v2016
  %v2071 = vunpack.c.3.s8 %v2015
  %v2072 = vunpack.c.3.s8 %v2016
  %v2073 = vunpack.c.0.s8 %v2017
  %v2074 = vunpack.c.0.s8 %v2018
  %v2075 = vunpack.c.1.s8 %v2017
  %v2076 = vunpack.c.1.s8 %v2018
  %v2077 = vunpack.c.2.s8 %v2017
  %v2078 = vunpack.c.2.s8 %v2018
  %v2079 = vunpack.c.3.s8 %v2017
  %v2080 = vunpack.c.3.s8 %v2018
  %v2081 = vunpack.c.0.s8 %v2019
  %v2082 = vunpack.c.0.s8 %v2020
  %v2083 = vunpack.c.1.s8 %v2019
  %v2084 = vunpack.c.1.s8 %v2020
  %v2085 = vunpack.c.2.s8 %v2019
  %v2086 = vunpack.c.2.s8 %v2020
  %v2087 = vunpack.c.3.s8 %v2019
  %v2088 = vunpack.c.3.s8 %v2020
  %v2089 = vunpack.c.0.s8 %v2021
  %v2090 = vunpack.c.0.s8 %v2022
  %v2091 = vunpack.c.1.s8 %v2021
  %v2092 = vunpack.c.1.s8 %v2022
  %v2093 = vunpack.c.2.s8 %v2021
  %v2094 = vunpack.c.2.s8 %v2022
  %v2095 = vunpack.c.3.s8 %v2021
  %v2096 = vunpack.c.3.s8 %v2022
  %v2097 = vunpack.c.0.s8 %v2023
  %v2098 = vunpack.c.0.s8 %v2024
  %v2099 = vunpack.c.1.s8 %v2023
  %v2100 = vunpack.c.1.s8 %v2024
  %v2101 = vunpack.c.2.s8 %v2023
  %v2102 = vunpack.c.2.s8 %v2024
  %v2103 = vunpack.c.3.s8 %v2023
  %v2104 = vunpack.c.3.s8 %v2024
  %v2105 = vunpack.c.0.s8 %v2025
  %v2106 = vunpack.c.0.s8 %v2026
  %v2107 = vunpack.c.1.s8 %v2025
  %v2108 = vunpack.c.1.s8 %v2026
  %v2109 = vunpack.c.2.s8 %v2025
  %v2110 = vunpack.c.2.s8 %v2026
  %v2111 = vunpack.c.3.s8 %v2025
  %v2112 = vunpack.c.3.s8 %v2026
  %v2113 = vunpack.c.0.s8 %v2027
  %v2114 = vunpack.c.0.s8 %v2028
  %v2115 = vunpack.c.1.s8 %v2027
  %v2116 = vunpack.c.1.s8 %v2028
  %v2117 = vunpack.c.2.s8 %v2027
  %v2118 = vunpack.c.2.s8 %v2028
  %v2119 = vunpack.c.3.s8 %v2027
  %v2120 = vunpack.c.3.s8 %v2028
  %v2121 = vunpack.c.0.s8 %v2029
  %v2122 = vunpack.c.0.s8 %v2030
  %v2123 = vunpack.c.1.s8 %v2029
  %v2124 = vunpack.c.1.s8 %v2030
  %v2125 = vunpack.c.2.s8 %v2029
  %v2126 = vunpack.c.2.s8 %v2030
  %v2127 = vunpack.c.3.s8 %v2029
  %v2128 = vunpack.c.3.s8 %v2030
  %v2129 = vunpack.c.0.s8 %v2031
  %v2130 = vunpack.c.0.s8 %v2032
  %v2131 = vunpack.c.1.s8 %v2031
  %v2132 = vunpack.c.1.s8 %v2032
  %v2133 = vunpack.c.2.s8 %v2031
  %v2134 = vunpack.c.2.s8 %v2032
  %v2135 = vunpack.c.3.s8 %v2031
  %v2136 = vunpack.c.3.s8 %v2032
  %v2137 = vunpack.c.0.s8 %v2033
  %v2138 = vunpack.c.0.s8 %v2034
  %v2139 = vunpack.c.1.s8 %v2033
  %v2140 = vunpack.c.1.s8 %v2034
  %v2141 = vunpack.c.2.s8 %v2033
  %v2142 = vunpack.c.2.s8 %v2034
  %v2143 = vunpack.c.3.s8 %v2033
  %v2144 = vunpack.c.3.s8 %v2034
  %v2145 = vunpack.c.0.s8 %v2035
  %v2146 = vunpack.c.0.s8 %v2036
  %v2147 = vunpack.c.1.s8 %v2035
  %v2148 = vunpack.c.1.s8 %v2036
  %v2149 = vunpack.c.2.s8 %v2035
  %v2150 = vunpack.c.2.s8 %v2036
  %v2151 = vunpack.c.3.s8 %v2035
  %v2152 = vunpack.c.3.s8 %v2036
  %v2153 = vunpack.c.0.s8 %v2037
  %v2154 = vunpack.c.0.s8 %v2038
  %v2155 = vunpack.c.1.s8 %v2037
  %v2156 = vunpack.c.1.s8 %v2038
  %v2157 = vunpack.c.2.s8 %v2037
  %v2158 = vunpack.c.2.s8 %v2038
  %v2159 = vunpack.c.3.s8 %v2037
  %v2160 = vunpack.c.3.s8 %v2038
  %v2161 = vunpack.c.0.s8 %v2039
  %v2162 = vunpack.c.0.s8 %v2040
  %v2163 = vunpack.c.1.s8 %v2039
  %v2164 = vunpack.c.1.s8 %v2040
  %v2165 = vunpack.c.2.s8 %v2039
  %v2166 = vunpack.c.2.s8 %v2040
  %v2167 = vunpack.c.3.s8 %v2039
  %v2168 = vunpack.c.3.s8 %v2040
  %v2169 = vcvt.s32.f32 %v2041
  %v2170 = vcvt.s32.f32 %v2042
  %v2171 = vcvt.s32.f32 %v2043
  %v2172 = vcvt.s32.f32 %v2044
  %v2173 = vcvt.s32.f32 %v2045
  %v2174 = vcvt.s32.f32 %v2046
  %v2175 = vcvt.s32.f32 %v2047
  %v2176 = vcvt.s32.f32 %v2048
  %v2177 = vcvt.s32.f32 %v2049
  %v2178 = vcvt.s32.f32 %v2050
  %v2179 = vcvt.s32.f32 %v2051
  %v2180 = vcvt.s32.f32 %v2052
  %v2181 = vcvt.s32.f32 %v2053
  %v2182 = vcvt.s32.f32 %v2054
  %v2183 = vcvt.s32.f32 %v2055
  %v2184 = vcvt.s32.f32 %v2056
  %v2185 = vcvt.s32.f32 %v2057
  %v2186 = vcvt.s32.f32 %v2058
  %v2187 = vcvt.s32.f32 %v2059
  %v2188 = vcvt.s32.f32 %v2060
  %v2189 = vcvt.s32.f32 %v2061
  %v2190 = vcvt.s32.f32 %v2062
  %v2191 = vcvt.s32.f32 %v2063
  %v2192 = vcvt.s32.f32 %v2064
  %v2193 = vcvt.s32.f32 %v2065
  %v2194 = vcvt.s32.f32 %v2066
  %v2195 = vcvt.s32.f32 %v2067
  %v2196 = vcvt.s32.f32 %v2068
  %v2197 = vcvt.s32.f32 %v2069
  %v2198 = vcvt.s32.f32 %v2070
  %v2199 = vcvt.s32.f32 %v2071
  %v2200 = vcvt.s32.f32 %v2072
  %v2201 = vcvt.s32.f32 %v2073
  %v2202 = vcvt.s32.f32 %v2074
  %v2203 = vcvt.s32.f32 %v2075
  %v2204 = vcvt.s32.f32 %v2076
  %v2205 = vcvt.s32.f32 %v2077
  %v2206 = vcvt.s32.f32 %v2078
  %v2207 = vcvt.s32.f32 %v2079
  %v2208 = vcvt.s32.f32 %v2080
  %v2209 = vcvt.s32.f32 %v2081
  %v2210 = vcvt.s32.f32 %v2082
  %v2211 = vcvt.s32.f32 %v2083
  %v2212 = vcvt.s32.f32 %v2084
  %v2213 = vcvt.s32.f32 %v2085
  %v2214 = vcvt.s32.f32 %v2086
  %v2215 = vcvt.s32.f32 %v2087
  %v2216 = vcvt.s32.f32 %v2088
  %v2217 = vcvt.s32.f32 %v2089
  %v2218 = vcvt.s32.f32 %v2090
  %v2219 = vcvt.s32.f32 %v2091
  %v2220 = vcvt.s32.f32 %v2092
  %v2221 = vcvt.s32.f32 %v2093
  %v2222 = vcvt.s32.f32 %v2094
  %v2223 = vcvt.s32.f32 %v2095
  %v2224 = vcvt.s32.f32 %v2096
  %v2225 = vcvt.s32.f32 %v2097
  %v2226 = vcvt.s32.f32 %v2098
  %v2227 = vcvt.s32.f32 %v2099
  %v2228 = vcvt.s32.f32 %v2100
  %v2229 = vcvt.s32.f32 %v2101
  %v2230 = vcvt.s32.f32 %v2102
  %v2231 = vcvt.s32.f32 %v2103
  %v2232 = vcvt.s32.f32 %v2104
  %v2233 = vcvt.s32.f32 %v2105
  %v2234 = vcvt.s32.f32 %v2106
  %v2235 = vcvt.s32.f32 %v2107
  %v2236 = vcvt.s32.f32 %v2108
  %v2237 = vcvt.s32.f32 %v2109
  %v2238 = vcvt.s32.f32 %v2110
  %v2239 = vcvt.s32.f32 %v2111
  %v2240 = vcvt.s32.f32 %v2112
  %v2241 = vcvt.s32.f32 %v2113
  %v2242 = vcvt.s32.f32 %v2114
  %v2243 = vcvt.s32.f32 %v2115
  %v2244 = vcvt.s32.f32 %v2116
  %v2245 = vcvt.s32.f32 %v2117
  %v2246 = vcvt.s32.f32 %v2118
  %v2247 = vcvt.s32.f32 %v2119
  %v2248 = vcvt.s32.f32 %v2120
  %v2249 = vcvt.s32.f32 %v2121
  %v2250 = vcvt.s32.f32 %v2122
  %v2251 = vcvt.s32.f32 %v2123
  %v2252 = vcvt.s32.f32 %v2124
  %v2253 = vcvt.s32.f32 %v2125
  %v2254 = vcvt.s32.f32 %v2126
  %v2255 = vcvt.s32.f32 %v2127
  %v2256 = vcvt.s32.f32 %v2128
  %v2257 = vcvt.s32.f32 %v2129
  %v2258 = vcvt.s32.f32 %v2130
  %v2259 = vcvt.s32.f32 %v2131
  %v2260 = vcvt.s32.f32 %v2132
  %v2261 = vcvt.s32.f32 %v2133
  %v2262 = vcvt.s32.f32 %v2134
  %v2263 = vcvt.s32.f32 %v2135
  %v2264 = vcvt.s32.f32 %v2136
  %v2265 = vcvt.s32.f32 %v2137
  %v2266 = vcvt.s32.f32 %v2138
  %v2267 = vcvt.s32.f32 %v2139
  %v2268 = vcvt.s32.f32 %v2140
  %v2269 = vcvt.s32.f32 %v2141
  %v2270 = vcvt.s32.f32 %v2142
  %v2271 = vcvt.s32.f32 %v2143
  %v2272 = vcvt.s32.f32 %v2144
  %v2273 = vcvt.s32.f32 %v2145
  %v2274 = vcvt.s32.f32 %v2146
  %v2275 = vcvt.s32.f32 %v2147
  %v2276 = vcvt.s32.f32 %v2148
  %v2277 = vcvt.s32.f32 %v2149
  %v2278 = vcvt.s32.f32 %v2150
  %v2279 = vcvt.s32.f32 %v2151
  %v2280 = vcvt.s32.f32 %v2152
  %v2281 = vcvt.s32.f32 %v2153
  %v2282 = vcvt.s32.f32 %v2154
  %v2283 = vcvt.s32.f32 %v2155
  %v2284 = vcvt.s32.f32 %v2156
  %v2285 = vcvt.s32.f32 %v2157
  %v2286 = vcvt.s32.f32 %v2158
  %v2287 = vcvt.s32.f32 %v2159
  %v2288 = vcvt.s32.f32 %v2160
  %v2289 = vcvt.s32.f32 %v2161
  %v2290 = vcvt.s32.f32 %v2162
  %v2291 = vcvt.s32.f32 %v2163
  %v2292 = vcvt.s32.f32 %v2164
  %v2293 = vcvt.s32.f32 %v2165
  %v2294 = vcvt.s32.f32 %v2166
  %v2295 = vcvt.s32.f32 %v2167
  %v2296 = vcvt.s32.f32 %v2168
  %v2297 = vpack.c.bf16 %v2171, %v2169
  %v2298 = vpack.c.bf16 %v2172, %v2170
  %v2299 = vpack.c.bf16 %v2175, %v2173
  %v2300 = vpack.c.bf16 %v2176, %v2174
  %v2301 = vpack.c.bf16 %v2179, %v2177
  %v2302 = vpack.c.bf16 %v2180, %v2178
  %v2303 = vpack.c.bf16 %v2183, %v2181
  %v2304 = vpack.c.bf16 %v2184, %v2182
  %v2305 = vpack.c.bf16 %v2187, %v2185
  %v2306 = vpack.c.bf16 %v2188, %v2186
  %v2307 = vpack.c.bf16 %v2191, %v2189
  %v2308 = vpack.c.bf16 %v2192, %v2190
  %v2309 = vpack.c.bf16 %v2195, %v2193
  %v2310 = vpack.c.bf16 %v2196, %v2194
  %v2311 = vpack.c.bf16 %v2199, %v2197
  %v2312 = vpack.c.bf16 %v2200, %v2198
  %v2313 = vpack.c.bf16 %v2203, %v2201
  %v2314 = vpack.c.bf16 %v2204, %v2202
  %v2315 = vpack.c.bf16 %v2207, %v2205
  %v2316 = vpack.c.bf16 %v2208, %v2206
  %v2317 = vpack.c.bf16 %v2211, %v2209
  %v2318 = vpack.c.bf16 %v2212, %v2210
  %v2319 = vpack.c.bf16 %v2215, %v2213
  %v2320 = vpack.c.bf16 %v2216, %v2214
  %v2321 = vpack.c.bf16 %v2219, %v2217
  %v2322 = vpack.c.bf16 %v2220, %v2218
  %v2323 = vpack.c.bf16 %v2223, %v2221
  %v2324 = vpack.c.bf16 %v2224, %v2222
  %v2325 = vpack.c.bf16 %v2227, %v2225
  %v2326 = vpack.c.bf16 %v2228, %v2226
  %v2327 = vpack.c.bf16 %v2231, %v2229
  %v2328 = vpack.c.bf16 %v2232, %v2230
  %v2329 = vpack.c.bf16 %v2235, %v2233
  %v2330 = vpack.c.bf16 %v2236, %v2234
  %v2331 = vpack.c.bf16 %v2239, %v2237
  %v2332 = vpack.c.bf16 %v2240, %v2238
  %v2333 = vpack.c.bf16 %v2243, %v2241
  %v2334 = vpack.c.bf16 %v2244, %v2242
  %v2335 = vpack.c.bf16 %v2247, %v2245
  %v2336 = vpack.c.bf16 %v2248, %v2246
  %v2337 = vpack.c.bf16 %v2251, %v2249
  %v2338 = vpack.c.bf16 %v2252, %v2250
  %v2339 = vpack.c.bf16 %v2255, %v2253
  %v2340 = vpack.c.bf16 %v2256, %v2254
  %v2341 = vpack.c.bf16 %v2259, %v2257
  %v2342 = vpack.c.bf16 %v2260, %v2258
  %v2343 = vpack.c.bf16 %v2263, %v2261
  %v2344 = vpack.c.bf16 %v2264, %v2262
  %v2345 = vpack.c.bf16 %v2267, %v2265
  %v2346 = vpack.c.bf16 %v2268, %v2266
  %v2347 = vpack.c.bf16 %v2271, %v2269
  %v2348 = vpack.c.bf16 %v2272, %v2270
  %v2349 = vpack.c.bf16 %v2275, %v2273
  %v2350 = vpack.c.bf16 %v2276, %v2274
  %v2351 = vpack.c.bf16 %v2279, %v2277
  %v2352 = vpack.c.bf16 %v2280, %v2278
  %v2353 = vpack.c.bf16 %v2283, %v2281
  %v2354 = vpack.c.bf16 %v2284, %v2282
  %v2355 = vpack.c.bf16 %v2287, %v2285
  %v2356 = vpack.c.bf16 %v2288, %v2286
  %v2357 = vpack.c.bf16 %v2291, %v2289
  %v2358 = vpack.c.bf16 %v2292, %v2290
  %v2359 = vpack.c.bf16 %v2295, %v2293
  %v2360 = vpack.c.bf16 %v2296, %v2294
  %2361 = vmatpush.bf16.msra.mxu0 %v2311
  %2362 = vmatpush.bf16.msra.mxu0 %v2309
  %2363 = vmatpush.bf16.msra.mxu0 %v2307
  %2364 = vmatpush.bf16.msra.mxu0 %v2305
  %2365 = vmatpush.bf16.msra.mxu0 %v2303
  %2366 = vmatpush.bf16.msra.mxu0 %v2301
  %2367 = vmatpush.bf16.msra.mxu0 %v2299
  %2368 = vmatpush.bf16.msra.mxu0 %v2297
  %2369 = vmatmul.bf16.gmra.mxu0 %v2005
  %v2370 = vpop.f32.mrf.mxu0
  %v2371 = vadd.f32 0.0, %v2370
  %v2372 = vpop.f32.mrf.mxu0
  %2373 = vdwg.mxu0
  %2374 = vmatpush.bf16.msra.mxu0 %v2327
  %2375 = vmatpush.bf16.msra.mxu0 %v2325
  %2376 = vmatpush.bf16.msra.mxu0 %v2323
  %2377 = vmatpush.bf16.msra.mxu0 %v2321
  %2378 = vmatpush.bf16.msra.mxu0 %v2319
  %2379 = vmatpush.bf16.msra.mxu0 %v2317
  %2380 = vmatpush.bf16.msra.mxu0 %v2315
  %2381 = vmatpush.bf16.msra.mxu0 %v2313
  %2382 = vmatmul.bf16.gmra.mxu0 %v2006
  %v2383 = vpop.f32.mrf.mxu0
  %v2384 = vadd.f32 %v2371, %v2383
  %v2385 = vpop.f32.mrf.mxu0
  %2386 = vdwg.mxu0
  %2387 = vmatpush.bf16.msra.mxu0 %v2343
  %2388 = vmatpush.bf16.msra.mxu0 %v2341
  %2389 = vmatpush.bf16.msra.mxu0 %v2339
  %2390 = vmatpush.bf16.msra.mxu0 %v2337
  %2391 = vmatpush.bf16.msra.mxu0 %v2335
  %2392 = vmatpush.bf16.msra.mxu0 %v2333
  %2393 = vmatpush.bf16.msra.mxu0 %v2331
  %2394 = vmatpush.bf16.msra.mxu0 %v2329
  %2395 = vmatmul.bf16.gmra.mxu0 %v2007
  %v2396 = vpop.f32.mrf.mxu0
  %v2397 = vadd.f32 %v2384, %v2396
  %v2398 = vpop.f32.mrf.mxu0
  %2399 = vdwg.mxu0
  %2400 = vmatpush.bf16.msra.mxu0 %v2359
  %2401 = vmatpush.bf16.msra.mxu0 %v2357
  %2402 = vmatpush.bf16.msra.mxu0 %v2355
  %2403 = vmatpush.bf16.msra.mxu0 %v2353
  %2404 = vmatpush.bf16.msra.mxu0 %v2351
  %2405 = vmatpush.bf16.msra.mxu0 %v2349
  %2406 = vmatpush.bf16.msra.mxu0 %v2347
  %2407 = vmatpush.bf16.msra.mxu0 %v2345
  %2408 = vmatmul.bf16.gmra.mxu0 %v2008
  %v2409 = vpop.f32.mrf.mxu0
  %v2410 = vadd.f32 %v2397, %v2409
  %v2411 = vpop.f32.mrf.mxu0
  %2412 = vdwg.mxu0
  %2413 = vmatpush.bf16.msra.mxu0 %v2312
  %2414 = vmatpush.bf16.msra.mxu0 %v2310
  %2415 = vmatpush.bf16.msra.mxu0 %v2308
  %2416 = vmatpush.bf16.msra.mxu0 %v2306
  %2417 = vmatpush.bf16.msra.mxu0 %v2304
  %2418 = vmatpush.bf16.msra.mxu0 %v2302
  %2419 = vmatpush.bf16.msra.mxu0 %v2300
  %2420 = vmatpush.bf16.msra.mxu0 %v2298
  %2421 = vmatmul.bf16.gmra.mxu0 %v2005
  %v2422 = vpop.f32.mrf.mxu0
  %v2423 = vadd.f32 0.0, %v2422
  %v2424 = vpop.f32.mrf.mxu0
  %2425 = vdwg.mxu0
  %2426 = vmatpush.bf16.msra.mxu0 %v2328
  %2427 = vmatpush.bf16.msra.mxu0 %v2326
  %2428 = vmatpush.bf16.msra.mxu0 %v2324
  %2429 = vmatpush.bf16.msra.mxu0 %v2322
  %2430 = vmatpush.bf16.msra.mxu0 %v2320
  %2431 = vmatpush.bf16.msra.mxu0 %v2318
  %2432 = vmatpush.bf16.msra.mxu0 %v2316
  %2433 = vmatpush.bf16.msra.mxu0 %v2314
  %2434 = vmatmul.bf16.gmra.mxu0 %v2006
  %v2435 = vpop.f32.mrf.mxu0
  %v2436 = vadd.f32 %v2423, %v2435
  %v2437 = vpop.f32.mrf.mxu0
  %2438 = vdwg.mxu0
  %2439 = vmatpush.bf16.msra.mxu0 %v2344
  %2440 = vmatpush.bf16.msra.mxu0 %v2342
  %2441 = vmatpush.bf16.msra.mxu0 %v2340
  %2442 = vmatpush.bf16.msra.mxu0 %v2338
  %2443 = vmatpush.bf16.msra.mxu0 %v2336
  %2444 = vmatpush.bf16.msra.mxu0 %v2334
  %2445 = vmatpush.bf16.msra.mxu0 %v2332
  %2446 = vmatpush.bf16.msra.mxu0 %v2330
  %2447 = vmatmul.bf16.gmra.mxu0 %v2007
  %v2448 = vpop.f32.mrf.mxu0
  %v2449 = vadd.f32 %v2436, %v2448
  %v2450 = vpop.f32.mrf.mxu0
  %2451 = vdwg.mxu0
  %2452 = vmatpush.bf16.msra.mxu0 %v2360
  %2453 = vmatpush.bf16.msra.mxu0 %v2358
  %2454 = vmatpush.bf16.msra.mxu0 %v2356
  %2455 = vmatpush.bf16.msra.mxu0 %v2354
  %2456 = vmatpush.bf16.msra.mxu0 %v2352
  %2457 = vmatpush.bf16.msra.mxu0 %v2350
  %2458 = vmatpush.bf16.msra.mxu0 %v2348
  %2459 = vmatpush.bf16.msra.mxu0 %v2346
  %2460 = vmatmul.bf16.gmra.mxu0 %v2008
  %v2461 = vpop.f32.mrf.mxu0
  %v2462 = vadd.f32 %v2449, %v2461
  %v2463 = vpop.f32.mrf.mxu0
  %2464 = vdwg.mxu0
  %v2465 = vld [vmem:[%s1 + $0x8] sm:$0x3]
  %v2466 = vld [vmem:[%s1 + $0xa] sm:$0x3]
  %v2467 = vrot.slane %v2410, 4
  %v2468 = vadd.f32 %v2410, %v2467
  %v2469 = vrot.slane %v2468, 2
  %v2470 = vadd.f32 %v2468, %v2469
  %v2471 = vrot.slane %v2470, 1
  %v2472 = vadd.f32 %v2470, %v2471
  %v2473 = vrot.slane %v2462, 4
  %v2474 = vadd.f32 %v2462, %v2473
  %v2475 = vrot.slane %v2474, 2
  %v2476 = vadd.f32 %v2474, %v2475
  %v2477 = vrot.slane %v2476, 1
  %v2478 = vadd.f32 %v2476, %v2477
  %v2479 = vmul.f32 %v2472, 0.125
  %v2480 = vmul.f32 %v2478, 0.125
  %v2481 = vmul.f32 %v2410, %v2410
  %v2482 = vmul.f32 %v2462, %v2462
  %v2483 = vrot.slane %v2481, 4
  %v2484 = vadd.f32 %v2481, %v2483
  %v2485 = vrot.slane %v2484, 2
  %v2486 = vadd.f32 %v2484, %v2485
  %v2487 = vrot.slane %v2486, 1
  %v2488 = vadd.f32 %v2486, %v2487
  %v2489 = vrot.slane %v2482, 4
  %v2490 = vadd.f32 %v2482, %v2489
  %v2491 = vrot.slane %v2490, 2
  %v2492 = vadd.f32 %v2490, %v2491
  %v2493 = vrot.slane %v2492, 1
  %v2494 = vadd.f32 %v2492, %v2493
  %v2495 = vmul.f32 %v2488, 0.125
  %v2496 = vmul.f32 %v2494, 0.125
  %v2497 = vmul.f32 %v2479, %v2479
  %v2498 = vmul.f32 %v2480, %v2480
  %v2499 = vsub.f32 %v2495, %v2497
  %v2500 = vsub.f32 %v2496, %v2498
  %v2501 = vmax.f32 %v2499, 0.0
  %v2502 = vmax.f32 %v2500, 0.0
  %v2503 = vadd.f32 %v2501, 1e-05
  %v2504 = vadd.f32 %v2502, 1e-05
  %v2505 = vrsqrt.pop %v2503
  %v2506 = vmul.f32 %v2505, %v2503
  %v2507 = vmul.f32 %v2506, %v2505
  %v2508 = vmul.f32 0.5, %v2507
  %v2509 = vsub.f32 1.5, %v2508
  %v2510 = vmul.f32 %v2505, %v2509
  %vm2511 = vweird.f32 %v2503
  %vm2512 = vweird.f32 %v2505
  %vm2513 = vmor %vm2511, %vm2512
  %v2514 = vsel %vm2513, %v2505, %v2510
  %v2515 = vrsqrt.pop %v2504
  %v2516 = vmul.f32 %v2515, %v2504
  %v2517 = vmul.f32 %v2516, %v2515
  %v2518 = vmul.f32 0.5, %v2517
  %v2519 = vsub.f32 1.5, %v2518
  %v2520 = vmul.f32 %v2515, %v2519
  %vm2521 = vweird.f32 %v2504
  %vm2522 = vweird.f32 %v2515
  %vm2523 = vmor %vm2521, %vm2522
  %v2524 = vsel %vm2523, %v2515, %v2520
  %v2527 = vrot.slane %v2524, 7
  %v2528 = vsel %vm1943, %v2514, %v2527
  %v2530 = vmul.f32 %v2465, %v2528
  %v2532 = vperm.slane %v2530, 0
  %v2533 = vperm.slane %v2530, 1
  %v2536 = vmul.f32 %v2410, %v2532
  %v2537 = vmul.f32 %v2462, %v2533
  %v2538 = vmul.f32 %v2479, %v2532
  %v2539 = vmul.f32 %v2480, %v2533
  %v2542 = vrot.slane %v2539, 7
  %v2543 = vsel %vm1943, %v2538, %v2542
  %v2545 = vsub.f32 %v2466, %v2543
  %v2547 = vperm.slane %v2545, 0
  %v2548 = vperm.slane %v2545, 1
  %v2551 = vadd.f32 %v2536, %v2547
  %v2552 = vadd.f32 %v2537, %v2548
  %vm2553 = vcmp.gt.f32.partialorder %v2551, 0.0
  %vm2554 = vcmp.gt.f32.partialorder %v2552, 0.0
  %v2555 = vmul.f32 %v2551, 0.01
  %v2556 = vmul.f32 %v2552, 0.01
  %v2557 = vsel %vm2553, %v2551, %v2555
  %v2558 = vsel %vm2554, %v2552, %v2556
  %v2559 = vpack.c.bf16 %v2557, %v2557
  %v2560 = vpack.c.bf16 %v2558, %v2558
  %v2561 = vld [vmem:[%s4] sm:$0xff]
  %v2562 = vld [vmem:[%s4 + $0x8] sm:$0xff]
  %v2563 = vld [vmem:[%s4 + $0x10] sm:$0xff]
  %v2564 = vld [vmem:[%s4 + $0x18] sm:$0xff]
  %v2565 = vld [vmem:[%s4 + $0x20] sm:$0xff]
  %v2566 = vld [vmem:[%s4 + $0x28] sm:$0xff]
  %v2567 = vld [vmem:[%s4 + $0x30] sm:$0xff]
  %v2568 = vld [vmem:[%s4 + $0x38] sm:$0xff]
  %v2569 = vld [vmem:[%s4 + $0x40] sm:$0xff]
  %v2570 = vld [vmem:[%s4 + $0x48] sm:$0xff]
  %v2571 = vld [vmem:[%s4 + $0x50] sm:$0xff]
  %v2572 = vld [vmem:[%s4 + $0x58] sm:$0xff]
  %v2573 = vld [vmem:[%s4 + $0x60] sm:$0xff]
  %v2574 = vld [vmem:[%s4 + $0x68] sm:$0xff]
  %v2575 = vld [vmem:[%s4 + $0x70] sm:$0xff]
  %v2576 = vld [vmem:[%s4 + $0x78] sm:$0xff]
  %v2577 = vld [vmem:[%s4 + $0x80] sm:$0xff]
  %v2578 = vld [vmem:[%s4 + $0x88] sm:$0xff]
  %v2579 = vld [vmem:[%s4 + $0x90] sm:$0xff]
  %v2580 = vld [vmem:[%s4 + $0x98] sm:$0xff]
  %v2581 = vld [vmem:[%s4 + $0xa0] sm:$0xff]
  %v2582 = vld [vmem:[%s4 + $0xa8] sm:$0xff]
  %v2583 = vld [vmem:[%s4 + $0xb0] sm:$0xff]
  %v2584 = vld [vmem:[%s4 + $0xb8] sm:$0xff]
  %v2585 = vld [vmem:[%s4 + $0xc0] sm:$0xff]
  %v2586 = vld [vmem:[%s4 + $0xc8] sm:$0xff]
  %v2587 = vld [vmem:[%s4 + $0xd0] sm:$0xff]
  %v2588 = vld [vmem:[%s4 + $0xd8] sm:$0xff]
  %v2589 = vld [vmem:[%s4 + $0xe0] sm:$0xff]
  %v2590 = vld [vmem:[%s4 + $0xe8] sm:$0xff]
  %v2591 = vld [vmem:[%s4 + $0xf0] sm:$0xff]
  %v2592 = vld [vmem:[%s4 + $0xf8] sm:$0xff]
  %v2625 = vunpack.c.l.b16 %v2561
  %v2626 = vunpack.c.h.b16 %v2561
  %v2627 = vunpack.c.l.b16 %v2562
  %v2628 = vunpack.c.h.b16 %v2562
  %v2629 = vunpack.c.l.b16 %v2563
  %v2630 = vunpack.c.h.b16 %v2563
  %v2631 = vunpack.c.l.b16 %v2564
  %v2632 = vunpack.c.h.b16 %v2564
  %v2633 = vunpack.c.l.b16 %v2565
  %v2634 = vunpack.c.h.b16 %v2565
  %v2635 = vunpack.c.l.b16 %v2566
  %v2636 = vunpack.c.h.b16 %v2566
  %v2637 = vunpack.c.l.b16 %v2567
  %v2638 = vunpack.c.h.b16 %v2567
  %v2639 = vunpack.c.l.b16 %v2568
  %v2640 = vunpack.c.h.b16 %v2568
  %v2641 = vunpack.c.l.b16 %v2569
  %v2642 = vunpack.c.h.b16 %v2569
  %v2643 = vunpack.c.l.b16 %v2570
  %v2644 = vunpack.c.h.b16 %v2570
  %v2645 = vunpack.c.l.b16 %v2571
  %v2646 = vunpack.c.h.b16 %v2571
  %v2647 = vunpack.c.l.b16 %v2572
  %v2648 = vunpack.c.h.b16 %v2572
  %v2649 = vunpack.c.l.b16 %v2573
  %v2650 = vunpack.c.h.b16 %v2573
  %v2651 = vunpack.c.l.b16 %v2574
  %v2652 = vunpack.c.h.b16 %v2574
  %v2653 = vunpack.c.l.b16 %v2575
  %v2654 = vunpack.c.h.b16 %v2575
  %v2655 = vunpack.c.l.b16 %v2576
  %v2656 = vunpack.c.h.b16 %v2576
  %v2657 = vunpack.c.l.b16 %v2577
  %v2658 = vunpack.c.h.b16 %v2577
  %v2659 = vunpack.c.l.b16 %v2578
  %v2660 = vunpack.c.h.b16 %v2578
  %v2661 = vunpack.c.l.b16 %v2579
  %v2662 = vunpack.c.h.b16 %v2579
  %v2663 = vunpack.c.l.b16 %v2580
  %v2664 = vunpack.c.h.b16 %v2580
  %v2665 = vunpack.c.l.b16 %v2581
  %v2666 = vunpack.c.h.b16 %v2581
  %v2667 = vunpack.c.l.b16 %v2582
  %v2668 = vunpack.c.h.b16 %v2582
  %v2669 = vunpack.c.l.b16 %v2583
  %v2670 = vunpack.c.h.b16 %v2583
  %v2671 = vunpack.c.l.b16 %v2584
  %v2672 = vunpack.c.h.b16 %v2584
  %v2673 = vunpack.c.l.b16 %v2585
  %v2674 = vunpack.c.h.b16 %v2585
  %v2675 = vunpack.c.l.b16 %v2586
  %v2676 = vunpack.c.h.b16 %v2586
  %v2677 = vunpack.c.l.b16 %v2587
  %v2678 = vunpack.c.h.b16 %v2587
  %v2679 = vunpack.c.l.b16 %v2588
  %v2680 = vunpack.c.h.b16 %v2588
  %v2681 = vunpack.c.l.b16 %v2589
  %v2682 = vunpack.c.h.b16 %v2589
  %v2683 = vunpack.c.l.b16 %v2590
  %v2684 = vunpack.c.h.b16 %v2590
  %v2685 = vunpack.c.l.b16 %v2591
  %v2686 = vunpack.c.h.b16 %v2591
  %v2687 = vunpack.c.l.b16 %v2592
  %v2688 = vunpack.c.h.b16 %v2592
  %v2689 = vpack.c.b16 %v2627, %v2625
  %v2690 = vpack.c.b16 %v2628, %v2626
  %v2691 = vpack.c.b16 %v2631, %v2629
  %v2692 = vpack.c.b16 %v2632, %v2630
  %v2693 = vpack.c.b16 %v2635, %v2633
  %v2694 = vpack.c.b16 %v2636, %v2634
  %v2695 = vpack.c.b16 %v2639, %v2637
  %v2696 = vpack.c.b16 %v2640, %v2638
  %v2697 = vpack.c.b16 %v2643, %v2641
  %v2698 = vpack.c.b16 %v2644, %v2642
  %v2699 = vpack.c.b16 %v2647, %v2645
  %v2700 = vpack.c.b16 %v2648, %v2646
  %v2701 = vpack.c.b16 %v2651, %v2649
  %v2702 = vpack.c.b16 %v2652, %v2650
  %v2703 = vpack.c.b16 %v2655, %v2653
  %v2704 = vpack.c.b16 %v2656, %v2654
  %v2705 = vpack.c.b16 %v2659, %v2657
  %v2706 = vpack.c.b16 %v2660, %v2658
  %v2707 = vpack.c.b16 %v2663, %v2661
  %v2708 = vpack.c.b16 %v2664, %v2662
  %v2709 = vpack.c.b16 %v2667, %v2665
  %v2710 = vpack.c.b16 %v2668, %v2666
  %v2711 = vpack.c.b16 %v2671, %v2669
  %v2712 = vpack.c.b16 %v2672, %v2670
  %v2713 = vpack.c.b16 %v2675, %v2673
  %v2714 = vpack.c.b16 %v2676, %v2674
  %v2715 = vpack.c.b16 %v2679, %v2677
  %v2716 = vpack.c.b16 %v2680, %v2678
  %v2717 = vpack.c.b16 %v2683, %v2681
  %v2718 = vpack.c.b16 %v2684, %v2682
  %v2719 = vpack.c.b16 %v2687, %v2685
  %v2720 = vpack.c.b16 %v2688, %v2686
  %2753 = vmatpush.bf16.msra.mxu0 %v2703
  %2754 = vmatpush.bf16.msra.mxu0 %v2701
  %2755 = vmatpush.bf16.msra.mxu0 %v2699
  %2756 = vmatpush.bf16.msra.mxu0 %v2697
  %2757 = vmatpush.bf16.msra.mxu0 %v2695
  %2758 = vmatpush.bf16.msra.mxu0 %v2693
  %2759 = vmatpush.bf16.msra.mxu0 %v2691
  %2760 = vmatpush.bf16.msra.mxu0 %v2689
  %2761 = vmatmul.bf16.gmra.mxu0 %v2559
  %v2762 = vpop.f32.mrf.mxu0
  %v2763 = vadd.f32 0.0, %v2762
  %v2764 = vpop.f32.mrf.mxu0
  %2765 = vdwg.mxu0
  %2766 = vmatpush.bf16.msra.mxu0 %v2719
  %2767 = vmatpush.bf16.msra.mxu0 %v2717
  %2768 = vmatpush.bf16.msra.mxu0 %v2715
  %2769 = vmatpush.bf16.msra.mxu0 %v2713
  %2770 = vmatpush.bf16.msra.mxu0 %v2711
  %2771 = vmatpush.bf16.msra.mxu0 %v2709
  %2772 = vmatpush.bf16.msra.mxu0 %v2707
  %2773 = vmatpush.bf16.msra.mxu0 %v2705
  %2774 = vmatmul.bf16.gmra.mxu0 %v2560
  %v2775 = vpop.f32.mrf.mxu0
  %v2776 = vadd.f32 %v2763, %v2775
  %v2777 = vpop.f32.mrf.mxu0
  %2778 = vdwg.mxu0
  %2779 = vmatpush.bf16.msra.mxu0 %v2704
  %2780 = vmatpush.bf16.msra.mxu0 %v2702
  %2781 = vmatpush.bf16.msra.mxu0 %v2700
  %2782 = vmatpush.bf16.msra.mxu0 %v2698
  %2783 = vmatpush.bf16.msra.mxu0 %v2696
  %2784 = vmatpush.bf16.msra.mxu0 %v2694
  %2785 = vmatpush.bf16.msra.mxu0 %v2692
  %2786 = vmatpush.bf16.msra.mxu0 %v2690
  %2787 = vmatmul.bf16.gmra.mxu0 %v2559
  %v2788 = vpop.f32.mrf.mxu0
  %v2789 = vadd.f32 0.0, %v2788
  %v2790 = vpop.f32.mrf.mxu0
  %2791 = vdwg.mxu0
  %2792 = vmatpush.bf16.msra.mxu0 %v2720
  %2793 = vmatpush.bf16.msra.mxu0 %v2718
  %2794 = vmatpush.bf16.msra.mxu0 %v2716
  %2795 = vmatpush.bf16.msra.mxu0 %v2714
  %2796 = vmatpush.bf16.msra.mxu0 %v2712
  %2797 = vmatpush.bf16.msra.mxu0 %v2710
  %2798 = vmatpush.bf16.msra.mxu0 %v2708
  %2799 = vmatpush.bf16.msra.mxu0 %v2706
  %2800 = vmatmul.bf16.gmra.mxu0 %v2560
  %v2801 = vpop.f32.mrf.mxu0
  %v2802 = vadd.f32 %v2789, %v2801
  %v2803 = vpop.f32.mrf.mxu0
  %2804 = vdwg.mxu0
  %v2805 = vld [vmem:[%s1 + $0xc] sm:$0x3]
  %v2806 = vld [vmem:[%s1 + $0xe] sm:$0x3]
  %v2807 = vrot.slane %v2776, 4
  %v2808 = vadd.f32 %v2776, %v2807
  %v2809 = vrot.slane %v2808, 2
  %v2810 = vadd.f32 %v2808, %v2809
  %v2811 = vrot.slane %v2810, 1
  %v2812 = vadd.f32 %v2810, %v2811
  %v2813 = vrot.slane %v2802, 4
  %v2814 = vadd.f32 %v2802, %v2813
  %v2815 = vrot.slane %v2814, 2
  %v2816 = vadd.f32 %v2814, %v2815
  %v2817 = vrot.slane %v2816, 1
  %v2818 = vadd.f32 %v2816, %v2817
  %v2819 = vmul.f32 %v2812, 0.125
  %v2820 = vmul.f32 %v2818, 0.125
  %v2821 = vmul.f32 %v2776, %v2776
  %v2822 = vmul.f32 %v2802, %v2802
  %v2823 = vrot.slane %v2821, 4
  %v2824 = vadd.f32 %v2821, %v2823
  %v2825 = vrot.slane %v2824, 2
  %v2826 = vadd.f32 %v2824, %v2825
  %v2827 = vrot.slane %v2826, 1
  %v2828 = vadd.f32 %v2826, %v2827
  %v2829 = vrot.slane %v2822, 4
  %v2830 = vadd.f32 %v2822, %v2829
  %v2831 = vrot.slane %v2830, 2
  %v2832 = vadd.f32 %v2830, %v2831
  %v2833 = vrot.slane %v2832, 1
  %v2834 = vadd.f32 %v2832, %v2833
  %v2835 = vmul.f32 %v2828, 0.125
  %v2836 = vmul.f32 %v2834, 0.125
  %v2837 = vmul.f32 %v2819, %v2819
  %v2838 = vmul.f32 %v2820, %v2820
  %v2839 = vsub.f32 %v2835, %v2837
  %v2840 = vsub.f32 %v2836, %v2838
  %v2841 = vmax.f32 %v2839, 0.0
  %v2842 = vmax.f32 %v2840, 0.0
  %v2843 = vadd.f32 %v2841, 1e-05
  %v2844 = vadd.f32 %v2842, 1e-05
  %v2845 = vrsqrt.pop %v2843
  %v2846 = vmul.f32 %v2845, %v2843
  %v2847 = vmul.f32 %v2846, %v2845
  %v2848 = vmul.f32 0.5, %v2847
  %v2849 = vsub.f32 1.5, %v2848
  %v2850 = vmul.f32 %v2845, %v2849
  %vm2851 = vweird.f32 %v2843
  %vm2852 = vweird.f32 %v2845
  %vm2853 = vmor %vm2851, %vm2852
  %v2854 = vsel %vm2853, %v2845, %v2850
  %v2855 = vrsqrt.pop %v2844
  %v2856 = vmul.f32 %v2855, %v2844
  %v2857 = vmul.f32 %v2856, %v2855
  %v2858 = vmul.f32 0.5, %v2857
  %v2859 = vsub.f32 1.5, %v2858
  %v2860 = vmul.f32 %v2855, %v2859
  %vm2861 = vweird.f32 %v2844
  %vm2862 = vweird.f32 %v2855
  %vm2863 = vmor %vm2861, %vm2862
  %v2864 = vsel %vm2863, %v2855, %v2860
  %v2867 = vrot.slane %v2864, 7
  %v2868 = vsel %vm1943, %v2854, %v2867
  %v2870 = vmul.f32 %v2805, %v2868
  %v2872 = vperm.slane %v2870, 0
  %v2873 = vperm.slane %v2870, 1
  %v2876 = vmul.f32 %v2776, %v2872
  %v2877 = vmul.f32 %v2802, %v2873
  %v2878 = vmul.f32 %v2819, %v2872
  %v2879 = vmul.f32 %v2820, %v2873
  %v2882 = vrot.slane %v2879, 7
  %v2883 = vsel %vm1943, %v2878, %v2882
  %v2885 = vsub.f32 %v2806, %v2883
  %v2887 = vperm.slane %v2885, 0
  %v2888 = vperm.slane %v2885, 1
  %v2891 = vadd.f32 %v2876, %v2887
  %v2892 = vadd.f32 %v2877, %v2888
  %vm2893 = vcmp.gt.f32.partialorder %v2891, 0.0
  %vm2894 = vcmp.gt.f32.partialorder %v2892, 0.0
  %v2895 = vmul.f32 %v2891, 0.01
  %v2896 = vmul.f32 %v2892, 0.01
  %v2897 = vsel %vm2893, %v2891, %v2895
  %v2898 = vsel %vm2894, %v2892, %v2896
  %s2899 = smul.u32 2, 32
  %s2900 = smul.u32 %s2899, 4
  %s2901 = sshll.u32 %s2900, 4
  %2902 = dma.done [#allocation4], %s2901
  %s2903 = smul.u32 2, 64
  %s2904 = smul.u32 %s2903, 7
  %s2905 = sshll.u32 %s2904, 4
  %2906 = dma.done %s103, %s2905
  %v2907 = vpack.c.bf16 %v2897, %v2897
  %v2908 = vpack.c.bf16 %v2898, %v2898
  %v2909 = vld [vmem:[#allocation2] sm:$0xff]
  %v2910 = vld [vmem:[#allocation2 + $0x8] sm:$0xff]
  %v2911 = vld [vmem:[#allocation2 + $0x10] sm:$0xff]
  %v2912 = vld [vmem:[#allocation2 + $0x18] sm:$0xff]
  %v2913 = vld [vmem:[#allocation2 + $0x20] sm:$0xff]
  %v2914 = vld [vmem:[#allocation2 + $0x28] sm:$0xff]
  %v2915 = vld [vmem:[#allocation2 + $0x30] sm:$0xff]
  %v2916 = vld [vmem:[#allocation2 + $0x38] sm:$0xff]
  %v2917 = vld [vmem:[#allocation2 + $0x40] sm:$0xff]
  %v2918 = vld [vmem:[#allocation2 + $0x48] sm:$0xff]
  %v2919 = vld [vmem:[#allocation2 + $0x50] sm:$0xff]
  %v2920 = vld [vmem:[#allocation2 + $0x58] sm:$0xff]
  %v2921 = vld [vmem:[#allocation2 + $0x60] sm:$0xff]
  %v2922 = vld [vmem:[#allocation2 + $0x68] sm:$0xff]
  %v2923 = vld [vmem:[#allocation2 + $0x70] sm:$0xff]
  %v2924 = vld [vmem:[#allocation2 + $0x78] sm:$0xff]
  %v2925 = vld [vmem:[#allocation2 + $0x80] sm:$0xff]
  %v2926 = vld [vmem:[#allocation2 + $0x88] sm:$0xff]
  %v2927 = vld [vmem:[#allocation2 + $0x90] sm:$0xff]
  %v2928 = vld [vmem:[#allocation2 + $0x98] sm:$0xff]
  %v2929 = vld [vmem:[#allocation2 + $0xa0] sm:$0xff]
  %v2930 = vld [vmem:[#allocation2 + $0xa8] sm:$0xff]
  %v2931 = vld [vmem:[#allocation2 + $0xb0] sm:$0xff]
  %v2932 = vld [vmem:[#allocation2 + $0xb8] sm:$0xff]
  %v2933 = vld [vmem:[#allocation2 + $0xc0] sm:$0xff]
  %v2934 = vld [vmem:[#allocation2 + $0xc8] sm:$0xff]
  %v2935 = vld [vmem:[#allocation2 + $0xd0] sm:$0xff]
  %v2936 = vld [vmem:[#allocation2 + $0xd8] sm:$0xff]
  %v2937 = vld [vmem:[#allocation2 + $0xe0] sm:$0xff]
  %v2938 = vld [vmem:[#allocation2 + $0xe8] sm:$0xff]
  %v2939 = vld [vmem:[#allocation2 + $0xf0] sm:$0xff]
  %v2940 = vld [vmem:[#allocation2 + $0xf8] sm:$0xff]
  %v2941 = vunpack.c.0.s8 %v2909
  %v2942 = vunpack.c.0.s8 %v2910
  %v2943 = vunpack.c.0.s8 %v2911
  %v2944 = vunpack.c.0.s8 %v2912
  %v2945 = vunpack.c.1.s8 %v2909
  %v2946 = vunpack.c.1.s8 %v2910
  %v2947 = vunpack.c.1.s8 %v2911
  %v2948 = vunpack.c.1.s8 %v2912
  %v2949 = vunpack.c.2.s8 %v2909
  %v2950 = vunpack.c.2.s8 %v2910
  %v2951 = vunpack.c.2.s8 %v2911
  %v2952 = vunpack.c.2.s8 %v2912
  %v2953 = vunpack.c.3.s8 %v2909
  %v2954 = vunpack.c.3.s8 %v2910
  %v2955 = vunpack.c.3.s8 %v2911
  %v2956 = vunpack.c.3.s8 %v2912
  %v2957 = vunpack.c.0.s8 %v2913
  %v2958 = vunpack.c.0.s8 %v2914
  %v2959 = vunpack.c.0.s8 %v2915
  %v2960 = vunpack.c.0.s8 %v2916
  %v2961 = vunpack.c.1.s8 %v2913
  %v2962 = vunpack.c.1.s8 %v2914
  %v2963 = vunpack.c.1.s8 %v2915
  %v2964 = vunpack.c.1.s8 %v2916
  %v2965 = vunpack.c.2.s8 %v2913
  %v2966 = vunpack.c.2.s8 %v2914
  %v2967 = vunpack.c.2.s8 %v2915
  %v2968 = vunpack.c.2.s8 %v2916
  %v2969 = vunpack.c.3.s8 %v2913
  %v2970 = vunpack.c.3.s8 %v2914
  %v2971 = vunpack.c.3.s8 %v2915
  %v2972 = vunpack.c.3.s8 %v2916
  %v2973 = vunpack.c.0.s8 %v2917
  %v2974 = vunpack.c.0.s8 %v2918
  %v2975 = vunpack.c.0.s8 %v2919
  %v2976 = vunpack.c.0.s8 %v2920
  %v2977 = vunpack.c.1.s8 %v2917
  %v2978 = vunpack.c.1.s8 %v2918
  %v2979 = vunpack.c.1.s8 %v2919
  %v2980 = vunpack.c.1.s8 %v2920
  %v2981 = vunpack.c.2.s8 %v2917
  %v2982 = vunpack.c.2.s8 %v2918
  %v2983 = vunpack.c.2.s8 %v2919
  %v2984 = vunpack.c.2.s8 %v2920
  %v2985 = vunpack.c.3.s8 %v2917
  %v2986 = vunpack.c.3.s8 %v2918
  %v2987 = vunpack.c.3.s8 %v2919
  %v2988 = vunpack.c.3.s8 %v2920
  %v2989 = vunpack.c.0.s8 %v2921
  %v2990 = vunpack.c.0.s8 %v2922
  %v2991 = vunpack.c.0.s8 %v2923
  %v2992 = vunpack.c.0.s8 %v2924
  %v2993 = vunpack.c.1.s8 %v2921
  %v2994 = vunpack.c.1.s8 %v2922
  %v2995 = vunpack.c.1.s8 %v2923
  %v2996 = vunpack.c.1.s8 %v2924
  %v2997 = vunpack.c.2.s8 %v2921
  %v2998 = vunpack.c.2.s8 %v2922
  %v2999 = vunpack.c.2.s8 %v2923
  %v3000 = vunpack.c.2.s8 %v2924
  %v3001 = vunpack.c.3.s8 %v2921
  %v3002 = vunpack.c.3.s8 %v2922
  %v3003 = vunpack.c.3.s8 %v2923
  %v3004 = vunpack.c.3.s8 %v2924
  %v3005 = vunpack.c.0.s8 %v2925
  %v3006 = vunpack.c.0.s8 %v2926
  %v3007 = vunpack.c.0.s8 %v2927
  %v3008 = vunpack.c.0.s8 %v2928
  %v3009 = vunpack.c.1.s8 %v2925
  %v3010 = vunpack.c.1.s8 %v2926
  %v3011 = vunpack.c.1.s8 %v2927
  %v3012 = vunpack.c.1.s8 %v2928
  %v3013 = vunpack.c.2.s8 %v2925
  %v3014 = vunpack.c.2.s8 %v2926
  %v3015 = vunpack.c.2.s8 %v2927
  %v3016 = vunpack.c.2.s8 %v2928
  %v3017 = vunpack.c.3.s8 %v2925
  %v3018 = vunpack.c.3.s8 %v2926
  %v3019 = vunpack.c.3.s8 %v2927
  %v3020 = vunpack.c.3.s8 %v2928
  %v3021 = vunpack.c.0.s8 %v2929
  %v3022 = vunpack.c.0.s8 %v2930
  %v3023 = vunpack.c.0.s8 %v2931
  %v3024 = vunpack.c.0.s8 %v2932
  %v3025 = vunpack.c.1.s8 %v2929
  %v3026 = vunpack.c.1.s8 %v2930
  %v3027 = vunpack.c.1.s8 %v2931
  %v3028 = vunpack.c.1.s8 %v2932
  %v3029 = vunpack.c.2.s8 %v2929
  %v3030 = vunpack.c.2.s8 %v2930
  %v3031 = vunpack.c.2.s8 %v2931
  %v3032 = vunpack.c.2.s8 %v2932
  %v3033 = vunpack.c.3.s8 %v2929
  %v3034 = vunpack.c.3.s8 %v2930
  %v3035 = vunpack.c.3.s8 %v2931
  %v3036 = vunpack.c.3.s8 %v2932
  %v3037 = vunpack.c.0.s8 %v2933
  %v3038 = vunpack.c.0.s8 %v2934
  %v3039 = vunpack.c.0.s8 %v2935
  %v3040 = vunpack.c.0.s8 %v2936
  %v3041 = vunpack.c.1.s8 %v2933
  %v3042 = vunpack.c.1.s8 %v2934
  %v3043 = vunpack.c.1.s8 %v2935
  %v3044 = vunpack.c.1.s8 %v2936
  %v3045 = vunpack.c.2.s8 %v2933
  %v3046 = vunpack.c.2.s8 %v2934
  %v3047 = vunpack.c.2.s8 %v2935
  %v3048 = vunpack.c.2.s8 %v2936
  %v3049 = vunpack.c.3.s8 %v2933
  %v3050 = vunpack.c.3.s8 %v2934
  %v3051 = vunpack.c.3.s8 %v2935
  %v3052 = vunpack.c.3.s8 %v2936
  %v3053 = vunpack.c.0.s8 %v2937
  %v3054 = vunpack.c.0.s8 %v2938
  %v3055 = vunpack.c.0.s8 %v2939
  %v3056 = vunpack.c.0.s8 %v2940
  %v3057 = vunpack.c.1.s8 %v2937
  %v3058 = vunpack.c.1.s8 %v2938
  %v3059 = vunpack.c.1.s8 %v2939
  %v3060 = vunpack.c.1.s8 %v2940
  %v3061 = vunpack.c.2.s8 %v2937
  %v3062 = vunpack.c.2.s8 %v2938
  %v3063 = vunpack.c.2.s8 %v2939
  %v3064 = vunpack.c.2.s8 %v2940
  %v3065 = vunpack.c.3.s8 %v2937
  %v3066 = vunpack.c.3.s8 %v2938
  %v3067 = vunpack.c.3.s8 %v2939
  %v3068 = vunpack.c.3.s8 %v2940
  %v3069 = vcvt.s32.f32 %v2941
  %v3070 = vcvt.s32.f32 %v2942
  %v3071 = vcvt.s32.f32 %v2943
  %v3072 = vcvt.s32.f32 %v2944
  %v3073 = vcvt.s32.f32 %v2945
  %v3074 = vcvt.s32.f32 %v2946
  %v3075 = vcvt.s32.f32 %v2947
  %v3076 = vcvt.s32.f32 %v2948
  %v3077 = vcvt.s32.f32 %v2949
  %v3078 = vcvt.s32.f32 %v2950
  %v3079 = vcvt.s32.f32 %v2951
  %v3080 = vcvt.s32.f32 %v2952
  %v3081 = vcvt.s32.f32 %v2953
  %v3082 = vcvt.s32.f32 %v2954
  %v3083 = vcvt.s32.f32 %v2955
  %v3084 = vcvt.s32.f32 %v2956
  %v3085 = vcvt.s32.f32 %v2957
  %v3086 = vcvt.s32.f32 %v2958
  %v3087 = vcvt.s32.f32 %v2959
  %v3088 = vcvt.s32.f32 %v2960
  %v3089 = vcvt.s32.f32 %v2961
  %v3090 = vcvt.s32.f32 %v2962
  %v3091 = vcvt.s32.f32 %v2963
  %v3092 = vcvt.s32.f32 %v2964
  %v3093 = vcvt.s32.f32 %v2965
  %v3094 = vcvt.s32.f32 %v2966
  %v3095 = vcvt.s32.f32 %v2967
  %v3096 = vcvt.s32.f32 %v2968
  %v3097 = vcvt.s32.f32 %v2969
  %v3098 = vcvt.s32.f32 %v2970
  %v3099 = vcvt.s32.f32 %v2971
  %v3100 = vcvt.s32.f32 %v2972
  %v3101 = vcvt.s32.f32 %v2973
  %v3102 = vcvt.s32.f32 %v2974
  %v3103 = vcvt.s32.f32 %v2975
  %v3104 = vcvt.s32.f32 %v2976
  %v3105 = vcvt.s32.f32 %v2977
  %v3106 = vcvt.s32.f32 %v2978
  %v3107 = vcvt.s32.f32 %v2979
  %v3108 = vcvt.s32.f32 %v2980
  %v3109 = vcvt.s32.f32 %v2981
  %v3110 = vcvt.s32.f32 %v2982
  %v3111 = vcvt.s32.f32 %v2983
  %v3112 = vcvt.s32.f32 %v2984
  %v3113 = vcvt.s32.f32 %v2985
  %v3114 = vcvt.s32.f32 %v2986
  %v3115 = vcvt.s32.f32 %v2987
  %v3116 = vcvt.s32.f32 %v2988
  %v3117 = vcvt.s32.f32 %v2989
  %v3118 = vcvt.s32.f32 %v2990
  %v3119 = vcvt.s32.f32 %v2991
  %v3120 = vcvt.s32.f32 %v2992
  %v3121 = vcvt.s32.f32 %v2993
  %v3122 = vcvt.s32.f32 %v2994
  %v3123 = vcvt.s32.f32 %v2995
  %v3124 = vcvt.s32.f32 %v2996
  %v3125 = vcvt.s32.f32 %v2997
  %v3126 = vcvt.s32.f32 %v2998
  %v3127 = vcvt.s32.f32 %v2999
  %v3128 = vcvt.s32.f32 %v3000
  %v3129 = vcvt.s32.f32 %v3001
  %v3130 = vcvt.s32.f32 %v3002
  %v3131 = vcvt.s32.f32 %v3003
  %v3132 = vcvt.s32.f32 %v3004
  %v3133 = vcvt.s32.f32 %v3005
  %v3134 = vcvt.s32.f32 %v3006
  %v3135 = vcvt.s32.f32 %v3007
  %v3136 = vcvt.s32.f32 %v3008
  %v3137 = vcvt.s32.f32 %v3009
  %v3138 = vcvt.s32.f32 %v3010
  %v3139 = vcvt.s32.f32 %v3011
  %v3140 = vcvt.s32.f32 %v3012
  %v3141 = vcvt.s32.f32 %v3013
  %v3142 = vcvt.s32.f32 %v3014
  %v3143 = vcvt.s32.f32 %v3015
  %v3144 = vcvt.s32.f32 %v3016
  %v3145 = vcvt.s32.f32 %v3017
  %v3146 = vcvt.s32.f32 %v3018
  %v3147 = vcvt.s32.f32 %v3019
  %v3148 = vcvt.s32.f32 %v3020
  %v3149 = vcvt.s32.f32 %v3021
  %v3150 = vcvt.s32.f32 %v3022
  %v3151 = vcvt.s32.f32 %v3023
  %v3152 = vcvt.s32.f32 %v3024
  %v3153 = vcvt.s32.f32 %v3025
  %v3154 = vcvt.s32.f32 %v3026
  %v3155 = vcvt.s32.f32 %v3027
  %v3156 = vcvt.s32.f32 %v3028
  %v3157 = vcvt.s32.f32 %v3029
  %v3158 = vcvt.s32.f32 %v3030
  %v3159 = vcvt.s32.f32 %v3031
  %v3160 = vcvt.s32.f32 %v3032
  %v3161 = vcvt.s32.f32 %v3033
  %v3162 = vcvt.s32.f32 %v3034
  %v3163 = vcvt.s32.f32 %v3035
  %v3164 = vcvt.s32.f32 %v3036
  %v3165 = vcvt.s32.f32 %v3037
  %v3166 = vcvt.s32.f32 %v3038
  %v3167 = vcvt.s32.f32 %v3039
  %v3168 = vcvt.s32.f32 %v3040
  %v3169 = vcvt.s32.f32 %v3041
  %v3170 = vcvt.s32.f32 %v3042
  %v3171 = vcvt.s32.f32 %v3043
  %v3172 = vcvt.s32.f32 %v3044
  %v3173 = vcvt.s32.f32 %v3045
  %v3174 = vcvt.s32.f32 %v3046
  %v3175 = vcvt.s32.f32 %v3047
  %v3176 = vcvt.s32.f32 %v3048
  %v3177 = vcvt.s32.f32 %v3049
  %v3178 = vcvt.s32.f32 %v3050
  %v3179 = vcvt.s32.f32 %v3051
  %v3180 = vcvt.s32.f32 %v3052
  %v3181 = vcvt.s32.f32 %v3053
  %v3182 = vcvt.s32.f32 %v3054
  %v3183 = vcvt.s32.f32 %v3055
  %v3184 = vcvt.s32.f32 %v3056
  %v3185 = vcvt.s32.f32 %v3057
  %v3186 = vcvt.s32.f32 %v3058
  %v3187 = vcvt.s32.f32 %v3059
  %v3188 = vcvt.s32.f32 %v3060
  %v3189 = vcvt.s32.f32 %v3061
  %v3190 = vcvt.s32.f32 %v3062
  %v3191 = vcvt.s32.f32 %v3063
  %v3192 = vcvt.s32.f32 %v3064
  %v3193 = vcvt.s32.f32 %v3065
  %v3194 = vcvt.s32.f32 %v3066
  %v3195 = vcvt.s32.f32 %v3067
  %v3196 = vcvt.s32.f32 %v3068
  %v3197 = vpack.c.bf16 %v3073, %v3069
  %v3198 = vpack.c.bf16 %v3074, %v3070
  %v3199 = vpack.c.bf16 %v3075, %v3071
  %v3200 = vpack.c.bf16 %v3076, %v3072
  %v3201 = vpack.c.bf16 %v3081, %v3077
  %v3202 = vpack.c.bf16 %v3082, %v3078
  %v3203 = vpack.c.bf16 %v3083, %v3079
  %v3204 = vpack.c.bf16 %v3084, %v3080
  %v3205 = vpack.c.bf16 %v3089, %v3085
  %v3206 = vpack.c.bf16 %v3090, %v3086
  %v3207 = vpack.c.bf16 %v3091, %v3087
  %v3208 = vpack.c.bf16 %v3092, %v3088
  %v3209 = vpack.c.bf16 %v3097, %v3093
  %v3210 = vpack.c.bf16 %v3098, %v3094
  %v3211 = vpack.c.bf16 %v3099, %v3095
  %v3212 = vpack.c.bf16 %v3100, %v3096
  %v3213 = vpack.c.bf16 %v3105, %v3101
  %v3214 = vpack.c.bf16 %v3106, %v3102
  %v3215 = vpack.c.bf16 %v3107, %v3103
  %v3216 = vpack.c.bf16 %v3108, %v3104
  %v3217 = vpack.c.bf16 %v3113, %v3109
  %v3218 = vpack.c.bf16 %v3114, %v3110
  %v3219 = vpack.c.bf16 %v3115, %v3111
  %v3220 = vpack.c.bf16 %v3116, %v3112
  %v3221 = vpack.c.bf16 %v3121, %v3117
  %v3222 = vpack.c.bf16 %v3122, %v3118
  %v3223 = vpack.c.bf16 %v3123, %v3119
  %v3224 = vpack.c.bf16 %v3124, %v3120
  %v3225 = vpack.c.bf16 %v3129, %v3125
  %v3226 = vpack.c.bf16 %v3130, %v3126
  %v3227 = vpack.c.bf16 %v3131, %v3127
  %v3228 = vpack.c.bf16 %v3132, %v3128
  %v3229 = vpack.c.bf16 %v3137, %v3133
  %v3230 = vpack.c.bf16 %v3138, %v3134
  %v3231 = vpack.c.bf16 %v3139, %v3135
  %v3232 = vpack.c.bf16 %v3140, %v3136
  %v3233 = vpack.c.bf16 %v3145, %v3141
  %v3234 = vpack.c.bf16 %v3146, %v3142
  %v3235 = vpack.c.bf16 %v3147, %v3143
  %v3236 = vpack.c.bf16 %v3148, %v3144
  %v3237 = vpack.c.bf16 %v3153, %v3149
  %v3238 = vpack.c.bf16 %v3154, %v3150
  %v3239 = vpack.c.bf16 %v3155, %v3151
  %v3240 = vpack.c.bf16 %v3156, %v3152
  %v3241 = vpack.c.bf16 %v3161, %v3157
  %v3242 = vpack.c.bf16 %v3162, %v3158
  %v3243 = vpack.c.bf16 %v3163, %v3159
  %v3244 = vpack.c.bf16 %v3164, %v3160
  %v3245 = vpack.c.bf16 %v3169, %v3165
  %v3246 = vpack.c.bf16 %v3170, %v3166
  %v3247 = vpack.c.bf16 %v3171, %v3167
  %v3248 = vpack.c.bf16 %v3172, %v3168
  %v3249 = vpack.c.bf16 %v3177, %v3173
  %v3250 = vpack.c.bf16 %v3178, %v3174
  %v3251 = vpack.c.bf16 %v3179, %v3175
  %v3252 = vpack.c.bf16 %v3180, %v3176
  %v3253 = vpack.c.bf16 %v3185, %v3181
  %v3254 = vpack.c.bf16 %v3186, %v3182
  %v3255 = vpack.c.bf16 %v3187, %v3183
  %v3256 = vpack.c.bf16 %v3188, %v3184
  %v3257 = vpack.c.bf16 %v3193, %v3189
  %v3258 = vpack.c.bf16 %v3194, %v3190
  %v3259 = vpack.c.bf16 %v3195, %v3191
  %v3260 = vpack.c.bf16 %v3196, %v3192
  %3261 = vmatpush.bf16.msra.mxu0 %v3225
  %3262 = vmatpush.bf16.msra.mxu0 %v3221
  %3263 = vmatpush.bf16.msra.mxu0 %v3217
  %3264 = vmatpush.bf16.msra.mxu0 %v3213
  %3265 = vmatpush.bf16.msra.mxu0 %v3209
  %3266 = vmatpush.bf16.msra.mxu0 %v3205
  %3267 = vmatpush.bf16.msra.mxu0 %v3201
  %3268 = vmatpush.bf16.msra.mxu0 %v3197
  %3269 = vmatmul.bf16.gmra.mxu0 %v2907
  %v3270 = vpop.f32.mrf.mxu0
  %v3271 = vadd.f32 0.0, %v3270
  %v3272 = vpop.f32.mrf.mxu0
  %3273 = vdwg.mxu0
  %3274 = vmatpush.bf16.msra.mxu0 %v3257
  %3275 = vmatpush.bf16.msra.mxu0 %v3253
  %3276 = vmatpush.bf16.msra.mxu0 %v3249
  %3277 = vmatpush.bf16.msra.mxu0 %v3245
  %3278 = vmatpush.bf16.msra.mxu0 %v3241
  %3279 = vmatpush.bf16.msra.mxu0 %v3237
  %3280 = vmatpush.bf16.msra.mxu0 %v3233
  %3281 = vmatpush.bf16.msra.mxu0 %v3229
  %3282 = vmatmul.bf16.gmra.mxu0 %v2908
  %v3283 = vpop.f32.mrf.mxu0
  %v3284 = vadd.f32 %v3271, %v3283
  %v3285 = vpop.f32.mrf.mxu0
  %3286 = vdwg.mxu0
  %3287 = vmatpush.bf16.msra.mxu0 %v3226
  %3288 = vmatpush.bf16.msra.mxu0 %v3222
  %3289 = vmatpush.bf16.msra.mxu0 %v3218
  %3290 = vmatpush.bf16.msra.mxu0 %v3214
  %3291 = vmatpush.bf16.msra.mxu0 %v3210
  %3292 = vmatpush.bf16.msra.mxu0 %v3206
  %3293 = vmatpush.bf16.msra.mxu0 %v3202
  %3294 = vmatpush.bf16.msra.mxu0 %v3198
  %3295 = vmatmul.bf16.gmra.mxu0 %v2907
  %v3296 = vpop.f32.mrf.mxu0
  %v3297 = vadd.f32 0.0, %v3296
  %v3298 = vpop.f32.mrf.mxu0
  %3299 = vdwg.mxu0
  %3300 = vmatpush.bf16.msra.mxu0 %v3258
  %3301 = vmatpush.bf16.msra.mxu0 %v3254
  %3302 = vmatpush.bf16.msra.mxu0 %v3250
  %3303 = vmatpush.bf16.msra.mxu0 %v3246
  %3304 = vmatpush.bf16.msra.mxu0 %v3242
  %3305 = vmatpush.bf16.msra.mxu0 %v3238
  %3306 = vmatpush.bf16.msra.mxu0 %v3234
  %3307 = vmatpush.bf16.msra.mxu0 %v3230
  %3308 = vmatmul.bf16.gmra.mxu0 %v2908
  %v3309 = vpop.f32.mrf.mxu0
  %v3310 = vadd.f32 %v3297, %v3309
  %v3311 = vpop.f32.mrf.mxu0
  %3312 = vdwg.mxu0
  %3313 = vmatpush.bf16.msra.mxu0 %v3227
  %3314 = vmatpush.bf16.msra.mxu0 %v3223
  %3315 = vmatpush.bf16.msra.mxu0 %v3219
  %3316 = vmatpush.bf16.msra.mxu0 %v3215
  %3317 = vmatpush.bf16.msra.mxu0 %v3211
  %3318 = vmatpush.bf16.msra.mxu0 %v3207
  %3319 = vmatpush.bf16.msra.mxu0 %v3203
  %3320 = vmatpush.bf16.msra.mxu0 %v3199
  %3321 = vmatmul.bf16.gmra.mxu0 %v2907
  %v3322 = vpop.f32.mrf.mxu0
  %v3323 = vadd.f32 0.0, %v3322
  %v3324 = vpop.f32.mrf.mxu0
  %3325 = vdwg.mxu0
  %3326 = vmatpush.bf16.msra.mxu0 %v3259
  %3327 = vmatpush.bf16.msra.mxu0 %v3255
  %3328 = vmatpush.bf16.msra.mxu0 %v3251
  %3329 = vmatpush.bf16.msra.mxu0 %v3247
  %3330 = vmatpush.bf16.msra.mxu0 %v3243
  %3331 = vmatpush.bf16.msra.mxu0 %v3239
  %3332 = vmatpush.bf16.msra.mxu0 %v3235
  %3333 = vmatpush.bf16.msra.mxu0 %v3231
  %3334 = vmatmul.bf16.gmra.mxu0 %v2908
  %v3335 = vpop.f32.mrf.mxu0
  %v3336 = vadd.f32 %v3323, %v3335
  %v3337 = vpop.f32.mrf.mxu0
  %3338 = vdwg.mxu0
  %3339 = vmatpush.bf16.msra.mxu0 %v3228
  %3340 = vmatpush.bf16.msra.mxu0 %v3224
  %3341 = vmatpush.bf16.msra.mxu0 %v3220
  %3342 = vmatpush.bf16.msra.mxu0 %v3216
  %3343 = vmatpush.bf16.msra.mxu0 %v3212
  %3344 = vmatpush.bf16.msra.mxu0 %v3208
  %3345 = vmatpush.bf16.msra.mxu0 %v3204
  %3346 = vmatpush.bf16.msra.mxu0 %v3200
  %3347 = vmatmul.bf16.gmra.mxu0 %v2907
  %v3348 = vpop.f32.mrf.mxu0
  %v3349 = vadd.f32 0.0, %v3348
  %v3350 = vpop.f32.mrf.mxu0
  %3351 = vdwg.mxu0
  %3352 = vmatpush.bf16.msra.mxu0 %v3260
  %3353 = vmatpush.bf16.msra.mxu0 %v3256
  %3354 = vmatpush.bf16.msra.mxu0 %v3252
  %3355 = vmatpush.bf16.msra.mxu0 %v3248
  %3356 = vmatpush.bf16.msra.mxu0 %v3244
  %3357 = vmatpush.bf16.msra.mxu0 %v3240
  %3358 = vmatpush.bf16.msra.mxu0 %v3236
  %3359 = vmatpush.bf16.msra.mxu0 %v3232
  %3360 = vmatmul.bf16.gmra.mxu0 %v2908
  %v3361 = vpop.f32.mrf.mxu0
  %v3362 = vadd.f32 %v3349, %v3361
  %v3363 = vpop.f32.mrf.mxu0
  %3364 = vdwg.mxu0
  %v3365 = vld [vmem:[%s1 + $0x10] sm:$0xf]
  %v3366 = vld [vmem:[%s1 + $0x14] sm:$0xf]
  %v3367 = vrot.slane %v3284, 4
  %v3368 = vadd.f32 %v3284, %v3367
  %v3369 = vrot.slane %v3368, 2
  %v3370 = vadd.f32 %v3368, %v3369
  %v3371 = vrot.slane %v3370, 1
  %v3372 = vadd.f32 %v3370, %v3371
  %v3373 = vrot.slane %v3310, 4
  %v3374 = vadd.f32 %v3310, %v3373
  %v3375 = vrot.slane %v3374, 2
  %v3376 = vadd.f32 %v3374, %v3375
  %v3377 = vrot.slane %v3376, 1
  %v3378 = vadd.f32 %v3376, %v3377
  %v3379 = vrot.slane %v3336, 4
  %v3380 = vadd.f32 %v3336, %v3379
  %v3381 = vrot.slane %v3380, 2
  %v3382 = vadd.f32 %v3380, %v3381
  %v3383 = vrot.slane %v3382, 1
  %v3384 = vadd.f32 %v3382, %v3383
  %v3385 = vrot.slane %v3362, 4
  %v3386 = vadd.f32 %v3362, %v3385
  %v3387 = vrot.slane %v3386, 2
  %v3388 = vadd.f32 %v3386, %v3387
  %v3389 = vrot.slane %v3388, 1
  %v3390 = vadd.f32 %v3388, %v3389
  %v3391 = vmul.f32 %v3372, 0.125
  %v3392 = vmul.f32 %v3378, 0.125
  %v3393 = vmul.f32 %v3384, 0.125
  %v3394 = vmul.f32 %v3390, 0.125
  %v3395 = vmul.f32 %v3284, %v3284
  %v3396 = vmul.f32 %v3310, %v3310
  %v3397 = vmul.f32 %v3336, %v3336
  %v3398 = vmul.f32 %v3362, %v3362
  %v3399 = vrot.slane %v3395, 4
  %v3400 = vadd.f32 %v3395, %v3399
  %v3401 = vrot.slane %v3400, 2
  %v3402 = vadd.f32 %v3400, %v3401
  %v3403 = vrot.slane %v3402, 1
  %v3404 = vadd.f32 %v3402, %v3403
  %v3405 = vrot.slane %v3396, 4
  %v3406 = vadd.f32 %v3396, %v3405
  %v3407 = vrot.slane %v3406, 2
  %v3408 = vadd.f32 %v3406, %v3407
  %v3409 = vrot.slane %v3408, 1
  %v3410 = vadd.f32 %v3408, %v3409
  %v3411 = vrot.slane %v3397, 4
  %v3412 = vadd.f32 %v3397, %v3411
  %v3413 = vrot.slane %v3412, 2
  %v3414 = vadd.f32 %v3412, %v3413
  %v3415 = vrot.slane %v3414, 1
  %v3416 = vadd.f32 %v3414, %v3415
  %v3417 = vrot.slane %v3398, 4
  %v3418 = vadd.f32 %v3398, %v3417
  %v3419 = vrot.slane %v3418, 2
  %v3420 = vadd.f32 %v3418, %v3419
  %v3421 = vrot.slane %v3420, 1
  %v3422 = vadd.f32 %v3420, %v3421
  %v3423 = vmul.f32 %v3404, 0.125
  %v3424 = vmul.f32 %v3410, 0.125
  %v3425 = vmul.f32 %v3416, 0.125
  %v3426 = vmul.f32 %v3422, 0.125
  %v3427 = vmul.f32 %v3391, %v3391
  %v3428 = vmul.f32 %v3392, %v3392
  %v3429 = vmul.f32 %v3393, %v3393
  %v3430 = vmul.f32 %v3394, %v3394
  %v3431 = vsub.f32 %v3423, %v3427
  %v3432 = vsub.f32 %v3424, %v3428
  %v3433 = vsub.f32 %v3425, %v3429
  %v3434 = vsub.f32 %v3426, %v3430
  %v3435 = vmax.f32 %v3431, 0.0
  %v3436 = vmax.f32 %v3432, 0.0
  %v3437 = vmax.f32 %v3433, 0.0
  %v3438 = vmax.f32 %v3434, 0.0
  %v3439 = vadd.f32 %v3435, 1e-05
  %v3440 = vadd.f32 %v3436, 1e-05
  %v3441 = vadd.f32 %v3437, 1e-05
  %v3442 = vadd.f32 %v3438, 1e-05
  %v3443 = vrsqrt.pop %v3439
  %v3444 = vmul.f32 %v3443, %v3439
  %v3445 = vmul.f32 %v3444, %v3443
  %v3446 = vmul.f32 0.5, %v3445
  %v3447 = vsub.f32 1.5, %v3446
  %v3448 = vmul.f32 %v3443, %v3447
  %vm3449 = vweird.f32 %v3439
  %vm3450 = vweird.f32 %v3443
  %vm3451 = vmor %vm3449, %vm3450
  %v3452 = vsel %vm3451, %v3443, %v3448
  %v3453 = vrsqrt.pop %v3440
  %v3454 = vmul.f32 %v3453, %v3440
  %v3455 = vmul.f32 %v3454, %v3453
  %v3456 = vmul.f32 0.5, %v3455
  %v3457 = vsub.f32 1.5, %v3456
  %v3458 = vmul.f32 %v3453, %v3457
  %vm3459 = vweird.f32 %v3440
  %vm3460 = vweird.f32 %v3453
  %vm3461 = vmor %vm3459, %vm3460
  %v3462 = vsel %vm3461, %v3453, %v3458
  %v3463 = vrsqrt.pop %v3441
  %v3464 = vmul.f32 %v3463, %v3441
  %v3465 = vmul.f32 %v3464, %v3463
  %v3466 = vmul.f32 0.5, %v3465
  %v3467 = vsub.f32 1.5, %v3466
  %v3468 = vmul.f32 %v3463, %v3467
  %vm3469 = vweird.f32 %v3441
  %vm3470 = vweird.f32 %v3463
  %vm3471 = vmor %vm3469, %vm3470
  %v3472 = vsel %vm3471, %v3463, %v3468
  %v3473 = vrsqrt.pop %v3442
  %v3474 = vmul.f32 %v3473, %v3442
  %v3475 = vmul.f32 %v3474, %v3473
  %v3476 = vmul.f32 0.5, %v3475
  %v3477 = vsub.f32 1.5, %v3476
  %v3478 = vmul.f32 %v3473, %v3477
  %vm3479 = vweird.f32 %v3442
  %vm3480 = vweird.f32 %v3473
  %vm3481 = vmor %vm3479, %vm3480
  %v3482 = vsel %vm3481, %v3473, %v3478
  %v3487 = vrot.slane %v3462, 7
  %v3488 = vrot.slane %v3472, 6
  %v3489 = vrot.slane %v3482, 5
  %v3490 = vsel %vm1943, %v3452, %v3487
  %v3491 = vsel %vm1945, %v3488, %v3489
  %v3492 = vsel %vm1947, %v3490, %v3491
  %v3494 = vmul.f32 %v3365, %v3492
  %v3496 = vperm.slane %v3494, 0
  %v3497 = vperm.slane %v3494, 1
  %v3498 = vperm.slane %v3494, 2
  %v3499 = vperm.slane %v3494, 3
  %v3504 = vmul.f32 %v3284, %v3496
  %v3505 = vmul.f32 %v3310, %v3497
  %v3506 = vmul.f32 %v3336, %v3498
  %v3507 = vmul.f32 %v3362, %v3499
  %v3508 = vmul.f32 %v3391, %v3496
  %v3509 = vmul.f32 %v3392, %v3497
  %v3510 = vmul.f32 %v3393, %v3498
  %v3511 = vmul.f32 %v3394, %v3499
  %v3516 = vrot.slane %v3509, 7
  %v3517 = vrot.slane %v3510, 6
  %v3518 = vrot.slane %v3511, 5
  %v3519 = vsel %vm1943, %v3508, %v3516
  %v3520 = vsel %vm1945, %v3517, %v3518
  %v3521 = vsel %vm1947, %v3519, %v3520
  %v3523 = vsub.f32 %v3366, %v3521
  %v3525 = vperm.slane %v3523, 0
  %v3526 = vperm.slane %v3523, 1
  %v3527 = vperm.slane %v3523, 2
  %v3528 = vperm.slane %v3523, 3
  %v3533 = vadd.f32 %v3504, %v3525
  %v3534 = vadd.f32 %v3505, %v3526
  %v3535 = vadd.f32 %v3506, %v3527
  %v3536 = vadd.f32 %v3507, %v3528
  %vm3537 = vcmp.gt.f32.partialorder %v3533, 0.0
  %vm3538 = vcmp.gt.f32.partialorder %v3534, 0.0
  %vm3539 = vcmp.gt.f32.partialorder %v3535, 0.0
  %vm3540 = vcmp.gt.f32.partialorder %v3536, 0.0
  %v3541 = vmul.f32 %v3533, 0.01
  %v3542 = vmul.f32 %v3534, 0.01
  %v3543 = vmul.f32 %v3535, 0.01
  %v3544 = vmul.f32 %v3536, 0.01
  %v3545 = vsel %vm3537, %v3533, %v3541
  %v3546 = vsel %vm3538, %v3534, %v3542
  %v3547 = vsel %vm3539, %v3535, %v3543
  %v3548 = vsel %vm3540, %v3536, %v3544
  %v3549 = vpack.c.bf16 %v3545, %v3545
  %v3550 = vpack.c.bf16 %v3546, %v3546
  %v3551 = vpack.c.bf16 %v3547, %v3547
  %v3552 = vpack.c.bf16 %v3548, %v3548
  %v3553 = vld [vmem:[#allocation3] sm:$0xff]
  %v3554 = vld [vmem:[#allocation3 + $0x8] sm:$0xff]
  %v3555 = vld [vmem:[#allocation3 + $0x10] sm:$0xff]
  %v3556 = vld [vmem:[#allocation3 + $0x18] sm:$0xff]
  %v3557 = vld [vmem:[#allocation3 + $0x20] sm:$0xff]
  %v3558 = vld [vmem:[#allocation3 + $0x28] sm:$0xff]
  %v3559 = vld [vmem:[#allocation3 + $0x30] sm:$0xff]
  %v3560 = vld [vmem:[#allocation3 + $0x38] sm:$0xff]
  %v3561 = vld [vmem:[#allocation3 + $0x40] sm:$0xff]
  %v3562 = vld [vmem:[#allocation3 + $0x48] sm:$0xff]
  %v3563 = vld [vmem:[#allocation3 + $0x50] sm:$0xff]
  %v3564 = vld [vmem:[#allocation3 + $0x58] sm:$0xff]
  %v3565 = vld [vmem:[#allocation3 + $0x60] sm:$0xff]
  %v3566 = vld [vmem:[#allocation3 + $0x68] sm:$0xff]
  %v3567 = vld [vmem:[#allocation3 + $0x70] sm:$0xff]
  %v3568 = vld [vmem:[#allocation3 + $0x78] sm:$0xff]
  %v3569 = vld [vmem:[#allocation3 + $0x80] sm:$0xff]
  %v3570 = vld [vmem:[#allocation3 + $0x88] sm:$0xff]
  %v3571 = vld [vmem:[#allocation3 + $0x90] sm:$0xff]
  %v3572 = vld [vmem:[#allocation3 + $0x98] sm:$0xff]
  %v3573 = vld [vmem:[#allocation3 + $0xa0] sm:$0xff]
  %v3574 = vld [vmem:[#allocation3 + $0xa8] sm:$0xff]
  %v3575 = vld [vmem:[#allocation3 + $0xb0] sm:$0xff]
  %v3576 = vld [vmem:[#allocation3 + $0xb8] sm:$0xff]
  %v3577 = vld [vmem:[#allocation3 + $0xc0] sm:$0xff]
  %v3578 = vld [vmem:[#allocation3 + $0xc8] sm:$0xff]
  %v3579 = vld [vmem:[#allocation3 + $0xd0] sm:$0xff]
  %v3580 = vld [vmem:[#allocation3 + $0xd8] sm:$0xff]
  %v3581 = vld [vmem:[#allocation3 + $0xe0] sm:$0xff]
  %v3582 = vld [vmem:[#allocation3 + $0xe8] sm:$0xff]
  %v3583 = vld [vmem:[#allocation3 + $0xf0] sm:$0xff]
  %v3584 = vld [vmem:[#allocation3 + $0xf8] sm:$0xff]
  %v3585 = vld [vmem:[#allocation3 + $0x100] sm:$0xff]
  %v3586 = vld [vmem:[#allocation3 + $0x108] sm:$0xff]
  %v3587 = vld [vmem:[#allocation3 + $0x110] sm:$0xff]
  %v3588 = vld [vmem:[#allocation3 + $0x118] sm:$0xff]
  %v3589 = vld [vmem:[#allocation3 + $0x120] sm:$0xff]
  %v3590 = vld [vmem:[#allocation3 + $0x128] sm:$0xff]
  %v3591 = vld [vmem:[#allocation3 + $0x130] sm:$0xff]
  %v3592 = vld [vmem:[#allocation3 + $0x138] sm:$0xff]
  %v3593 = vld [vmem:[#allocation3 + $0x140] sm:$0xff]
  %v3594 = vld [vmem:[#allocation3 + $0x148] sm:$0xff]
  %v3595 = vld [vmem:[#allocation3 + $0x150] sm:$0xff]
  %v3596 = vld [vmem:[#allocation3 + $0x158] sm:$0xff]
  %v3597 = vld [vmem:[#allocation3 + $0x160] sm:$0xff]
  %v3598 = vld [vmem:[#allocation3 + $0x168] sm:$0xff]
  %v3599 = vld [vmem:[#allocation3 + $0x170] sm:$0xff]
  %v3600 = vld [vmem:[#allocation3 + $0x178] sm:$0xff]
  %v3601 = vld [vmem:[#allocation3 + $0x180] sm:$0xff]
  %v3602 = vld [vmem:[#allocation3 + $0x188] sm:$0xff]
  %v3603 = vld [vmem:[#allocation3 + $0x190] sm:$0xff]
  %v3604 = vld [vmem:[#allocation3 + $0x198] sm:$0xff]
  %v3605 = vld [vmem:[#allocation3 + $0x1a0] sm:$0xff]
  %v3606 = vld [vmem:[#allocation3 + $0x1a8] sm:$0xff]
  %v3607 = vld [vmem:[#allocation3 + $0x1b0] sm:$0xff]
  %v3608 = vld [vmem:[#allocation3 + $0x1b8] sm:$0xff]
  %v3609 = vld [vmem:[#allocation3 + $0x1c0] sm:$0xff]
  %v3610 = vld [vmem:[#allocation3 + $0x1c8] sm:$0xff]
  %v3611 = vld [vmem:[#allocation3 + $0x1d0] sm:$0xff]
  %v3612 = vld [vmem:[#allocation3 + $0x1d8] sm:$0xff]
  %v3613 = vld [vmem:[#allocation3 + $0x1e0] sm:$0xff]
  %v3614 = vld [vmem:[#allocation3 + $0x1e8] sm:$0xff]
  %v3615 = vld [vmem:[#allocation3 + $0x1f0] sm:$0xff]
  %v3616 = vld [vmem:[#allocation3 + $0x1f8] sm:$0xff]
  %v3617 = vld [vmem:[#allocation3 + $0x200] sm:$0xff]
  %v3618 = vld [vmem:[#allocation3 + $0x208] sm:$0xff]
  %v3619 = vld [vmem:[#allocation3 + $0x210] sm:$0xff]
  %v3620 = vld [vmem:[#allocation3 + $0x218] sm:$0xff]
  %v3621 = vld [vmem:[#allocation3 + $0x220] sm:$0xff]
  %v3622 = vld [vmem:[#allocation3 + $0x228] sm:$0xff]
  %v3623 = vld [vmem:[#allocation3 + $0x230] sm:$0xff]
  %v3624 = vld [vmem:[#allocation3 + $0x238] sm:$0xff]
  %v3625 = vld [vmem:[#allocation3 + $0x240] sm:$0xff]
  %v3626 = vld [vmem:[#allocation3 + $0x248] sm:$0xff]
  %v3627 = vld [vmem:[#allocation3 + $0x250] sm:$0xff]
  %v3628 = vld [vmem:[#allocation3 + $0x258] sm:$0xff]
  %v3629 = vld [vmem:[#allocation3 + $0x260] sm:$0xff]
  %v3630 = vld [vmem:[#allocation3 + $0x268] sm:$0xff]
  %v3631 = vld [vmem:[#allocation3 + $0x270] sm:$0xff]
  %v3632 = vld [vmem:[#allocation3 + $0x278] sm:$0xff]
  %v3633 = vld [vmem:[#allocation3 + $0x280] sm:$0xff]
  %v3634 = vld [vmem:[#allocation3 + $0x288] sm:$0xff]
  %v3635 = vld [vmem:[#allocation3 + $0x290] sm:$0xff]
  %v3636 = vld [vmem:[#allocation3 + $0x298] sm:$0xff]
  %v3637 = vld [vmem:[#allocation3 + $0x2a0] sm:$0xff]
  %v3638 = vld [vmem:[#allocation3 + $0x2a8] sm:$0xff]
  %v3639 = vld [vmem:[#allocation3 + $0x2b0] sm:$0xff]
  %v3640 = vld [vmem:[#allocation3 + $0x2b8] sm:$0xff]
  %v3641 = vld [vmem:[#allocation3 + $0x2c0] sm:$0xff]
  %v3642 = vld [vmem:[#allocation3 + $0x2c8] sm:$0xff]
  %v3643 = vld [vmem:[#allocation3 + $0x2d0] sm:$0xff]
  %v3644 = vld [vmem:[#allocation3 + $0x2d8] sm:$0xff]
  %v3645 = vld [vmem:[#allocation3 + $0x2e0] sm:$0xff]
  %v3646 = vld [vmem:[#allocation3 + $0x2e8] sm:$0xff]
  %v3647 = vld [vmem:[#allocation3 + $0x2f0] sm:$0xff]
  %v3648 = vld [vmem:[#allocation3 + $0x2f8] sm:$0xff]
  %v3649 = vld [vmem:[#allocation3 + $0x300] sm:$0xff]
  %v3650 = vld [vmem:[#allocation3 + $0x308] sm:$0xff]
  %v3651 = vld [vmem:[#allocation3 + $0x310] sm:$0xff]
  %v3652 = vld [vmem:[#allocation3 + $0x318] sm:$0xff]
  %v3653 = vld [vmem:[#allocation3 + $0x320] sm:$0xff]
  %v3654 = vld [vmem:[#allocation3 + $0x328] sm:$0xff]
  %v3655 = vld [vmem:[#allocation3 + $0x330] sm:$0xff]
  %v3656 = vld [vmem:[#allocation3 + $0x338] sm:$0xff]
  %v3657 = vld [vmem:[#allocation3 + $0x340] sm:$0xff]
  %v3658 = vld [vmem:[#allocation3 + $0x348] sm:$0xff]
  %v3659 = vld [vmem:[#allocation3 + $0x350] sm:$0xff]
  %v3660 = vld [vmem:[#allocation3 + $0x358] sm:$0xff]
  %v3661 = vld [vmem:[#allocation3 + $0x360] sm:$0xff]
  %v3662 = vld [vmem:[#allocation3 + $0x368] sm:$0xff]
  %v3663 = vld [vmem:[#allocation3 + $0x370] sm:$0xff]
  %v3664 = vld [vmem:[#allocation3 + $0x378] sm:$0xff]
  %v3665 = vunpack.c.0.s8 %v3553
  %v3666 = vunpack.c.0.s8 %v3554
  %v3667 = vunpack.c.0.s8 %v3555
  %v3668 = vunpack.c.0.s8 %v3556
  %v3669 = vunpack.c.0.s8 %v3557
  %v3670 = vunpack.c.0.s8 %v3558
  %v3671 = vunpack.c.0.s8 %v3559
  %v3672 = vunpack.c.1.s8 %v3553
  %v3673 = vunpack.c.1.s8 %v3554
  %v3674 = vunpack.c.1.s8 %v3555
  %v3675 = vunpack.c.1.s8 %v3556
  %v3676 = vunpack.c.1.s8 %v3557
  %v3677 = vunpack.c.1.s8 %v3558
  %v3678 = vunpack.c.1.s8 %v3559
  %v3679 = vunpack.c.2.s8 %v3553
  %v3680 = vunpack.c.2.s8 %v3554
  %v3681 = vunpack.c.2.s8 %v3555
  %v3682 = vunpack.c.2.s8 %v3556
  %v3683 = vunpack.c.2.s8 %v3557
  %v3684 = vunpack.c.2.s8 %v3558
  %v3685 = vunpack.c.2.s8 %v3559
  %v3686 = vunpack.c.3.s8 %v3553
  %v3687 = vunpack.c.3.s8 %v3554
  %v3688 = vunpack.c.3.s8 %v3555
  %v3689 = vunpack.c.3.s8 %v3556
  %v3690 = vunpack.c.3.s8 %v3557
  %v3691 = vunpack.c.3.s8 %v3558
  %v3692 = vunpack.c.3.s8 %v3559
  %v3693 = vunpack.c.0.s8 %v3560
  %v3694 = vunpack.c.0.s8 %v3561
  %v3695 = vunpack.c.0.s8 %v3562
  %v3696 = vunpack.c.0.s8 %v3563
  %v3697 = vunpack.c.0.s8 %v3564
  %v3698 = vunpack.c.0.s8 %v3565
  %v3699 = vunpack.c.0.s8 %v3566
  %v3700 = vunpack.c.1.s8 %v3560
  %v3701 = vunpack.c.1.s8 %v3561
  %v3702 = vunpack.c.1.s8 %v3562
  %v3703 = vunpack.c.1.s8 %v3563
  %v3704 = vunpack.c.1.s8 %v3564
  %v3705 = vunpack.c.1.s8 %v3565
  %v3706 = vunpack.c.1.s8 %v3566
  %v3707 = vunpack.c.2.s8 %v3560
  %v3708 = vunpack.c.2.s8 %v3561
  %v3709 = vunpack.c.2.s8 %v3562
  %v3710 = vunpack.c.2.s8 %v3563
  %v3711 = vunpack.c.2.s8 %v3564
  %v3712 = vunpack.c.2.s8 %v3565
  %v3713 = vunpack.c.2.s8 %v3566
  %v3714 = vunpack.c.3.s8 %v3560
  %v3715 = vunpack.c.3.s8 %v3561
  %v3716 = vunpack.c.3.s8 %v3562
  %v3717 = vunpack.c.3.s8 %v3563
  %v3718 = vunpack.c.3.s8 %v3564
  %v3719 = vunpack.c.3.s8 %v3565
  %v3720 = vunpack.c.3.s8 %v3566
  %v3721 = vunpack.c.0.s8 %v3567
  %v3722 = vunpack.c.0.s8 %v3568
  %v3723 = vunpack.c.0.s8 %v3569
  %v3724 = vunpack.c.0.s8 %v3570
  %v3725 = vunpack.c.0.s8 %v3571
  %v3726 = vunpack.c.0.s8 %v3572
  %v3727 = vunpack.c.0.s8 %v3573
  %v3728 = vunpack.c.1.s8 %v3567
  %v3729 = vunpack.c.1.s8 %v3568
  %v3730 = vunpack.c.1.s8 %v3569
  %v3731 = vunpack.c.1.s8 %v3570
  %v3732 = vunpack.c.1.s8 %v3571
  %v3733 = vunpack.c.1.s8 %v3572
  %v3734 = vunpack.c.1.s8 %v3573
  %v3735 = vunpack.c.2.s8 %v3567
  %v3736 = vunpack.c.2.s8 %v3568
  %v3737 = vunpack.c.2.s8 %v3569
  %v3738 = vunpack.c.2.s8 %v3570
  %v3739 = vunpack.c.2.s8 %v3571
  %v3740 = vunpack.c.2.s8 %v3572
  %v3741 = vunpack.c.2.s8 %v3573
  %v3742 = vunpack.c.3.s8 %v3567
  %v3743 = vunpack.c.3.s8 %v3568
  %v3744 = vunpack.c.3.s8 %v3569
  %v3745 = vunpack.c.3.s8 %v3570
  %v3746 = vunpack.c.3.s8 %v3571
  %v3747 = vunpack.c.3.s8 %v3572
  %v3748 = vunpack.c.3.s8 %v3573
  %v3749 = vunpack.c.0.s8 %v3574
  %v3750 = vunpack.c.0.s8 %v3575
  %v3751 = vunpack.c.0.s8 %v3576
  %v3752 = vunpack.c.0.s8 %v3577
  %v3753 = vunpack.c.0.s8 %v3578
  %v3754 = vunpack.c.0.s8 %v3579
  %v3755 = vunpack.c.0.s8 %v3580
  %v3756 = vunpack.c.1.s8 %v3574
  %v3757 = vunpack.c.1.s8 %v3575
  %v3758 = vunpack.c.1.s8 %v3576
  %v3759 = vunpack.c.1.s8 %v3577
  %v3760 = vunpack.c.1.s8 %v3578
  %v3761 = vunpack.c.1.s8 %v3579
  %v3762 = vunpack.c.1.s8 %v3580
  %v3763 = vunpack.c.2.s8 %v3574
  %v3764 = vunpack.c.2.s8 %v3575
  %v3765 = vunpack.c.2.s8 %v3576
  %v3766 = vunpack.c.2.s8 %v3577
  %v3767 = vunpack.c.2.s8 %v3578
  %v3768 = vunpack.c.2.s8 %v3579
  %v3769 = vunpack.c.2.s8 %v3580
  %v3770 = vunpack.c.3.s8 %v3574
  %v3771 = vunpack.c.3.s8 %v3575
  %v3772 = vunpack.c.3.s8 %v3576
  %v3773 = vunpack.c.3.s8 %v3577
  %v3774 = vunpack.c.3.s8 %v3578
  %v3775 = vunpack.c.3.s8 %v3579
  %v3776 = vunpack.c.3.s8 %v3580
  %v3777 = vunpack.c.0.s8 %v3581
  %v3778 = vunpack.c.0.s8 %v3582
  %v3779 = vunpack.c.0.s8 %v3583
  %v3780 = vunpack.c.0.s8 %v3584
  %v3781 = vunpack.c.0.s8 %v3585
  %v3782 = vunpack.c.0.s8 %v3586
  %v3783 = vunpack.c.0.s8 %v3587
  %v3784 = vunpack.c.1.s8 %v3581
  %v3785 = vunpack.c.1.s8 %v3582
  %v3786 = vunpack.c.1.s8 %v3583
  %v3787 = vunpack.c.1.s8 %v3584
  %v3788 = vunpack.c.1.s8 %v3585
  %v3789 = vunpack.c.1.s8 %v3586
  %v3790 = vunpack.c.1.s8 %v3587
  %v3791 = vunpack.c.2.s8 %v3581
  %v3792 = vunpack.c.2.s8 %v3582
  %v3793 = vunpack.c.2.s8 %v3583
  %v3794 = vunpack.c.2.s8 %v3584
  %v3795 = vunpack.c.2.s8 %v3585
  %v3796 = vunpack.c.2.s8 %v3586
  %v3797 = vunpack.c.2.s8 %v3587
  %v3798 = vunpack.c.3.s8 %v3581
  %v3799 = vunpack.c.3.s8 %v3582
  %v3800 = vunpack.c.3.s8 %v3583
  %v3801 = vunpack.c.3.s8 %v3584
  %v3802 = vunpack.c.3.s8 %v3585
  %v3803 = vunpack.c.3.s8 %v3586
  %v3804 = vunpack.c.3.s8 %v3587
  %v3805 = vunpack.c.0.s8 %v3588
  %v3806 = vunpack.c.0.s8 %v3589
  %v3807 = vunpack.c.0.s8 %v3590
  %v3808 = vunpack.c.0.s8 %v3591
  %v3809 = vunpack.c.0.s8 %v3592
  %v3810 = vunpack.c.0.s8 %v3593
  %v3811 = vunpack.c.0.s8 %v3594
  %v3812 = vunpack.c.1.s8 %v3588
  %v3813 = vunpack.c.1.s8 %v3589
  %v3814 = vunpack.c.1.s8 %v3590
  %v3815 = vunpack.c.1.s8 %v3591
  %v3816 = vunpack.c.1.s8 %v3592
  %v3817 = vunpack.c.1.s8 %v3593
  %v3818 = vunpack.c.1.s8 %v3594
  %v3819 = vunpack.c.2.s8 %v3588
  %v3820 = vunpack.c.2.s8 %v3589
  %v3821 = vunpack.c.2.s8 %v3590
  %v3822 = vunpack.c.2.s8 %v3591
  %v3823 = vunpack.c.2.s8 %v3592
  %v3824 = vunpack.c.2.s8 %v3593
  %v3825 = vunpack.c.2.s8 %v3594
  %v3826 = vunpack.c.3.s8 %v3588
  %v3827 = vunpack.c.3.s8 %v3589
  %v3828 = vunpack.c.3.s8 %v3590
  %v3829 = vunpack.c.3.s8 %v3591
  %v3830 = vunpack.c.3.s8 %v3592
  %v3831 = vunpack.c.3.s8 %v3593
  %v3832 = vunpack.c.3.s8 %v3594
  %v3833 = vunpack.c.0.s8 %v3595
  %v3834 = vunpack.c.0.s8 %v3596
  %v3835 = vunpack.c.0.s8 %v3597
  %v3836 = vunpack.c.0.s8 %v3598
  %v3837 = vunpack.c.0.s8 %v3599
  %v3838 = vunpack.c.0.s8 %v3600
  %v3839 = vunpack.c.0.s8 %v3601
  %v3840 = vunpack.c.1.s8 %v3595
  %v3841 = vunpack.c.1.s8 %v3596
  %v3842 = vunpack.c.1.s8 %v3597
  %v3843 = vunpack.c.1.s8 %v3598
  %v3844 = vunpack.c.1.s8 %v3599
  %v3845 = vunpack.c.1.s8 %v3600
  %v3846 = vunpack.c.1.s8 %v3601
  %v3847 = vunpack.c.2.s8 %v3595
  %v3848 = vunpack.c.2.s8 %v3596
  %v3849 = vunpack.c.2.s8 %v3597
  %v3850 = vunpack.c.2.s8 %v3598
  %v3851 = vunpack.c.2.s8 %v3599
  %v3852 = vunpack.c.2.s8 %v3600
  %v3853 = vunpack.c.2.s8 %v3601
  %v3854 = vunpack.c.3.s8 %v3595
  %v3855 = vunpack.c.3.s8 %v3596
  %v3856 = vunpack.c.3.s8 %v3597
  %v3857 = vunpack.c.3.s8 %v3598
  %v3858 = vunpack.c.3.s8 %v3599
  %v3859 = vunpack.c.3.s8 %v3600
  %v3860 = vunpack.c.3.s8 %v3601
  %v3861 = vunpack.c.0.s8 %v3602
  %v3862 = vunpack.c.0.s8 %v3603
  %v3863 = vunpack.c.0.s8 %v3604
  %v3864 = vunpack.c.0.s8 %v3605
  %v3865 = vunpack.c.0.s8 %v3606
  %v3866 = vunpack.c.0.s8 %v3607
  %v3867 = vunpack.c.0.s8 %v3608
  %v3868 = vunpack.c.1.s8 %v3602
  %v3869 = vunpack.c.1.s8 %v3603
  %v3870 = vunpack.c.1.s8 %v3604
  %v3871 = vunpack.c.1.s8 %v3605
  %v3872 = vunpack.c.1.s8 %v3606
  %v3873 = vunpack.c.1.s8 %v3607
  %v3874 = vunpack.c.1.s8 %v3608
  %v3875 = vunpack.c.2.s8 %v3602
  %v3876 = vunpack.c.2.s8 %v3603
  %v3877 = vunpack.c.2.s8 %v3604
  %v3878 = vunpack.c.2.s8 %v3605
  %v3879 = vunpack.c.2.s8 %v3606
  %v3880 = vunpack.c.2.s8 %v3607
  %v3881 = vunpack.c.2.s8 %v3608
  %v3882 = vunpack.c.3.s8 %v3602
  %v3883 = vunpack.c.3.s8 %v3603
  %v3884 = vunpack.c.3.s8 %v3604
  %v3885 = vunpack.c.3.s8 %v3605
  %v3886 = vunpack.c.3.s8 %v3606
  %v3887 = vunpack.c.3.s8 %v3607
  %v3888 = vunpack.c.3.s8 %v3608
  %v3889 = vunpack.c.0.s8 %v3609
  %v3890 = vunpack.c.0.s8 %v3610
  %v3891 = vunpack.c.0.s8 %v3611
  %v3892 = vunpack.c.0.s8 %v3612
  %v3893 = vunpack.c.0.s8 %v3613
  %v3894 = vunpack.c.0.s8 %v3614
  %v3895 = vunpack.c.0.s8 %v3615
  %v3896 = vunpack.c.1.s8 %v3609
  %v3897 = vunpack.c.1.s8 %v3610
  %v3898 = vunpack.c.1.s8 %v3611
  %v3899 = vunpack.c.1.s8 %v3612
  %v3900 = vunpack.c.1.s8 %v3613
  %v3901 = vunpack.c.1.s8 %v3614
  %v3902 = vunpack.c.1.s8 %v3615
  %v3903 = vunpack.c.2.s8 %v3609
  %v3904 = vunpack.c.2.s8 %v3610
  %v3905 = vunpack.c.2.s8 %v3611
  %v3906 = vunpack.c.2.s8 %v3612
  %v3907 = vunpack.c.2.s8 %v3613
  %v3908 = vunpack.c.2.s8 %v3614
  %v3909 = vunpack.c.2.s8 %v3615
  %v3910 = vunpack.c.3.s8 %v3609
  %v3911 = vunpack.c.3.s8 %v3610
  %v3912 = vunpack.c.3.s8 %v3611
  %v3913 = vunpack.c.3.s8 %v3612
  %v3914 = vunpack.c.3.s8 %v3613
  %v3915 = vunpack.c.3.s8 %v3614
  %v3916 = vunpack.c.3.s8 %v3615
  %v3917 = vunpack.c.0.s8 %v3616
  %v3918 = vunpack.c.0.s8 %v3617
  %v3919 = vunpack.c.0.s8 %v3618
  %v3920 = vunpack.c.0.s8 %v3619
  %v3921 = vunpack.c.0.s8 %v3620
  %v3922 = vunpack.c.0.s8 %v3621
  %v3923 = vunpack.c.0.s8 %v3622
  %v3924 = vunpack.c.1.s8 %v3616
  %v3925 = vunpack.c.1.s8 %v3617
  %v3926 = vunpack.c.1.s8 %v3618
  %v3927 = vunpack.c.1.s8 %v3619
  %v3928 = vunpack.c.1.s8 %v3620
  %v3929 = vunpack.c.1.s8 %v3621
  %v3930 = vunpack.c.1.s8 %v3622
  %v3931 = vunpack.c.2.s8 %v3616
  %v3932 = vunpack.c.2.s8 %v3617
  %v3933 = vunpack.c.2.s8 %v3618
  %v3934 = vunpack.c.2.s8 %v3619
  %v3935 = vunpack.c.2.s8 %v3620
  %v3936 = vunpack.c.2.s8 %v3621
  %v3937 = vunpack.c.2.s8 %v3622
  %v3938 = vunpack.c.3.s8 %v3616
  %v3939 = vunpack.c.3.s8 %v3617
  %v3940 = vunpack.c.3.s8 %v3618
  %v3941 = vunpack.c.3.s8 %v3619
  %v3942 = vunpack.c.3.s8 %v3620
  %v3943 = vunpack.c.3.s8 %v3621
  %v3944 = vunpack.c.3.s8 %v3622
  %v3945 = vunpack.c.0.s8 %v3623
  %v3946 = vunpack.c.0.s8 %v3624
  %v3947 = vunpack.c.0.s8 %v3625
  %v3948 = vunpack.c.0.s8 %v3626
  %v3949 = vunpack.c.0.s8 %v3627
  %v3950 = vunpack.c.0.s8 %v3628
  %v3951 = vunpack.c.0.s8 %v3629
  %v3952 = vunpack.c.1.s8 %v3623
  %v3953 = vunpack.c.1.s8 %v3624
  %v3954 = vunpack.c.1.s8 %v3625
  %v3955 = vunpack.c.1.s8 %v3626
  %v3956 = vunpack.c.1.s8 %v3627
  %v3957 = vunpack.c.1.s8 %v3628
  %v3958 = vunpack.c.1.s8 %v3629
  %v3959 = vunpack.c.2.s8 %v3623
  %v3960 = vunpack.c.2.s8 %v3624
  %v3961 = vunpack.c.2.s8 %v3625
  %v3962 = vunpack.c.2.s8 %v3626
  %v3963 = vunpack.c.2.s8 %v3627
  %v3964 = vunpack.c.2.s8 %v3628
  %v3965 = vunpack.c.2.s8 %v3629
  %v3966 = vunpack.c.3.s8 %v3623
  %v3967 = vunpack.c.3.s8 %v3624
  %v3968 = vunpack.c.3.s8 %v3625
  %v3969 = vunpack.c.3.s8 %v3626
  %v3970 = vunpack.c.3.s8 %v3627
  %v3971 = vunpack.c.3.s8 %v3628
  %v3972 = vunpack.c.3.s8 %v3629
  %v3973 = vunpack.c.0.s8 %v3630
  %v3974 = vunpack.c.0.s8 %v3631
  %v3975 = vunpack.c.0.s8 %v3632
  %v3976 = vunpack.c.0.s8 %v3633
  %v3977 = vunpack.c.0.s8 %v3634
  %v3978 = vunpack.c.0.s8 %v3635
  %v3979 = vunpack.c.0.s8 %v3636
  %v3980 = vunpack.c.1.s8 %v3630
  %v3981 = vunpack.c.1.s8 %v3631
  %v3982 = vunpack.c.1.s8 %v3632
  %v3983 = vunpack.c.1.s8 %v3633
  %v3984 = vunpack.c.1.s8 %v3634
  %v3985 = vunpack.c.1.s8 %v3635
  %v3986 = vunpack.c.1.s8 %v3636
  %v3987 = vunpack.c.2.s8 %v3630
  %v3988 = vunpack.c.2.s8 %v3631
  %v3989 = vunpack.c.2.s8 %v3632
  %v3990 = vunpack.c.2.s8 %v3633
  %v3991 = vunpack.c.2.s8 %v3634
  %v3992 = vunpack.c.2.s8 %v3635
  %v3993 = vunpack.c.2.s8 %v3636
  %v3994 = vunpack.c.3.s8 %v3630
  %v3995 = vunpack.c.3.s8 %v3631
  %v3996 = vunpack.c.3.s8 %v3632
  %v3997 = vunpack.c.3.s8 %v3633
  %v3998 = vunpack.c.3.s8 %v3634
  %v3999 = vunpack.c.3.s8 %v3635
  %v4000 = vunpack.c.3.s8 %v3636
  %v4001 = vunpack.c.0.s8 %v3637
  %v4002 = vunpack.c.0.s8 %v3638
  %v4003 = vunpack.c.0.s8 %v3639
  %v4004 = vunpack.c.0.s8 %v3640
  %v4005 = vunpack.c.0.s8 %v3641
  %v4006 = vunpack.c.0.s8 %v3642
  %v4007 = vunpack.c.0.s8 %v3643
  %v4008 = vunpack.c.1.s8 %v3637
  %v4009 = vunpack.c.1.s8 %v3638
  %v4010 = vunpack.c.1.s8 %v3639
  %v4011 = vunpack.c.1.s8 %v3640
  %v4012 = vunpack.c.1.s8 %v3641
  %v4013 = vunpack.c.1.s8 %v3642
  %v4014 = vunpack.c.1.s8 %v3643
  %v4015 = vunpack.c.2.s8 %v3637
  %v4016 = vunpack.c.2.s8 %v3638
  %v4017 = vunpack.c.2.s8 %v3639
  %v4018 = vunpack.c.2.s8 %v3640
  %v4019 = vunpack.c.2.s8 %v3641
  %v4020 = vunpack.c.2.s8 %v3642
  %v4021 = vunpack.c.2.s8 %v3643
  %v4022 = vunpack.c.3.s8 %v3637
  %v4023 = vunpack.c.3.s8 %v3638
  %v4024 = vunpack.c.3.s8 %v3639
  %v4025 = vunpack.c.3.s8 %v3640
  %v4026 = vunpack.c.3.s8 %v3641
  %v4027 = vunpack.c.3.s8 %v3642
  %v4028 = vunpack.c.3.s8 %v3643
  %v4029 = vunpack.c.0.s8 %v3644
  %v4030 = vunpack.c.0.s8 %v3645
  %v4031 = vunpack.c.0.s8 %v3646
  %v4032 = vunpack.c.0.s8 %v3647
  %v4033 = vunpack.c.0.s8 %v3648
  %v4034 = vunpack.c.0.s8 %v3649
  %v4035 = vunpack.c.0.s8 %v3650
  %v4036 = vunpack.c.1.s8 %v3644
  %v4037 = vunpack.c.1.s8 %v3645
  %v4038 = vunpack.c.1.s8 %v3646
  %v4039 = vunpack.c.1.s8 %v3647
  %v4040 = vunpack.c.1.s8 %v3648
  %v4041 = vunpack.c.1.s8 %v3649
  %v4042 = vunpack.c.1.s8 %v3650
  %v4043 = vunpack.c.2.s8 %v3644
  %v4044 = vunpack.c.2.s8 %v3645
  %v4045 = vunpack.c.2.s8 %v3646
  %v4046 = vunpack.c.2.s8 %v3647
  %v4047 = vunpack.c.2.s8 %v3648
  %v4048 = vunpack.c.2.s8 %v3649
  %v4049 = vunpack.c.2.s8 %v3650
  %v4050 = vunpack.c.3.s8 %v3644
  %v4051 = vunpack.c.3.s8 %v3645
  %v4052 = vunpack.c.3.s8 %v3646
  %v4053 = vunpack.c.3.s8 %v3647
  %v4054 = vunpack.c.3.s8 %v3648
  %v4055 = vunpack.c.3.s8 %v3649
  %v4056 = vunpack.c.3.s8 %v3650
  %v4057 = vunpack.c.0.s8 %v3651
  %v4058 = vunpack.c.0.s8 %v3652
  %v4059 = vunpack.c.0.s8 %v3653
  %v4060 = vunpack.c.0.s8 %v3654
  %v4061 = vunpack.c.0.s8 %v3655
  %v4062 = vunpack.c.0.s8 %v3656
  %v4063 = vunpack.c.0.s8 %v3657
  %v4064 = vunpack.c.1.s8 %v3651
  %v4065 = vunpack.c.1.s8 %v3652
  %v4066 = vunpack.c.1.s8 %v3653
  %v4067 = vunpack.c.1.s8 %v3654
  %v4068 = vunpack.c.1.s8 %v3655
  %v4069 = vunpack.c.1.s8 %v3656
  %v4070 = vunpack.c.1.s8 %v3657
  %v4071 = vunpack.c.2.s8 %v3651
  %v4072 = vunpack.c.2.s8 %v3652
  %v4073 = vunpack.c.2.s8 %v3653
  %v4074 = vunpack.c.2.s8 %v3654
  %v4075 = vunpack.c.2.s8 %v3655
  %v4076 = vunpack.c.2.s8 %v3656
  %v4077 = vunpack.c.2.s8 %v3657
  %v4078 = vunpack.c.3.s8 %v3651
  %v4079 = vunpack.c.3.s8 %v3652
  %v4080 = vunpack.c.3.s8 %v3653
  %v4081 = vunpack.c.3.s8 %v3654
  %v4082 = vunpack.c.3.s8 %v3655
  %v4083 = vunpack.c.3.s8 %v3656
  %v4084 = vunpack.c.3.s8 %v3657
  %v4085 = vunpack.c.0.s8 %v3658
  %v4086 = vunpack.c.0.s8 %v3659
  %v4087 = vunpack.c.0.s8 %v3660
  %v4088 = vunpack.c.0.s8 %v3661
  %v4089 = vunpack.c.0.s8 %v3662
  %v4090 = vunpack.c.0.s8 %v3663
  %v4091 = vunpack.c.0.s8 %v3664
  %v4092 = vunpack.c.1.s8 %v3658
  %v4093 = vunpack.c.1.s8 %v3659
  %v4094 = vunpack.c.1.s8 %v3660
  %v4095 = vunpack.c.1.s8 %v3661
  %v4096 = vunpack.c.1.s8 %v3662
  %v4097 = vunpack.c.1.s8 %v3663
  %v4098 = vunpack.c.1.s8 %v3664
  %v4099 = vunpack.c.2.s8 %v3658
  %v4100 = vunpack.c.2.s8 %v3659
  %v4101 = vunpack.c.2.s8 %v3660
  %v4102 = vunpack.c.2.s8 %v3661
  %v4103 = vunpack.c.2.s8 %v3662
  %v4104 = vunpack.c.2.s8 %v3663
  %v4105 = vunpack.c.2.s8 %v3664
  %v4106 = vunpack.c.3.s8 %v3658
  %v4107 = vunpack.c.3.s8 %v3659
  %v4108 = vunpack.c.3.s8 %v3660
  %v4109 = vunpack.c.3.s8 %v3661
  %v4110 = vunpack.c.3.s8 %v3662
  %v4111 = vunpack.c.3.s8 %v3663
  %v4112 = vunpack.c.3.s8 %v3664
  %v4113 = vcvt.s32.f32 %v3665
  %v4114 = vcvt.s32.f32 %v3666
  %v4115 = vcvt.s32.f32 %v3667
  %v4116 = vcvt.s32.f32 %v3668
  %v4117 = vcvt.s32.f32 %v3669
  %v4118 = vcvt.s32.f32 %v3670
  %v4119 = vcvt.s32.f32 %v3671
  %v4120 = vcvt.s32.f32 %v3672
  %v4121 = vcvt.s32.f32 %v3673
  %v4122 = vcvt.s32.f32 %v3674
  %v4123 = vcvt.s32.f32 %v3675
  %v4124 = vcvt.s32.f32 %v3676
  %v4125 = vcvt.s32.f32 %v3677
  %v4126 = vcvt.s32.f32 %v3678
  %v4127 = vcvt.s32.f32 %v3679
  %v4128 = vcvt.s32.f32 %v3680
  %v4129 = vcvt.s32.f32 %v3681
  %v4130 = vcvt.s32.f32 %v3682
  %v4131 = vcvt.s32.f32 %v3683
  %v4132 = vcvt.s32.f32 %v3684
  %v4133 = vcvt.s32.f32 %v3685
  %v4134 = vcvt.s32.f32 %v3686
  %v4135 = vcvt.s32.f32 %v3687
  %v4136 = vcvt.s32.f32 %v3688
  %v4137 = vcvt.s32.f32 %v3689
  %v4138 = vcvt.s32.f32 %v3690
  %v4139 = vcvt.s32.f32 %v3691
  %v4140 = vcvt.s32.f32 %v3692
  %v4141 = vcvt.s32.f32 %v3693
  %v4142 = vcvt.s32.f32 %v3694
  %v4143 = vcvt.s32.f32 %v3695
  %v4144 = vcvt.s32.f32 %v3696
  %v4145 = vcvt.s32.f32 %v3697
  %v4146 = vcvt.s32.f32 %v3698
  %v4147 = vcvt.s32.f32 %v3699
  %v4148 = vcvt.s32.f32 %v3700
  %v4149 = vcvt.s32.f32 %v3701
  %v4150 = vcvt.s32.f32 %v3702
  %v4151 = vcvt.s32.f32 %v3703
  %v4152 = vcvt.s32.f32 %v3704
  %v4153 = vcvt.s32.f32 %v3705
  %v4154 = vcvt.s32.f32 %v3706
  %v4155 = vcvt.s32.f32 %v3707
  %v4156 = vcvt.s32.f32 %v3708
  %v4157 = vcvt.s32.f32 %v3709
  %v4158 = vcvt.s32.f32 %v3710
  %v4159 = vcvt.s32.f32 %v3711
  %v4160 = vcvt.s32.f32 %v3712
  %v4161 = vcvt.s32.f32 %v3713
  %v4162 = vcvt.s32.f32 %v3714
  %v4163 = vcvt.s32.f32 %v3715
  %v4164 = vcvt.s32.f32 %v3716
  %v4165 = vcvt.s32.f32 %v3717
  %v4166 = vcvt.s32.f32 %v3718
  %v4167 = vcvt.s32.f32 %v3719
  %v4168 = vcvt.s32.f32 %v3720
  %v4169 = vcvt.s32.f32 %v3721
  %v4170 = vcvt.s32.f32 %v3722
  %v4171 = vcvt.s32.f32 %v3723
  %v4172 = vcvt.s32.f32 %v3724
  %v4173 = vcvt.s32.f32 %v3725
  %v4174 = vcvt.s32.f32 %v3726
  %v4175 = vcvt.s32.f32 %v3727
  %v4176 = vcvt.s32.f32 %v3728
  %v4177 = vcvt.s32.f32 %v3729
  %v4178 = vcvt.s32.f32 %v3730
  %v4179 = vcvt.s32.f32 %v3731
  %v4180 = vcvt.s32.f32 %v3732
  %v4181 = vcvt.s32.f32 %v3733
  %v4182 = vcvt.s32.f32 %v3734
  %v4183 = vcvt.s32.f32 %v3735
  %v4184 = vcvt.s32.f32 %v3736
  %v4185 = vcvt.s32.f32 %v3737
  %v4186 = vcvt.s32.f32 %v3738
  %v4187 = vcvt.s32.f32 %v3739
  %v4188 = vcvt.s32.f32 %v3740
  %v4189 = vcvt.s32.f32 %v3741
  %v4190 = vcvt.s32.f32 %v3742
  %v4191 = vcvt.s32.f32 %v3743
  %v4192 = vcvt.s32.f32 %v3744
  %v4193 = vcvt.s32.f32 %v3745
  %v4194 = vcvt.s32.f32 %v3746
  %v4195 = vcvt.s32.f32 %v3747
  %v4196 = vcvt.s32.f32 %v3748
  %v4197 = vcvt.s32.f32 %v3749
  %v4198 = vcvt.s32.f32 %v3750
  %v4199 = vcvt.s32.f32 %v3751
  %v4200 = vcvt.s32.f32 %v3752
  %v4201 = vcvt.s32.f32 %v3753
  %v4202 = vcvt.s32.f32 %v3754
  %v4203 = vcvt.s32.f32 %v3755
  %v4204 = vcvt.s32.f32 %v3756
  %v4205 = vcvt.s32.f32 %v3757
  %v4206 = vcvt.s32.f32 %v3758
  %v4207 = vcvt.s32.f32 %v3759
  %v4208 = vcvt.s32.f32 %v3760
  %v4209 = vcvt.s32.f32 %v3761
  %v4210 = vcvt.s32.f32 %v3762
  %v4211 = vcvt.s32.f32 %v3763
  %v4212 = vcvt.s32.f32 %v3764
  %v4213 = vcvt.s32.f32 %v3765
  %v4214 = vcvt.s32.f32 %v3766
  %v4215 = vcvt.s32.f32 %v3767
  %v4216 = vcvt.s32.f32 %v3768
  %v4217 = vcvt.s32.f32 %v3769
  %v4218 = vcvt.s32.f32 %v3770
  %v4219 = vcvt.s32.f32 %v3771
  %v4220 = vcvt.s32.f32 %v3772
  %v4221 = vcvt.s32.f32 %v3773
  %v4222 = vcvt.s32.f32 %v3774
  %v4223 = vcvt.s32.f32 %v3775
  %v4224 = vcvt.s32.f32 %v3776
  %v4225 = vcvt.s32.f32 %v3777
  %v4226 = vcvt.s32.f32 %v3778
  %v4227 = vcvt.s32.f32 %v3779
  %v4228 = vcvt.s32.f32 %v3780
  %v4229 = vcvt.s32.f32 %v3781
  %v4230 = vcvt.s32.f32 %v3782
  %v4231 = vcvt.s32.f32 %v3783
  %v4232 = vcvt.s32.f32 %v3784
  %v4233 = vcvt.s32.f32 %v3785
  %v4234 = vcvt.s32.f32 %v3786
  %v4235 = vcvt.s32.f32 %v3787
  %v4236 = vcvt.s32.f32 %v3788
  %v4237 = vcvt.s32.f32 %v3789
  %v4238 = vcvt.s32.f32 %v3790
  %v4239 = vcvt.s32.f32 %v3791
  %v4240 = vcvt.s32.f32 %v3792
  %v4241 = vcvt.s32.f32 %v3793
  %v4242 = vcvt.s32.f32 %v3794
  %v4243 = vcvt.s32.f32 %v3795
  %v4244 = vcvt.s32.f32 %v3796
  %v4245 = vcvt.s32.f32 %v3797
  %v4246 = vcvt.s32.f32 %v3798
  %v4247 = vcvt.s32.f32 %v3799
  %v4248 = vcvt.s32.f32 %v3800
  %v4249 = vcvt.s32.f32 %v3801
  %v4250 = vcvt.s32.f32 %v3802
  %v4251 = vcvt.s32.f32 %v3803
  %v4252 = vcvt.s32.f32 %v3804
  %v4253 = vcvt.s32.f32 %v3805
  %v4254 = vcvt.s32.f32 %v3806
  %v4255 = vcvt.s32.f32 %v3807
  %v4256 = vcvt.s32.f32 %v3808
  %v4257 = vcvt.s32.f32 %v3809
  %v4258 = vcvt.s32.f32 %v3810
  %v4259 = vcvt.s32.f32 %v3811
  %v4260 = vcvt.s32.f32 %v3812
  %v4261 = vcvt.s32.f32 %v3813
  %v4262 = vcvt.s32.f32 %v3814
  %v4263 = vcvt.s32.f32 %v3815
  %v4264 = vcvt.s32.f32 %v3816
  %v4265 = vcvt.s32.f32 %v3817
  %v4266 = vcvt.s32.f32 %v3818
  %v4267 = vcvt.s32.f32 %v3819
  %v4268 = vcvt.s32.f32 %v3820
  %v4269 = vcvt.s32.f32 %v3821
  %v4270 = vcvt.s32.f32 %v3822
  %v4271 = vcvt.s32.f32 %v3823
  %v4272 = vcvt.s32.f32 %v3824
  %v4273 = vcvt.s32.f32 %v3825
  %v4274 = vcvt.s32.f32 %v3826
  %v4275 = vcvt.s32.f32 %v3827
  %v4276 = vcvt.s32.f32 %v3828
  %v4277 = vcvt.s32.f32 %v3829
  %v4278 = vcvt.s32.f32 %v3830
  %v4279 = vcvt.s32.f32 %v3831
  %v4280 = vcvt.s32.f32 %v3832
  %v4281 = vcvt.s32.f32 %v3833
  %v4282 = vcvt.s32.f32 %v3834
  %v4283 = vcvt.s32.f32 %v3835
  %v4284 = vcvt.s32.f32 %v3836
  %v4285 = vcvt.s32.f32 %v3837
  %v4286 = vcvt.s32.f32 %v3838
  %v4287 = vcvt.s32.f32 %v3839
  %v4288 = vcvt.s32.f32 %v3840
  %v4289 = vcvt.s32.f32 %v3841
  %v4290 = vcvt.s32.f32 %v3842
  %v4291 = vcvt.s32.f32 %v3843
  %v4292 = vcvt.s32.f32 %v3844
  %v4293 = vcvt.s32.f32 %v3845
  %v4294 = vcvt.s32.f32 %v3846
  %v4295 = vcvt.s32.f32 %v3847
  %v4296 = vcvt.s32.f32 %v3848
  %v4297 = vcvt.s32.f32 %v3849
  %v4298 = vcvt.s32.f32 %v3850
  %v4299 = vcvt.s32.f32 %v3851
  %v4300 = vcvt.s32.f32 %v3852
  %v4301 = vcvt.s32.f32 %v3853
  %v4302 = vcvt.s32.f32 %v3854
  %v4303 = vcvt.s32.f32 %v3855
  %v4304 = vcvt.s32.f32 %v3856
  %v4305 = vcvt.s32.f32 %v3857
  %v4306 = vcvt.s32.f32 %v3858
  %v4307 = vcvt.s32.f32 %v3859
  %v4308 = vcvt.s32.f32 %v3860
  %v4309 = vcvt.s32.f32 %v3861
  %v4310 = vcvt.s32.f32 %v3862
  %v4311 = vcvt.s32.f32 %v3863
  %v4312 = vcvt.s32.f32 %v3864
  %v4313 = vcvt.s32.f32 %v3865
  %v4314 = vcvt.s32.f32 %v3866
  %v4315 = vcvt.s32.f32 %v3867
  %v4316 = vcvt.s32.f32 %v3868
  %v4317 = vcvt.s32.f32 %v3869
  %v4318 = vcvt.s32.f32 %v3870
  %v4319 = vcvt.s32.f32 %v3871
  %v4320 = vcvt.s32.f32 %v3872
  %v4321 = vcvt.s32.f32 %v3873
  %v4322 = vcvt.s32.f32 %v3874
  %v4323 = vcvt.s32.f32 %v3875
  %v4324 = vcvt.s32.f32 %v3876
  %v4325 = vcvt.s32.f32 %v3877
  %v4326 = vcvt.s32.f32 %v3878
  %v4327 = vcvt.s32.f32 %v3879
  %v4328 = vcvt.s32.f32 %v3880
  %v4329 = vcvt.s32.f32 %v3881
  %v4330 = vcvt.s32.f32 %v3882
  %v4331 = vcvt.s32.f32 %v3883
  %v4332 = vcvt.s32.f32 %v3884
  %v4333 = vcvt.s32.f32 %v3885
  %v4334 = vcvt.s32.f32 %v3886
  %v4335 = vcvt.s32.f32 %v3887
  %v4336 = vcvt.s32.f32 %v3888
  %v4337 = vcvt.s32.f32 %v3889
  %v4338 = vcvt.s32.f32 %v3890
  %v4339 = vcvt.s32.f32 %v3891
  %v4340 = vcvt.s32.f32 %v3892
  %v4341 = vcvt.s32.f32 %v3893
  %v4342 = vcvt.s32.f32 %v3894
  %v4343 = vcvt.s32.f32 %v3895
  %v4344 = vcvt.s32.f32 %v3896
  %v4345 = vcvt.s32.f32 %v3897
  %v4346 = vcvt.s32.f32 %v3898
  %v4347 = vcvt.s32.f32 %v3899
  %v4348 = vcvt.s32.f32 %v3900
  %v4349 = vcvt.s32.f32 %v3901
  %v4350 = vcvt.s32.f32 %v3902
  %v4351 = vcvt.s32.f32 %v3903
  %v4352 = vcvt.s32.f32 %v3904
  %v4353 = vcvt.s32.f32 %v3905
  %v4354 = vcvt.s32.f32 %v3906
  %v4355 = vcvt.s32.f32 %v3907
  %v4356 = vcvt.s32.f32 %v3908
  %v4357 = vcvt.s32.f32 %v3909
  %v4358 = vcvt.s32.f32 %v3910
  %v4359 = vcvt.s32.f32 %v3911
  %v4360 = vcvt.s32.f32 %v3912
  %v4361 = vcvt.s32.f32 %v3913
  %v4362 = vcvt.s32.f32 %v3914
  %v4363 = vcvt.s32.f32 %v3915
  %v4364 = vcvt.s32.f32 %v3916
  %v4365 = vcvt.s32.f32 %v3917
  %v4366 = vcvt.s32.f32 %v3918
  %v4367 = vcvt.s32.f32 %v3919
  %v4368 = vcvt.s32.f32 %v3920
  %v4369 = vcvt.s32.f32 %v3921
  %v4370 = vcvt.s32.f32 %v3922
  %v4371 = vcvt.s32.f32 %v3923
  %v4372 = vcvt.s32.f32 %v3924
  %v4373 = vcvt.s32.f32 %v3925
  %v4374 = vcvt.s32.f32 %v3926
  %v4375 = vcvt.s32.f32 %v3927
  %v4376 = vcvt.s32.f32 %v3928
  %v4377 = vcvt.s32.f32 %v3929
  %v4378 = vcvt.s32.f32 %v3930
  %v4379 = vcvt.s32.f32 %v3931
  %v4380 = vcvt.s32.f32 %v3932
  %v4381 = vcvt.s32.f32 %v3933
  %v4382 = vcvt.s32.f32 %v3934
  %v4383 = vcvt.s32.f32 %v3935
  %v4384 = vcvt.s32.f32 %v3936
  %v4385 = vcvt.s32.f32 %v3937
  %v4386 = vcvt.s32.f32 %v3938
  %v4387 = vcvt.s32.f32 %v3939
  %v4388 = vcvt.s32.f32 %v3940
  %v4389 = vcvt.s32.f32 %v3941
  %v4390 = vcvt.s32.f32 %v3942
  %v4391 = vcvt.s32.f32 %v3943
  %v4392 = vcvt.s32.f32 %v3944
  %v4393 = vcvt.s32.f32 %v3945
  %v4394 = vcvt.s32.f32 %v3946
  %v4395 = vcvt.s32.f32 %v3947
  %v4396 = vcvt.s32.f32 %v3948
  %v4397 = vcvt.s32.f32 %v3949
  %v4398 = vcvt.s32.f32 %v3950
  %v4399 = vcvt.s32.f32 %v3951
  %v4400 = vcvt.s32.f32 %v3952
  %v4401 = vcvt.s32.f32 %v3953
  %v4402 = vcvt.s32.f32 %v3954
  %v4403 = vcvt.s32.f32 %v3955
  %v4404 = vcvt.s32.f32 %v3956
  %v4405 = vcvt.s32.f32 %v3957
  %v4406 = vcvt.s32.f32 %v3958
  %v4407 = vcvt.s32.f32 %v3959
  %v4408 = vcvt.s32.f32 %v3960
  %v4409 = vcvt.s32.f32 %v3961
  %v4410 = vcvt.s32.f32 %v3962
  %v4411 = vcvt.s32.f32 %v3963
  %v4412 = vcvt.s32.f32 %v3964
  %v4413 = vcvt.s32.f32 %v3965
  %v4414 = vcvt.s32.f32 %v3966
  %v4415 = vcvt.s32.f32 %v3967
  %v4416 = vcvt.s32.f32 %v3968
  %v4417 = vcvt.s32.f32 %v3969
  %v4418 = vcvt.s32.f32 %v3970
  %v4419 = vcvt.s32.f32 %v3971
  %v4420 = vcvt.s32.f32 %v3972
  %v4421 = vcvt.s32.f32 %v3973
  %v4422 = vcvt.s32.f32 %v3974
  %v4423 = vcvt.s32.f32 %v3975
  %v4424 = vcvt.s32.f32 %v3976
  %v4425 = vcvt.s32.f32 %v3977
  %v4426 = vcvt.s32.f32 %v3978
  %v4427 = vcvt.s32.f32 %v3979
  %v4428 = vcvt.s32.f32 %v3980
  %v4429 = vcvt.s32.f32 %v3981
  %v4430 = vcvt.s32.f32 %v3982
  %v4431 = vcvt.s32.f32 %v3983
  %v4432 = vcvt.s32.f32 %v3984
  %v4433 = vcvt.s32.f32 %v3985
  %v4434 = vcvt.s32.f32 %v3986
  %v4435 = vcvt.s32.f32 %v3987
  %v4436 = vcvt.s32.f32 %v3988
  %v4437 = vcvt.s32.f32 %v3989
  %v4438 = vcvt.s32.f32 %v3990
  %v4439 = vcvt.s32.f32 %v3991
  %v4440 = vcvt.s32.f32 %v3992
  %v4441 = vcvt.s32.f32 %v3993
  %v4442 = vcvt.s32.f32 %v3994
  %v4443 = vcvt.s32.f32 %v3995
  %v4444 = vcvt.s32.f32 %v3996
  %v4445 = vcvt.s32.f32 %v3997
  %v4446 = vcvt.s32.f32 %v3998
  %v4447 = vcvt.s32.f32 %v3999
  %v4448 = vcvt.s32.f32 %v4000
  %v4449 = vcvt.s32.f32 %v4001
  %v4450 = vcvt.s32.f32 %v4002
  %v4451 = vcvt.s32.f32 %v4003
  %v4452 = vcvt.s32.f32 %v4004
  %v4453 = vcvt.s32.f32 %v4005
  %v4454 = vcvt.s32.f32 %v4006
  %v4455 = vcvt.s32.f32 %v4007
  %v4456 = vcvt.s32.f32 %v4008
  %v4457 = vcvt.s32.f32 %v4009
  %v4458 = vcvt.s32.f32 %v4010
  %v4459 = vcvt.s32.f32 %v4011
  %v4460 = vcvt.s32.f32 %v4012
  %v4461 = vcvt.s32.f32 %v4013
  %v4462 = vcvt.s32.f32 %v4014
  %v4463 = vcvt.s32.f32 %v4015
  %v4464 = vcvt.s32.f32 %v4016
  %v4465 = vcvt.s32.f32 %v4017
  %v4466 = vcvt.s32.f32 %v4018
  %v4467 = vcvt.s32.f32 %v4019
  %v4468 = vcvt.s32.f32 %v4020
  %v4469 = vcvt.s32.f32 %v4021
  %v4470 = vcvt.s32.f32 %v4022
  %v4471 = vcvt.s32.f32 %v4023
  %v4472 = vcvt.s32.f32 %v4024
  %v4473 = vcvt.s32.f32 %v4025
  %v4474 = vcvt.s32.f32 %v4026
  %v4475 = vcvt.s32.f32 %v4027
  %v4476 = vcvt.s32.f32 %v4028
  %v4477 = vcvt.s32.f32 %v4029
  %v4478 = vcvt.s32.f32 %v4030
  %v4479 = vcvt.s32.f32 %v4031
  %v4480 = vcvt.s32.f32 %v4032
  %v4481 = vcvt.s32.f32 %v4033
  %v4482 = vcvt.s32.f32 %v4034
  %v4483 = vcvt.s32.f32 %v4035
  %v4484 = vcvt.s32.f32 %v4036
  %v4485 = vcvt.s32.f32 %v4037
  %v4486 = vcvt.s32.f32 %v4038
  %v4487 = vcvt.s32.f32 %v4039
  %v4488 = vcvt.s32.f32 %v4040
  %v4489 = vcvt.s32.f32 %v4041
  %v4490 = vcvt.s32.f32 %v4042
  %v4491 = vcvt.s32.f32 %v4043
  %v4492 = vcvt.s32.f32 %v4044
  %v4493 = vcvt.s32.f32 %v4045
  %v4494 = vcvt.s32.f32 %v4046
  %v4495 = vcvt.s32.f32 %v4047
  %v4496 = vcvt.s32.f32 %v4048
  %v4497 = vcvt.s32.f32 %v4049
  %v4498 = vcvt.s32.f32 %v4050
  %v4499 = vcvt.s32.f32 %v4051
  %v4500 = vcvt.s32.f32 %v4052
  %v4501 = vcvt.s32.f32 %v4053
  %v4502 = vcvt.s32.f32 %v4054
  %v4503 = vcvt.s32.f32 %v4055
  %v4504 = vcvt.s32.f32 %v4056
  %v4505 = vcvt.s32.f32 %v4057
  %v4506 = vcvt.s32.f32 %v4058
  %v4507 = vcvt.s32.f32 %v4059
  %v4508 = vcvt.s32.f32 %v4060
  %v4509 = vcvt.s32.f32 %v4061
  %v4510 = vcvt.s32.f32 %v4062
  %v4511 = vcvt.s32.f32 %v4063
  %v4512 = vcvt.s32.f32 %v4064
  %v4513 = vcvt.s32.f32 %v4065
  %v4514 = vcvt.s32.f32 %v4066
  %v4515 = vcvt.s32.f32 %v4067
  %v4516 = vcvt.s32.f32 %v4068
  %v4517 = vcvt.s32.f32 %v4069
  %v4518 = vcvt.s32.f32 %v4070
  %v4519 = vcvt.s32.f32 %v4071
  %v4520 = vcvt.s32.f32 %v4072
  %v4521 = vcvt.s32.f32 %v4073
  %v4522 = vcvt.s32.f32 %v4074
  %v4523 = vcvt.s32.f32 %v4075
  %v4524 = vcvt.s32.f32 %v4076
  %v4525 = vcvt.s32.f32 %v4077
  %v4526 = vcvt.s32.f32 %v4078
  %v4527 = vcvt.s32.f32 %v4079
  %v4528 = vcvt.s32.f32 %v4080
  %v4529 = vcvt.s32.f32 %v4081
  %v4530 = vcvt.s32.f32 %v4082
  %v4531 = vcvt.s32.f32 %v4083
  %v4532 = vcvt.s32.f32 %v4084
  %v4533 = vcvt.s32.f32 %v4085
  %v4534 = vcvt.s32.f32 %v4086
  %v4535 = vcvt.s32.f32 %v4087
  %v4536 = vcvt.s32.f32 %v4088
  %v4537 = vcvt.s32.f32 %v4089
  %v4538 = vcvt.s32.f32 %v4090
  %v4539 = vcvt.s32.f32 %v4091
  %v4540 = vcvt.s32.f32 %v4092
  %v4541 = vcvt.s32.f32 %v4093
  %v4542 = vcvt.s32.f32 %v4094
  %v4543 = vcvt.s32.f32 %v4095
  %v4544 = vcvt.s32.f32 %v4096
  %v4545 = vcvt.s32.f32 %v4097
  %v4546 = vcvt.s32.f32 %v4098
  %v4547 = vcvt.s32.f32 %v4099
  %v4548 = vcvt.s32.f32 %v4100
  %v4549 = vcvt.s32.f32 %v4101
  %v4550 = vcvt.s32.f32 %v4102
  %v4551 = vcvt.s32.f32 %v4103
  %v4552 = vcvt.s32.f32 %v4104
  %v4553 = vcvt.s32.f32 %v4105
  %v4554 = vcvt.s32.f32 %v4106
  %v4555 = vcvt.s32.f32 %v4107
  %v4556 = vcvt.s32.f32 %v4108
  %v4557 = vcvt.s32.f32 %v4109
  %v4558 = vcvt.s32.f32 %v4110
  %v4559 = vcvt.s32.f32 %v4111
  %v4560 = vcvt.s32.f32 %v4112
  %v4561 = vpack.c.bf16 %v4120, %v4113
  %v4562 = vpack.c.bf16 %v4121, %v4114
  %v4563 = vpack.c.bf16 %v4122, %v4115
  %v4564 = vpack.c.bf16 %v4123, %v4116
  %v4565 = vpack.c.bf16 %v4124, %v4117
  %v4566 = vpack.c.bf16 %v4125, %v4118
  %v4567 = vpack.c.bf16 %v4126, %v4119
  %v4568 = vpack.c.bf16 %v4134, %v4127
  %v4569 = vpack.c.bf16 %v4135, %v4128
  %v4570 = vpack.c.bf16 %v4136, %v4129
  %v4571 = vpack.c.bf16 %v4137, %v4130
  %v4572 = vpack.c.bf16 %v4138, %v4131
  %v4573 = vpack.c.bf16 %v4139, %v4132
  %v4574 = vpack.c.bf16 %v4140, %v4133
  %v4575 = vpack.c.bf16 %v4148, %v4141
  %v4576 = vpack.c.bf16 %v4149, %v4142
  %v4577 = vpack.c.bf16 %v4150, %v4143
  %v4578 = vpack.c.bf16 %v4151, %v4144
  %v4579 = vpack.c.bf16 %v4152, %v4145
  %v4580 = vpack.c.bf16 %v4153, %v4146
  %v4581 = vpack.c.bf16 %v4154, %v4147
  %v4582 = vpack.c.bf16 %v4162, %v4155
  %v4583 = vpack.c.bf16 %v4163, %v4156
  %v4584 = vpack.c.bf16 %v4164, %v4157
  %v4585 = vpack.c.bf16 %v4165, %v4158
  %v4586 = vpack.c.bf16 %v4166, %v4159
  %v4587 = vpack.c.bf16 %v4167, %v4160
  %v4588 = vpack.c.bf16 %v4168, %v4161
  %v4589 = vpack.c.bf16 %v4176, %v4169
  %v4590 = vpack.c.bf16 %v4177, %v4170
  %v4591 = vpack.c.bf16 %v4178, %v4171
  %v4592 = vpack.c.bf16 %v4179, %v4172
  %v4593 = vpack.c.bf16 %v4180, %v4173
  %v4594 = vpack.c.bf16 %v4181, %v4174
  %v4595 = vpack.c.bf16 %v4182, %v4175
  %v4596 = vpack.c.bf16 %v4190, %v4183
  %v4597 = vpack.c.bf16 %v4191, %v4184
  %v4598 = vpack.c.bf16 %v4192, %v4185
  %v4599 = vpack.c.bf16 %v4193, %v4186
  %v4600 = vpack.c.bf16 %v4194, %v4187
  %v4601 = vpack.c.bf16 %v4195, %v4188
  %v4602 = vpack.c.bf16 %v4196, %v4189
  %v4603 = vpack.c.bf16 %v4204, %v4197
  %v4604 = vpack.c.bf16 %v4205, %v4198
  %v4605 = vpack.c.bf16 %v4206, %v4199
  %v4606 = vpack.c.bf16 %v4207, %v4200
  %v4607 = vpack.c.bf16 %v4208, %v4201
  %v4608 = vpack.c.bf16 %v4209, %v4202
  %v4609 = vpack.c.bf16 %v4210, %v4203
  %v4610 = vpack.c.bf16 %v4218, %v4211
  %v4611 = vpack.c.bf16 %v4219, %v4212
  %v4612 = vpack.c.bf16 %v4220, %v4213
  %v4613 = vpack.c.bf16 %v4221, %v4214
  %v4614 = vpack.c.bf16 %v4222, %v4215
  %v4615 = vpack.c.bf16 %v4223, %v4216
  %v4616 = vpack.c.bf16 %v4224, %v4217
  %v4617 = vpack.c.bf16 %v4232, %v4225
  %v4618 = vpack.c.bf16 %v4233, %v4226
  %v4619 = vpack.c.bf16 %v4234, %v4227
  %v4620 = vpack.c.bf16 %v4235, %v4228
  %v4621 = vpack.c.bf16 %v4236, %v4229
  %v4622 = vpack.c.bf16 %v4237, %v4230
  %v4623 = vpack.c.bf16 %v4238, %v4231
  %v4624 = vpack.c.bf16 %v4246, %v4239
  %v4625 = vpack.c.bf16 %v4247, %v4240
  %v4626 = vpack.c.bf16 %v4248, %v4241
  %v4627 = vpack.c.bf16 %v4249, %v4242
  %v4628 = vpack.c.bf16 %v4250, %v4243
  %v4629 = vpack.c.bf16 %v4251, %v4244
  %v4630 = vpack.c.bf16 %v4252, %v4245
  %v4631 = vpack.c.bf16 %v4260, %v4253
  %v4632 = vpack.c.bf16 %v4261, %v4254
  %v4633 = vpack.c.bf16 %v4262, %v4255
  %v4634 = vpack.c.bf16 %v4263, %v4256
  %v4635 = vpack.c.bf16 %v4264, %v4257
  %v4636 = vpack.c.bf16 %v4265, %v4258
  %v4637 = vpack.c.bf16 %v4266, %v4259
  %v4638 = vpack.c.bf16 %v4274, %v4267
  %v4639 = vpack.c.bf16 %v4275, %v4268
  %v4640 = vpack.c.bf16 %v4276, %v4269
  %v4641 = vpack.c.bf16 %v4277, %v4270
  %v4642 = vpack.c.bf16 %v4278, %v4271
  %v4643 = vpack.c.bf16 %v4279, %v4272
  %v4644 = vpack.c.bf16 %v4280, %v4273
  %v4645 = vpack.c.bf16 %v4288, %v4281
  %v4646 = vpack.c.bf16 %v4289, %v4282
  %v4647 = vpack.c.bf16 %v4290, %v4283
  %v4648 = vpack.c.bf16 %v4291, %v4284
  %v4649 = vpack.c.bf16 %v4292, %v4285
  %v4650 = vpack.c.bf16 %v4293, %v4286
  %v4651 = vpack.c.bf16 %v4294, %v4287
  %v4652 = vpack.c.bf16 %v4302, %v4295
  %v4653 = vpack.c.bf16 %v4303, %v4296
  %v4654 = vpack.c.bf16 %v4304, %v4297
  %v4655 = vpack.c.bf16 %v4305, %v4298
  %v4656 = vpack.c.bf16 %v4306, %v4299
  %v4657 = vpack.c.bf16 %v4307, %v4300
  %v4658 = vpack.c.bf16 %v4308, %v4301
  %v4659 = vpack.c.bf16 %v4316, %v4309
  %v4660 = vpack.c.bf16 %v4317, %v4310
  %v4661 = vpack.c.bf16 %v4318, %v4311
  %v4662 = vpack.c.bf16 %v4319, %v4312
  %v4663 = vpack.c.bf16 %v4320, %v4313
  %v4664 = vpack.c.bf16 %v4321, %v4314
  %v4665 = vpack.c.bf16 %v4322, %v4315
  %v4666 = vpack.c.bf16 %v4330, %v4323
  %v4667 = vpack.c.bf16 %v4331, %v4324
  %v4668 = vpack.c.bf16 %v4332, %v4325
  %v4669 = vpack.c.bf16 %v4333, %v4326
  %v4670 = vpack.c.bf16 %v4334, %v4327
  %v4671 = vpack.c.bf16 %v4335, %v4328
  %v4672 = vpack.c.bf16 %v4336, %v4329
  %v4673 = vpack.c.bf16 %v4344, %v4337
  %v4674 = vpack.c.bf16 %v4345, %v4338
  %v4675 = vpack.c.bf16 %v4346, %v4339
  %v4676 = vpack.c.bf16 %v4347, %v4340
  %v4677 = vpack.c.bf16 %v4348, %v4341
  %v4678 = vpack.c.bf16 %v4349, %v4342
  %v4679 = vpack.c.bf16 %v4350, %v4343
  %v4680 = vpack.c.bf16 %v4358, %v4351
  %v4681 = vpack.c.bf16 %v4359, %v4352
  %v4682 = vpack.c.bf16 %v4360, %v4353
  %v4683 = vpack.c.bf16 %v4361, %v4354
  %v4684 = vpack.c.bf16 %v4362, %v4355
  %v4685 = vpack.c.bf16 %v4363, %v4356
  %v4686 = vpack.c.bf16 %v4364, %v4357
  %v4687 = vpack.c.bf16 %v4372, %v4365
  %v4688 = vpack.c.bf16 %v4373, %v4366
  %v4689 = vpack.c.bf16 %v4374, %v4367
  %v4690 = vpack.c.bf16 %v4375, %v4368
  %v4691 = vpack.c.bf16 %v4376, %v4369
  %v4692 = vpack.c.bf16 %v4377, %v4370
  %v4693 = vpack.c.bf16 %v4378, %v4371
  %v4694 = vpack.c.bf16 %v4386, %v4379
  %v4695 = vpack.c.bf16 %v4387, %v4380
  %v4696 = vpack.c.bf16 %v4388, %v4381
  %v4697 = vpack.c.bf16 %v4389, %v4382
  %v4698 = vpack.c.bf16 %v4390, %v4383
  %v4699 = vpack.c.bf16 %v4391, %v4384
  %v4700 = vpack.c.bf16 %v4392, %v4385
  %v4701 = vpack.c.bf16 %v4400, %v4393
  %v4702 = vpack.c.bf16 %v4401, %v4394
  %v4703 = vpack.c.bf16 %v4402, %v4395
  %v4704 = vpack.c.bf16 %v4403, %v4396
  %v4705 = vpack.c.bf16 %v4404, %v4397
  %v4706 = vpack.c.bf16 %v4405, %v4398
  %v4707 = vpack.c.bf16 %v4406, %v4399
  %v4708 = vpack.c.bf16 %v4414, %v4407
  %v4709 = vpack.c.bf16 %v4415, %v4408
  %v4710 = vpack.c.bf16 %v4416, %v4409
  %v4711 = vpack.c.bf16 %v4417, %v4410
  %v4712 = vpack.c.bf16 %v4418, %v4411
  %v4713 = vpack.c.bf16 %v4419, %v4412
  %v4714 = vpack.c.bf16 %v4420, %v4413
  %v4715 = vpack.c.bf16 %v4428, %v4421
  %v4716 = vpack.c.bf16 %v4429, %v4422
  %v4717 = vpack.c.bf16 %v4430, %v4423
  %v4718 = vpack.c.bf16 %v4431, %v4424
  %v4719 = vpack.c.bf16 %v4432, %v4425
  %v4720 = vpack.c.bf16 %v4433, %v4426
  %v4721 = vpack.c.bf16 %v4434, %v4427
  %v4722 = vpack.c.bf16 %v4442, %v4435
  %v4723 = vpack.c.bf16 %v4443, %v4436
  %v4724 = vpack.c.bf16 %v4444, %v4437
  %v4725 = vpack.c.bf16 %v4445, %v4438
  %v4726 = vpack.c.bf16 %v4446, %v4439
  %v4727 = vpack.c.bf16 %v4447, %v4440
  %v4728 = vpack.c.bf16 %v4448, %v4441
  %v4729 = vpack.c.bf16 %v4456, %v4449
  %v4730 = vpack.c.bf16 %v4457, %v4450
  %v4731 = vpack.c.bf16 %v4458, %v4451
  %v4732 = vpack.c.bf16 %v4459, %v4452
  %v4733 = vpack.c.bf16 %v4460, %v4453
  %v4734 = vpack.c.bf16 %v4461, %v4454
  %v4735 = vpack.c.bf16 %v4462, %v4455
  %v4736 = vpack.c.bf16 %v4470, %v4463
  %v4737 = vpack.c.bf16 %v4471, %v4464
  %v4738 = vpack.c.bf16 %v4472, %v4465
  %v4739 = vpack.c.bf16 %v4473, %v4466
  %v4740 = vpack.c.bf16 %v4474, %v4467
  %v4741 = vpack.c.bf16 %v4475, %v4468
  %v4742 = vpack.c.bf16 %v4476, %v4469
  %v4743 = vpack.c.bf16 %v4484, %v4477
  %v4744 = vpack.c.bf16 %v4485, %v4478
  %v4745 = vpack.c.bf16 %v4486, %v4479
  %v4746 = vpack.c.bf16 %v4487, %v4480
  %v4747 = vpack.c.bf16 %v4488, %v4481
  %v4748 = vpack.c.bf16 %v4489, %v4482
  %v4749 = vpack.c.bf16 %v4490, %v4483
  %v4750 = vpack.c.bf16 %v4498, %v4491
  %v4751 = vpack.c.bf16 %v4499, %v4492
  %v4752 = vpack.c.bf16 %v4500, %v4493
  %v4753 = vpack.c.bf16 %v4501, %v4494
  %v4754 = vpack.c.bf16 %v4502, %v4495
  %v4755 = vpack.c.bf16 %v4503, %v4496
  %v4756 = vpack.c.bf16 %v4504, %v4497
  %v4757 = vpack.c.bf16 %v4512, %v4505
  %v4758 = vpack.c.bf16 %v4513, %v4506
  %v4759 = vpack.c.bf16 %v4514, %v4507
  %v4760 = vpack.c.bf16 %v4515, %v4508
  %v4761 = vpack.c.bf16 %v4516, %v4509
  %v4762 = vpack.c.bf16 %v4517, %v4510
  %v4763 = vpack.c.bf16 %v4518, %v4511
  %v4764 = vpack.c.bf16 %v4526, %v4519
  %v4765 = vpack.c.bf16 %v4527, %v4520
  %v4766 = vpack.c.bf16 %v4528, %v4521
  %v4767 = vpack.c.bf16 %v4529, %v4522
  %v4768 = vpack.c.bf16 %v4530, %v4523
  %v4769 = vpack.c.bf16 %v4531, %v4524
  %v4770 = vpack.c.bf16 %v4532, %v4525
  %v4771 = vpack.c.bf16 %v4540, %v4533
  %v4772 = vpack.c.bf16 %v4541, %v4534
  %v4773 = vpack.c.bf16 %v4542, %v4535
  %v4774 = vpack.c.bf16 %v4543, %v4536
  %v4775 = vpack.c.bf16 %v4544, %v4537
  %v4776 = vpack.c.bf16 %v4545, %v4538
  %v4777 = vpack.c.bf16 %v4546, %v4539
  %v4778 = vpack.c.bf16 %v4554, %v4547
  %v4779 = vpack.c.bf16 %v4555, %v4548
  %v4780 = vpack.c.bf16 %v4556, %v4549
  %v4781 = vpack.c.bf16 %v4557, %v4550
  %v4782 = vpack.c.bf16 %v4558, %v4551
  %v4783 = vpack.c.bf16 %v4559, %v4552
  %v4784 = vpack.c.bf16 %v4560, %v4553
  %4785 = vmatpush.bf16.msra.mxu0 %v4610
  %4786 = vmatpush.bf16.msra.mxu0 %v4603
  %4787 = vmatpush.bf16.msra.mxu0 %v4596
  %4788 = vmatpush.bf16.msra.mxu0 %v4589
  %4789 = vmatpush.bf16.msra.mxu0 %v4582
  %4790 = vmatpush.bf16.msra.mxu0 %v4575
  %4791 = vmatpush.bf16.msra.mxu0 %v4568
  %4792 = vmatpush.bf16.msra.mxu0 %v4561
  %4793 = vmatmul.bf16.gmra.mxu0 %v3549
  %v4794 = vpop.f32.mrf.mxu0
  %v4795 = vadd.f32 0.0, %v4794
  %v4796 = vpop.f32.mrf.mxu0
  %4797 = vdwg.mxu0
  %4798 = vmatpush.bf16.msra.mxu0 %v4666
  %4799 = vmatpush.bf16.msra.mxu0 %v4659
  %4800 = vmatpush.bf16.msra.mxu0 %v4652
  %4801 = vmatpush.bf16.msra.mxu0 %v4645
  %4802 = vmatpush.bf16.msra.mxu0 %v4638
  %4803 = vmatpush.bf16.msra.mxu0 %v4631
  %4804 = vmatpush.bf16.msra.mxu0 %v4624
  %4805 = vmatpush.bf16.msra.mxu0 %v4617
  %4806 = vmatmul.bf16.gmra.mxu0 %v3550
  %v4807 = vpop.f32.mrf.mxu0
  %v4808 = vadd.f32 %v4795, %v4807
  %v4809 = vpop.f32.mrf.mxu0
  %4810 = vdwg.mxu0
  %4811 = vmatpush.bf16.msra.mxu0 %v4722
  %4812 = vmatpush.bf16.msra.mxu0 %v4715
  %4813 = vmatpush.bf16.msra.mxu0 %v4708
  %4814 = vmatpush.bf16.msra.mxu0 %v4701
  %4815 = vmatpush.bf16.msra.mxu0 %v4694
  %4816 = vmatpush.bf16.msra.mxu0 %v4687
  %4817 = vmatpush.bf16.msra.mxu0 %v4680
  %4818 = vmatpush.bf16.msra.mxu0 %v4673
  %4819 = vmatmul.bf16.gmra.mxu0 %v3551
  %v4820 = vpop.f32.mrf.mxu0
  %v4821 = vadd.f32 %v4808, %v4820
  %v4822 = vpop.f32.mrf.mxu0
  %4823 = vdwg.mxu0
  %4824 = vmatpush.bf16.msra.mxu0 %v4778
  %4825 = vmatpush.bf16.msra.mxu0 %v4771
  %4826 = vmatpush.bf16.msra.mxu0 %v4764
  %4827 = vmatpush.bf16.msra.mxu0 %v4757
  %4828 = vmatpush.bf16.msra.mxu0 %v4750
  %4829 = vmatpush.bf16.msra.mxu0 %v4743
  %4830 = vmatpush.bf16.msra.mxu0 %v4736
  %4831 = vmatpush.bf16.msra.mxu0 %v4729
  %4832 = vmatmul.bf16.gmra.mxu0 %v3552
  %v4833 = vpop.f32.mrf.mxu0
  %v4834 = vadd.f32 %v4821, %v4833
  %v4835 = vpop.f32.mrf.mxu0
  %4836 = vdwg.mxu0
  %4837 = vmatpush.bf16.msra.mxu0 %v4611
  %4838 = vmatpush.bf16.msra.mxu0 %v4604
  %4839 = vmatpush.bf16.msra.mxu0 %v4597
  %4840 = vmatpush.bf16.msra.mxu0 %v4590
  %4841 = vmatpush.bf16.msra.mxu0 %v4583
  %4842 = vmatpush.bf16.msra.mxu0 %v4576
  %4843 = vmatpush.bf16.msra.mxu0 %v4569
  %4844 = vmatpush.bf16.msra.mxu0 %v4562
  %4845 = vmatmul.bf16.gmra.mxu0 %v3549
  %v4846 = vpop.f32.mrf.mxu0
  %v4847 = vadd.f32 0.0, %v4846
  %v4848 = vpop.f32.mrf.mxu0
  %4849 = vdwg.mxu0
  %4850 = vmatpush.bf16.msra.mxu0 %v4667
  %4851 = vmatpush.bf16.msra.mxu0 %v4660
  %4852 = vmatpush.bf16.msra.mxu0 %v4653
  %4853 = vmatpush.bf16.msra.mxu0 %v4646
  %4854 = vmatpush.bf16.msra.mxu0 %v4639
  %4855 = vmatpush.bf16.msra.mxu0 %v4632
  %4856 = vmatpush.bf16.msra.mxu0 %v4625
  %4857 = vmatpush.bf16.msra.mxu0 %v4618
  %4858 = vmatmul.bf16.gmra.mxu0 %v3550
  %v4859 = vpop.f32.mrf.mxu0
  %v4860 = vadd.f32 %v4847, %v4859
  %v4861 = vpop.f32.mrf.mxu0
  %4862 = vdwg.mxu0
  %4863 = vmatpush.bf16.msra.mxu0 %v4723
  %4864 = vmatpush.bf16.msra.mxu0 %v4716
  %4865 = vmatpush.bf16.msra.mxu0 %v4709
  %4866 = vmatpush.bf16.msra.mxu0 %v4702
  %4867 = vmatpush.bf16.msra.mxu0 %v4695
  %4868 = vmatpush.bf16.msra.mxu0 %v4688
  %4869 = vmatpush.bf16.msra.mxu0 %v4681
  %4870 = vmatpush.bf16.msra.mxu0 %v4674
  %4871 = vmatmul.bf16.gmra.mxu0 %v3551
  %v4872 = vpop.f32.mrf.mxu0
  %v4873 = vadd.f32 %v4860, %v4872
  %v4874 = vpop.f32.mrf.mxu0
  %4875 = vdwg.mxu0
  %4876 = vmatpush.bf16.msra.mxu0 %v4779
  %4877 = vmatpush.bf16.msra.mxu0 %v4772
  %4878 = vmatpush.bf16.msra.mxu0 %v4765
  %4879 = vmatpush.bf16.msra.mxu0 %v4758
  %4880 = vmatpush.bf16.msra.mxu0 %v4751
  %4881 = vmatpush.bf16.msra.mxu0 %v4744
  %4882 = vmatpush.bf16.msra.mxu0 %v4737
  %4883 = vmatpush.bf16.msra.mxu0 %v4730
  %4884 = vmatmul.bf16.gmra.mxu0 %v3552
  %v4885 = vpop.f32.mrf.mxu0
  %v4886 = vadd.f32 %v4873, %v4885
  %v4887 = vpop.f32.mrf.mxu0
  %4888 = vdwg.mxu0
  %4889 = vmatpush.bf16.msra.mxu0 %v4612
  %4890 = vmatpush.bf16.msra.mxu0 %v4605
  %4891 = vmatpush.bf16.msra.mxu0 %v4598
  %4892 = vmatpush.bf16.msra.mxu0 %v4591
  %4893 = vmatpush.bf16.msra.mxu0 %v4584
  %4894 = vmatpush.bf16.msra.mxu0 %v4577
  %4895 = vmatpush.bf16.msra.mxu0 %v4570
  %4896 = vmatpush.bf16.msra.mxu0 %v4563
  %4897 = vmatmul.bf16.gmra.mxu0 %v3549
  %v4898 = vpop.f32.mrf.mxu0
  %v4899 = vadd.f32 0.0, %v4898
  %v4900 = vpop.f32.mrf.mxu0
  %4901 = vdwg.mxu0
  %4902 = vmatpush.bf16.msra.mxu0 %v4668
  %4903 = vmatpush.bf16.msra.mxu0 %v4661
  %4904 = vmatpush.bf16.msra.mxu0 %v4654
  %4905 = vmatpush.bf16.msra.mxu0 %v4647
  %4906 = vmatpush.bf16.msra.mxu0 %v4640
  %4907 = vmatpush.bf16.msra.mxu0 %v4633
  %4908 = vmatpush.bf16.msra.mxu0 %v4626
  %4909 = vmatpush.bf16.msra.mxu0 %v4619
  %4910 = vmatmul.bf16.gmra.mxu0 %v3550
  %v4911 = vpop.f32.mrf.mxu0
  %v4912 = vadd.f32 %v4899, %v4911
  %v4913 = vpop.f32.mrf.mxu0
  %4914 = vdwg.mxu0
  %4915 = vmatpush.bf16.msra.mxu0 %v4724
  %4916 = vmatpush.bf16.msra.mxu0 %v4717
  %4917 = vmatpush.bf16.msra.mxu0 %v4710
  %4918 = vmatpush.bf16.msra.mxu0 %v4703
  %4919 = vmatpush.bf16.msra.mxu0 %v4696
  %4920 = vmatpush.bf16.msra.mxu0 %v4689
  %4921 = vmatpush.bf16.msra.mxu0 %v4682
  %4922 = vmatpush.bf16.msra.mxu0 %v4675
  %4923 = vmatmul.bf16.gmra.mxu0 %v3551
  %v4924 = vpop.f32.mrf.mxu0
  %v4925 = vadd.f32 %v4912, %v4924
  %v4926 = vpop.f32.mrf.mxu0
  %4927 = vdwg.mxu0
  %4928 = vmatpush.bf16.msra.mxu0 %v4780
  %4929 = vmatpush.bf16.msra.mxu0 %v4773
  %4930 = vmatpush.bf16.msra.mxu0 %v4766
  %4931 = vmatpush.bf16.msra.mxu0 %v4759
  %4932 = vmatpush.bf16.msra.mxu0 %v4752
  %4933 = vmatpush.bf16.msra.mxu0 %v4745
  %4934 = vmatpush.bf16.msra.mxu0 %v4738
  %4935 = vmatpush.bf16.msra.mxu0 %v4731
  %4936 = vmatmul.bf16.gmra.mxu0 %v3552
  %v4937 = vpop.f32.mrf.mxu0
  %v4938 = vadd.f32 %v4925, %v4937
  %v4939 = vpop.f32.mrf.mxu0
  %4940 = vdwg.mxu0
  %4941 = vmatpush.bf16.msra.mxu0 %v4613
  %4942 = vmatpush.bf16.msra.mxu0 %v4606
  %4943 = vmatpush.bf16.msra.mxu0 %v4599
  %4944 = vmatpush.bf16.msra.mxu0 %v4592
  %4945 = vmatpush.bf16.msra.mxu0 %v4585
  %4946 = vmatpush.bf16.msra.mxu0 %v4578
  %4947 = vmatpush.bf16.msra.mxu0 %v4571
  %4948 = vmatpush.bf16.msra.mxu0 %v4564
  %4949 = vmatmul.bf16.gmra.mxu0 %v3549
  %v4950 = vpop.f32.mrf.mxu0
  %v4951 = vadd.f32 0.0, %v4950
  %v4952 = vpop.f32.mrf.mxu0
  %4953 = vdwg.mxu0
  %4954 = vmatpush.bf16.msra.mxu0 %v4669
  %4955 = vmatpush.bf16.msra.mxu0 %v4662
  %4956 = vmatpush.bf16.msra.mxu0 %v4655
  %4957 = vmatpush.bf16.msra.mxu0 %v4648
  %4958 = vmatpush.bf16.msra.mxu0 %v4641
  %4959 = vmatpush.bf16.msra.mxu0 %v4634
  %4960 = vmatpush.bf16.msra.mxu0 %v4627
  %4961 = vmatpush.bf16.msra.mxu0 %v4620
  %4962 = vmatmul.bf16.gmra.mxu0 %v3550
  %v4963 = vpop.f32.mrf.mxu0
  %v4964 = vadd.f32 %v4951, %v4963
  %v4965 = vpop.f32.mrf.mxu0
  %4966 = vdwg.mxu0
  %4967 = vmatpush.bf16.msra.mxu0 %v4725
  %4968 = vmatpush.bf16.msra.mxu0 %v4718
  %4969 = vmatpush.bf16.msra.mxu0 %v4711
  %4970 = vmatpush.bf16.msra.mxu0 %v4704
  %4971 = vmatpush.bf16.msra.mxu0 %v4697
  %4972 = vmatpush.bf16.msra.mxu0 %v4690
  %4973 = vmatpush.bf16.msra.mxu0 %v4683
  %4974 = vmatpush.bf16.msra.mxu0 %v4676
  %4975 = vmatmul.bf16.gmra.mxu0 %v3551
  %v4976 = vpop.f32.mrf.mxu0
  %v4977 = vadd.f32 %v4964, %v4976
  %v4978 = vpop.f32.mrf.mxu0
  %4979 = vdwg.mxu0
  %4980 = vmatpush.bf16.msra.mxu0 %v4781
  %4981 = vmatpush.bf16.msra.mxu0 %v4774
  %4982 = vmatpush.bf16.msra.mxu0 %v4767
  %4983 = vmatpush.bf16.msra.mxu0 %v4760
  %4984 = vmatpush.bf16.msra.mxu0 %v4753
  %4985 = vmatpush.bf16.msra.mxu0 %v4746
  %4986 = vmatpush.bf16.msra.mxu0 %v4739
  %4987 = vmatpush.bf16.msra.mxu0 %v4732
  %4988 = vmatmul.bf16.gmra.mxu0 %v3552
  %v4989 = vpop.f32.mrf.mxu0
  %v4990 = vadd.f32 %v4977, %v4989
  %v4991 = vpop.f32.mrf.mxu0
  %4992 = vdwg.mxu0
  %4993 = vmatpush.bf16.msra.mxu0 %v4614
  %4994 = vmatpush.bf16.msra.mxu0 %v4607
  %4995 = vmatpush.bf16.msra.mxu0 %v4600
  %4996 = vmatpush.bf16.msra.mxu0 %v4593
  %4997 = vmatpush.bf16.msra.mxu0 %v4586
  %4998 = vmatpush.bf16.msra.mxu0 %v4579
  %4999 = vmatpush.bf16.msra.mxu0 %v4572
  %5000 = vmatpush.bf16.msra.mxu0 %v4565
  %5001 = vmatmul.bf16.gmra.mxu0 %v3549
  %v5002 = vpop.f32.mrf.mxu0
  %v5003 = vadd.f32 0.0, %v5002
  %v5004 = vpop.f32.mrf.mxu0
  %5005 = vdwg.mxu0
  %5006 = vmatpush.bf16.msra.mxu0 %v4670
  %5007 = vmatpush.bf16.msra.mxu0 %v4663
  %5008 = vmatpush.bf16.msra.mxu0 %v4656
  %5009 = vmatpush.bf16.msra.mxu0 %v4649
  %5010 = vmatpush.bf16.msra.mxu0 %v4642
  %5011 = vmatpush.bf16.msra.mxu0 %v4635
  %5012 = vmatpush.bf16.msra.mxu0 %v4628
  %5013 = vmatpush.bf16.msra.mxu0 %v4621
  %5014 = vmatmul.bf16.gmra.mxu0 %v3550
  %v5015 = vpop.f32.mrf.mxu0
  %v5016 = vadd.f32 %v5003, %v5015
  %v5017 = vpop.f32.mrf.mxu0
  %5018 = vdwg.mxu0
  %5019 = vmatpush.bf16.msra.mxu0 %v4726
  %5020 = vmatpush.bf16.msra.mxu0 %v4719
  %5021 = vmatpush.bf16.msra.mxu0 %v4712
  %5022 = vmatpush.bf16.msra.mxu0 %v4705
  %5023 = vmatpush.bf16.msra.mxu0 %v4698
  %5024 = vmatpush.bf16.msra.mxu0 %v4691
  %5025 = vmatpush.bf16.msra.mxu0 %v4684
  %5026 = vmatpush.bf16.msra.mxu0 %v4677
  %5027 = vmatmul.bf16.gmra.mxu0 %v3551
  %v5028 = vpop.f32.mrf.mxu0
  %v5029 = vadd.f32 %v5016, %v5028
  %v5030 = vpop.f32.mrf.mxu0
  %5031 = vdwg.mxu0
  %5032 = vmatpush.bf16.msra.mxu0 %v4782
  %5033 = vmatpush.bf16.msra.mxu0 %v4775
  %5034 = vmatpush.bf16.msra.mxu0 %v4768
  %5035 = vmatpush.bf16.msra.mxu0 %v4761
  %5036 = vmatpush.bf16.msra.mxu0 %v4754
  %5037 = vmatpush.bf16.msra.mxu0 %v4747
  %5038 = vmatpush.bf16.msra.mxu0 %v4740
  %5039 = vmatpush.bf16.msra.mxu0 %v4733
  %5040 = vmatmul.bf16.gmra.mxu0 %v3552
  %v5041 = vpop.f32.mrf.mxu0
  %v5042 = vadd.f32 %v5029, %v5041
  %v5043 = vpop.f32.mrf.mxu0
  %5044 = vdwg.mxu0
  %5045 = vmatpush.bf16.msra.mxu0 %v4615
  %5046 = vmatpush.bf16.msra.mxu0 %v4608
  %5047 = vmatpush.bf16.msra.mxu0 %v4601
  %5048 = vmatpush.bf16.msra.mxu0 %v4594
  %5049 = vmatpush.bf16.msra.mxu0 %v4587
  %5050 = vmatpush.bf16.msra.mxu0 %v4580
  %5051 = vmatpush.bf16.msra.mxu0 %v4573
  %5052 = vmatpush.bf16.msra.mxu0 %v4566
  %5053 = vmatmul.bf16.gmra.mxu0 %v3549
  %v5054 = vpop.f32.mrf.mxu0
  %v5055 = vadd.f32 0.0, %v5054
  %v5056 = vpop.f32.mrf.mxu0
  %5057 = vdwg.mxu0
  %5058 = vmatpush.bf16.msra.mxu0 %v4671
  %5059 = vmatpush.bf16.msra.mxu0 %v4664
  %5060 = vmatpush.bf16.msra.mxu0 %v4657
  %5061 = vmatpush.bf16.msra.mxu0 %v4650
  %5062 = vmatpush.bf16.msra.mxu0 %v4643
  %5063 = vmatpush.bf16.msra.mxu0 %v4636
  %5064 = vmatpush.bf16.msra.mxu0 %v4629
  %5065 = vmatpush.bf16.msra.mxu0 %v4622
  %5066 = vmatmul.bf16.gmra.mxu0 %v3550
  %v5067 = vpop.f32.mrf.mxu0
  %v5068 = vadd.f32 %v5055, %v5067
  %v5069 = vpop.f32.mrf.mxu0
  %5070 = vdwg.mxu0
  %5071 = vmatpush.bf16.msra.mxu0 %v4727
  %5072 = vmatpush.bf16.msra.mxu0 %v4720
  %5073 = vmatpush.bf16.msra.mxu0 %v4713
  %5074 = vmatpush.bf16.msra.mxu0 %v4706
  %5075 = vmatpush.bf16.msra.mxu0 %v4699
  %5076 = vmatpush.bf16.msra.mxu0 %v4692
  %5077 = vmatpush.bf16.msra.mxu0 %v4685
  %5078 = vmatpush.bf16.msra.mxu0 %v4678
  %5079 = vmatmul.bf16.gmra.mxu0 %v3551
  %v5080 = vpop.f32.mrf.mxu0
  %v5081 = vadd.f32 %v5068, %v5080
  %v5082 = vpop.f32.mrf.mxu0
  %5083 = vdwg.mxu0
  %5084 = vmatpush.bf16.msra.mxu0 %v4783
  %5085 = vmatpush.bf16.msra.mxu0 %v4776
  %5086 = vmatpush.bf16.msra.mxu0 %v4769
  %5087 = vmatpush.bf16.msra.mxu0 %v4762
  %5088 = vmatpush.bf16.msra.mxu0 %v4755
  %5089 = vmatpush.bf16.msra.mxu0 %v4748
  %5090 = vmatpush.bf16.msra.mxu0 %v4741
  %5091 = vmatpush.bf16.msra.mxu0 %v4734
  %5092 = vmatmul.bf16.gmra.mxu0 %v3552
  %v5093 = vpop.f32.mrf.mxu0
  %v5094 = vadd.f32 %v5081, %v5093
  %v5095 = vpop.f32.mrf.mxu0
  %5096 = vdwg.mxu0
  %5097 = vmatpush.bf16.msra.mxu0 %v4616
  %5098 = vmatpush.bf16.msra.mxu0 %v4609
  %5099 = vmatpush.bf16.msra.mxu0 %v4602
  %5100 = vmatpush.bf16.msra.mxu0 %v4595
  %5101 = vmatpush.bf16.msra.mxu0 %v4588
  %5102 = vmatpush.bf16.msra.mxu0 %v4581
  %5103 = vmatpush.bf16.msra.mxu0 %v4574
  %5104 = vmatpush.bf16.msra.mxu0 %v4567
  %5105 = vmatmul.bf16.gmra.mxu0 %v3549
  %v5106 = vpop.f32.mrf.mxu0
  %v5107 = vadd.f32 0.0, %v5106
  %v5108 = vpop.f32.mrf.mxu0
  %5109 = vdwg.mxu0
  %5110 = vmatpush.bf16.msra.mxu0 %v4672
  %5111 = vmatpush.bf16.msra.mxu0 %v4665
  %5112 = vmatpush.bf16.msra.mxu0 %v4658
  %5113 = vmatpush.bf16.msra.mxu0 %v4651
  %5114 = vmatpush.bf16.msra.mxu0 %v4644
  %5115 = vmatpush.bf16.msra.mxu0 %v4637
  %5116 = vmatpush.bf16.msra.mxu0 %v4630
  %5117 = vmatpush.bf16.msra.mxu0 %v4623
  %5118 = vmatmul.bf16.gmra.mxu0 %v3550
  %v5119 = vpop.f32.mrf.mxu0
  %v5120 = vadd.f32 %v5107, %v5119
  %v5121 = vpop.f32.mrf.mxu0
  %5122 = vdwg.mxu0
  %5123 = vmatpush.bf16.msra.mxu0 %v4728
  %5124 = vmatpush.bf16.msra.mxu0 %v4721
  %5125 = vmatpush.bf16.msra.mxu0 %v4714
  %5126 = vmatpush.bf16.msra.mxu0 %v4707
  %5127 = vmatpush.bf16.msra.mxu0 %v4700
  %5128 = vmatpush.bf16.msra.mxu0 %v4693
  %5129 = vmatpush.bf16.msra.mxu0 %v4686
  %5130 = vmatpush.bf16.msra.mxu0 %v4679
  %5131 = vmatmul.bf16.gmra.mxu0 %v3551
  %v5132 = vpop.f32.mrf.mxu0
  %v5133 = vadd.f32 %v5120, %v5132
  %v5134 = vpop.f32.mrf.mxu0
  %5135 = vdwg.mxu0
  %5136 = vmatpush.bf16.msra.mxu0 %v4784
  %5137 = vmatpush.bf16.msra.mxu0 %v4777
  %5138 = vmatpush.bf16.msra.mxu0 %v4770
  %5139 = vmatpush.bf16.msra.mxu0 %v4763
  %5140 = vmatpush.bf16.msra.mxu0 %v4756
  %5141 = vmatpush.bf16.msra.mxu0 %v4749
  %5142 = vmatpush.bf16.msra.mxu0 %v4742
  %5143 = vmatpush.bf16.msra.mxu0 %v4735
  %5144 = vmatmul.bf16.gmra.mxu0 %v3552
  %v5145 = vpop.f32.mrf.mxu0
  %v5146 = vadd.f32 %v5133, %v5145
  %v5147 = vpop.f32.mrf.mxu0
  %5148 = vdwg.mxu0
  %v5149 = vld [vmem:[%s1 + $0x18] sm:$0x7f]
  %v5151 = vperm.slane %v5149, 0
  %v5152 = vperm.slane %v5149, 1
  %v5153 = vperm.slane %v5149, 2
  %v5154 = vperm.slane %v5149, 3
  %v5155 = vperm.slane %v5149, 4
  %v5156 = vperm.slane %v5149, 5
  %v5157 = vperm.slane %v5149, 6
  %v5165 = vmul.f32 %v4834, %v5151
  %v5166 = vmul.f32 %v4886, %v5152
  %v5167 = vmul.f32 %v4938, %v5153
  %v5168 = vmul.f32 %v4990, %v5154
  %v5169 = vmul.f32 %v5042, %v5155
  %v5170 = vmul.f32 %v5094, %v5156
  %v5171 = vmul.f32 %v5146, %v5157
  %v5172 = vld [vmem:[%s1 + $0x1f] sm:$0x7f]
  %v5174 = vperm.slane %v5172, 0
  %v5175 = vperm.slane %v5172, 1
  %v5176 = vperm.slane %v5172, 2
  %v5177 = vperm.slane %v5172, 3
  %v5178 = vperm.slane %v5172, 4
  %v5179 = vperm.slane %v5172, 5
  %v5180 = vperm.slane %v5172, 6
  %v5188 = vadd.f32 %v5165, %v5174
  %v5189 = vadd.f32 %v5166, %v5175
  %v5190 = vadd.f32 %v5167, %v5176
  %v5191 = vadd.f32 %v5168, %v5177
  %v5192 = vadd.f32 %v5169, %v5178
  %v5193 = vadd.f32 %v5170, %v5179
  %v5194 = vadd.f32 %v5171, %v5180
  %v5195 = vxor.u32 %v5188, 2147483648
  %v5196 = vxor.u32 %v5189, 2147483648
  %v5197 = vxor.u32 %v5190, 2147483648
  %v5198 = vxor.u32 %v5191, 2147483648
  %v5199 = vxor.u32 %v5192, 2147483648
  %v5200 = vxor.u32 %v5193, 2147483648
  %v5201 = vxor.u32 %v5194, 2147483648
  %v5202 = vmul.f32 %v5195, 1.442695
  %v5203 = vpow.pop %v5202
  %v5204 = vmul.f32 %v5196, 1.442695
  %v5205 = vpow.pop %v5204
  %v5206 = vmul.f32 %v5197, 1.442695
  %v5207 = vpow.pop %v5206
  %v5208 = vmul.f32 %v5198, 1.442695
  %v5209 = vpow.pop %v5208
  %v5210 = vmul.f32 %v5199, 1.442695
  %v5211 = vpow.pop %v5210
  %v5212 = vmul.f32 %v5200, 1.442695
  %v5213 = vpow.pop %v5212
  %v5214 = vmul.f32 %v5201, 1.442695
  %v5215 = vpow.pop %v5214
  %v5216 = vadd.f32 %v5203, 1.0
  %v5217 = vadd.f32 %v5205, 1.0
  %v5218 = vadd.f32 %v5207, 1.0
  %v5219 = vadd.f32 %v5209, 1.0
  %v5220 = vadd.f32 %v5211, 1.0
  %v5221 = vadd.f32 %v5213, 1.0
  %v5222 = vadd.f32 %v5215, 1.0
  %v5223 = vrcp.pop %v5216
  %v5224 = vmul.f32 %v5216, %v5223
  %v5225 = vsub.f32 1.0, %v5224
  %v5226 = vmul.f32 %v5223, %v5225
  %v5227 = vadd.f32 %v5223, %v5226
  %vm5228 = vweird.f32 %v5216
  %vm5229 = vweird.f32 %v5223
  %vm5230 = vmor %vm5228, %vm5229
  %v5231 = vsel %vm5230, %v5223, %v5227
  %v5232 = vand.u32 2147483647, %v5216
  %vm5233 = vcmp.eq.f32.partialorder %v5232, 8.507059e+37
  %v5234 = vand.u32 %v5216, 2147483648
  %v5235 = vor.u32 1.1754944e-38, %v5234
  %v5236 = vsel %vm5233, %v5235, %v5231
  %v5237 = vmul.f32 1.0, %v5236
  %v5238 = vrcp.pop %v5217
  %v5239 = vmul.f32 %v5217, %v5238
  %v5240 = vsub.f32 1.0, %v5239
  %v5241 = vmul.f32 %v5238, %v5240
  %v5242 = vadd.f32 %v5238, %v5241
  %vm5243 = vweird.f32 %v5217
  %vm5244 = vweird.f32 %v5238
  %vm5245 = vmor %vm5243, %vm5244
  %v5246 = vsel %vm5245, %v5238, %v5242
  %v5247 = vand.u32 2147483647, %v5217
  %vm5248 = vcmp.eq.f32.partialorder %v5247, 8.507059e+37
  %v5249 = vand.u32 %v5217, 2147483648
  %v5250 = vor.u32 1.1754944e-38, %v5249
  %v5251 = vsel %vm5248, %v5250, %v5246
  %v5252 = vmul.f32 1.0, %v5251
  %v5253 = vrcp.pop %v5218
  %v5254 = vmul.f32 %v5218, %v5253
  %v5255 = vsub.f32 1.0, %v5254
  %v5256 = vmul.f32 %v5253, %v5255
  %v5257 = vadd.f32 %v5253, %v5256
  %vm5258 = vweird.f32 %v5218
  %vm5259 = vweird.f32 %v5253
  %vm5260 = vmor %vm5258, %vm5259
  %v5261 = vsel %vm5260, %v5253, %v5257
  %v5262 = vand.u32 2147483647, %v5218
  %vm5263 = vcmp.eq.f32.partialorder %v5262, 8.507059e+37
  %v5264 = vand.u32 %v5218, 2147483648
  %v5265 = vor.u32 1.1754944e-38, %v5264
  %v5266 = vsel %vm5263, %v5265, %v5261
  %v5267 = vmul.f32 1.0, %v5266
  %v5268 = vrcp.pop %v5219
  %v5269 = vmul.f32 %v5219, %v5268
  %v5270 = vsub.f32 1.0, %v5269
  %v5271 = vmul.f32 %v5268, %v5270
  %v5272 = vadd.f32 %v5268, %v5271
  %vm5273 = vweird.f32 %v5219
  %vm5274 = vweird.f32 %v5268
  %vm5275 = vmor %vm5273, %vm5274
  %v5276 = vsel %vm5275, %v5268, %v5272
  %v5277 = vand.u32 2147483647, %v5219
  %vm5278 = vcmp.eq.f32.partialorder %v5277, 8.507059e+37
  %v5279 = vand.u32 %v5219, 2147483648
  %v5280 = vor.u32 1.1754944e-38, %v5279
  %v5281 = vsel %vm5278, %v5280, %v5276
  %v5282 = vmul.f32 1.0, %v5281
  %v5283 = vrcp.pop %v5220
  %v5284 = vmul.f32 %v5220, %v5283
  %v5285 = vsub.f32 1.0, %v5284
  %v5286 = vmul.f32 %v5283, %v5285
  %v5287 = vadd.f32 %v5283, %v5286
  %vm5288 = vweird.f32 %v5220
  %vm5289 = vweird.f32 %v5283
  %vm5290 = vmor %vm5288, %vm5289
  %v5291 = vsel %vm5290, %v5283, %v5287
  %v5292 = vand.u32 2147483647, %v5220
  %vm5293 = vcmp.eq.f32.partialorder %v5292, 8.507059e+37
  %v5294 = vand.u32 %v5220, 2147483648
  %v5295 = vor.u32 1.1754944e-38, %v5294
  %v5296 = vsel %vm5293, %v5295, %v5291
  %v5297 = vmul.f32 1.0, %v5296
  %v5298 = vrcp.pop %v5221
  %v5299 = vmul.f32 %v5221, %v5298
  %v5300 = vsub.f32 1.0, %v5299
  %v5301 = vmul.f32 %v5298, %v5300
  %v5302 = vadd.f32 %v5298, %v5301
  %vm5303 = vweird.f32 %v5221
  %vm5304 = vweird.f32 %v5298
  %vm5305 = vmor %vm5303, %vm5304
  %v5306 = vsel %vm5305, %v5298, %v5302
  %v5307 = vand.u32 2147483647, %v5221
  %vm5308 = vcmp.eq.f32.partialorder %v5307, 8.507059e+37
  %v5309 = vand.u32 %v5221, 2147483648
  %v5310 = vor.u32 1.1754944e-38, %v5309
  %v5311 = vsel %vm5308, %v5310, %v5306
  %v5312 = vmul.f32 1.0, %v5311
  %v5313 = vrcp.pop %v5222
  %v5314 = vmul.f32 %v5222, %v5313
  %v5315 = vsub.f32 1.0, %v5314
  %v5316 = vmul.f32 %v5313, %v5315
  %v5317 = vadd.f32 %v5313, %v5316
  %vm5318 = vweird.f32 %v5222
  %vm5319 = vweird.f32 %v5313
  %vm5320 = vmor %vm5318, %vm5319
  %v5321 = vsel %vm5320, %v5313, %v5317
  %v5322 = vand.u32 2147483647, %v5222
  %vm5323 = vcmp.eq.f32.partialorder %v5322, 8.507059e+37
  %v5324 = vand.u32 %v5222, 2147483648
  %v5325 = vor.u32 1.1754944e-38, %v5324
  %v5326 = vsel %vm5323, %v5325, %v5321
  %v5327 = vmul.f32 1.0, %v5326
  %5328 = vst [vmem:[%s7] sm:$0xff] %v5237
  %5329 = vst [vmem:[%s7 + $0x8] sm:$0xff] %v5252
  %5330 = vst [vmem:[%s7 + $0x10] sm:$0xff] %v5267
  %5331 = vst [vmem:[%s7 + $0x18] sm:$0xff] %v5282
  %5332 = vst [vmem:[%s7 + $0x20] sm:$0xff] %v5297
  %5333 = vst [vmem:[%s7 + $0x28] sm:$0xff] %v5312
  %5334 = vst.msk [vmem:[%s7 + $0x30] sm:$0xff] %vm1450, %v5327
  // Predicated region
  $region60: #{aae_forward.1} parent=0 // pred_check
    _
  $region61: #{aae_forward.1} parent=0 // pred_check_branch
    %5336 = sbr.rel (0) target = $region63
  $region62: #{aae_forward.1} parent=0 // pred_region
    _
  $region63: #{aae_forward.1} parent=0 // pred_fallthru
    _
  // Predicated region
  $region64: #{aae_forward.1} parent=0 // pred_check
    _
  $region65: #{aae_forward.1} parent=0 // pred_check_branch
    %5338 = sbr.rel (0) target = $region67
  $region66: #{aae_forward.1} parent=0 // pred_region
    _
  $region67: #{aae_forward.1} parent=0 // pred_fallthru
    _
  %5339 = vsyncmov [#allocation4]
  %s5340 = vpop.sfrf %5339
  %p5341 = scmp.eq.s32.totalorder %s5340, 0
  %p5342 = pneg %p5341
  %5344 = shalt.err (%p5342)
  %s5345 = scalar_lea.sflag [#allocation4], 1
  %5346 = vsyncmov %s5345
  %s5347 = vpop.sfrf %5346
  %p5348 = scmp.eq.s32.totalorder %s5347, 0
  %p5349 = pneg %p5348
  %5351 = shalt.err (%p5349)

</llo_original>
